<compile_context>
chip_gen: v5e
topology: v5e:2x2
jax: 0.10.0
libtpu: 0.0.40
codegen_flags: <defaults>
</compile_context>

<pallas_src>
import numpy as np
import jax
import jax.numpy as jnp
from jax import lax
from jax.experimental import pallas as pl
from jax.experimental.pallas import tpu as pltpu

# ----------------- synthetic config (cfg.MODEL.*) -----------------
PATCH = 14              # MODEL.PATCH_SIZE (module asserts == 14)
EMB = 32                # MODEL.EMB_SIZE
MULTISCALE = [2, 3]     # MODEL.MULTISCALE (list of block indices)
DEPTH = 4               # synthetic backbone depth (>= max(MULTISCALE)+1)
NUM_HEADS = 4
HEAD_DIM = EMB // NUM_HEADS
MLP_HIDDEN = 4 * EMB    # 128 -> lane-dense MLP hidden
NUM_CLASSES = 5         # MODEL.NUM_CLASSES
RESIZE = 2              # MODEL.FEATURE_RESIZE_FACTOR
NUM_LAYERS = len(MULTISCALE)
DEC_C = NUM_LAYERS * EMB                       # 64  decoder in-channels
LANE = 128
DEC_HPAD = LANE                                # decoder hidden padded to 128
CLS_PAD = LANE                                 # decoder output padded to 128
K_RAW = PATCH * PATCH * 3                      # 588 im2col K
K_PAD = ((K_RAW + LANE - 1) // LANE) * LANE    # 640 (5 * 128) lane-aligned


def _round_up(n, m):
    return ((n + m - 1) // m) * m


# ----------------- in-kernel math helpers (f32, VPU/EUP only) -----------------
def _ln(x, g, b, eps=1e-6):
    # LayerNorm with eps=1e-6 (DINOv2 convention), f32 math.
    mu = jnp.mean(x, axis=-1, keepdims=True)
    var = jnp.mean((x - mu) ** 2, axis=-1, keepdims=True)
    return (x - mu) * lax.rsqrt(var + eps) * g + b


def _erf(x):
    # Abramowitz & Stegun 7.1.26 (|err| <= 1.5e-7): exact-GELU fidelity using
    # only ops with guaranteed Mosaic lowering (exp/abs/where/mul/add/div).
    p = 0.3275911
    a1, a2, a3, a4, a5 = (0.254829592, -0.284496736, 1.421413741,
                          -1.453152027, 1.061405429)
    ax = jnp.abs(x)
    t = 1.0 / (1.0 + p * ax)
    poly = ((((a5 * t + a4) * t + a3) * t + a2) * t + a1) * t
    y = 1.0 - poly * jnp.exp(-ax * ax)
    return jnp.where(x >= 0, y, -y)


def _gelu(x):
    # torch.nn.GELU() default (exact erf form).
    return 0.5 * x * (1.0 + _erf(x * 0.7071067811865476))


# ----------------- the single fused Pallas kernel -----------------
def _model_kernel(patches_ref, pemb_w_ref, clspos_ref, mhead_ref,
                  ln1g_ref, ln1b_ref, qkvw_ref, qkvb_ref,
                  projw_ref, projb_ref, ln2g_ref, ln2b_ref,
                  fc1w_ref, fc1b_ref, fc2w_ref, fc2b_ref,
                  normg_ref, normb_ref,
                  remb_ref, dw1_ref, db1_ref, dw2_ref, db2_ref, rlog_ref,
                  emb_ref, lemb_ref, logits_ref):
    """Whole DINOv2NetMultiScaleBaseline forward for ONE batch element, fully
    VMEM/vreg resident: patch-embed -> DEPTH transformer blocks -> final LN +
    multiscale concat -> bilinear resize -> 1x1-conv decoder -> upsample."""
    seq_pad, emb_dim = clspos_ref.shape
    n_patch = remb_ref.shape[1]
    seq = 1 + n_patch
    depth = qkvw_ref.shape[0]
    num_heads = mhead_ref.shape[0] // seq_pad
    scale = float(emb_dim // num_heads) ** -0.5

    # ---- patch embedding (bf16 cast in-kernel); cls token, pos-embed and the
    #      patch-conv bias are pre-folded into `clspos`, padded rows stay 0 ----
    x = jnp.dot(patches_ref[...].astype(jnp.bfloat16), pemb_w_ref[...],
                preferred_element_type=jnp.float32) + clspos_ref[...]

    mhead = mhead_ref[...]                       # (num_heads*seq_pad, emb) 0/1
    # additive -inf mask for the zero-padded key rows (seq .. seq_pad-1)
    kmask = jnp.where(
        lax.broadcasted_iota(jnp.int32, (1, seq_pad), 1) < seq, 0.0, -1e30)

    feats = []
    for l in range(depth):
        # ---------------- attention ----------------
        y = _ln(x, ln1g_ref[l], ln1b_ref[l])
        qkv = jnp.dot(y.astype(jnp.bfloat16), qkvw_ref[l],
                      preferred_element_type=jnp.float32) + qkvb_ref[l]
        q = qkv[:, :emb_dim]
        k = qkv[:, emb_dim:2 * emb_dim].astype(jnp.bfloat16)
        v = qkv[:, 2 * emb_dim:].astype(jnp.bfloat16)
        # Head-stacked single-pass attention: row block h holds head h
        # (selected by the 0/1 channel mask), so one score matmul, one softmax
        # pass and one PV matmul cover all heads; no per-head transposes.
        q_s = (jnp.concatenate([q] * num_heads, axis=0) * mhead
               ).astype(jnp.bfloat16)                         # (nh*sp, emb)
        s = lax.dot_general(q_s, k, (((1,), (1,)), ((), ())),
                            preferred_element_type=jnp.float32) * scale
        s = s + kmask
        s = s - jnp.max(s, axis=-1, keepdims=True)
        p = jnp.exp(s)
        p = p / jnp.sum(p, axis=-1, keepdims=True)            # exact softmax
        pv = jnp.dot(p.astype(jnp.bfloat16), v,
                     preferred_element_type=jnp.float32) * mhead
        attn = pv[0:seq_pad]
        for h in range(1, num_heads):
            attn = attn + pv[h * seq_pad:(h + 1) * seq_pad]   # aligned slices
        x = x + jnp.dot(attn.astype(jnp.bfloat16), projw_ref[l],
                        preferred_element_type=jnp.float32) + projb_ref[l]
        # ---------------- MLP ----------------
        y = _ln(x, ln2g_ref[l], ln2b_ref[l])
        h1 = jnp.dot(y.astype(jnp.bfloat16), fc1w_ref[l],
                     preferred_element_type=jnp.float32) + fc1b_ref[l]
        h1 = _gelu(h1)
        x = x + jnp.dot(h1.astype(jnp.bfloat16), fc2w_ref[l],
                        preferred_element_type=jnp.float32) + fc2b_ref[l]
        # get_intermediate_layers(norm=True): final LN, drop the cls token.
        if l in MULTISCALE:
            feats.append(_ln(x, normg_ref[...], normb_ref[...])[1:seq])

    # ---- multiscale channel concat -> bilinear resize (Kronecker matrix) ----
    feat = jnp.concatenate(feats, axis=-1)                    # (n_patch, DEC_C)
    emb = jnp.dot(remb_ref[...], feat,
                  preferred_element_type=jnp.float32)         # (Hf*Wf, DEC_C)
    emb_ref[...] = emb
    # ---- decoder: 1x1 conv -> GELU -> 1x1 conv, 128-lane padded channels ----
    h1 = jnp.dot(emb.astype(jnp.bfloat16), dw1_ref[...],
                 preferred_element_type=jnp.float32) + db1_ref[...]
    h1 = _gelu(h1)
    lg = jnp.dot(h1.astype(jnp.bfloat16), dw2_ref[...],
                 preferred_element_type=jnp.float32) + db2_ref[...]
    lemb_ref[...] = lg                                        # (Hf*Wf, CLS_PAD)
    # ---- bilinear upsample of logits to the input resolution ----
    logits_ref[...] = jnp.dot(rlog_ref[...], lg,
                              preferred_element_type=jnp.float32)
    # TODO(synk): at real DINOv2 sizes (S~1400, EMB=768) this fully-resident
    # attention must become an online-softmax KV-tiled loop and the constant
    # weight BlockSpecs should get pipeline_mode=pl.Buffered(1) (v7x VMEM).


# ----------------- wrapper (layout plumbing only) -----------------
def forward(x_nchw, params):
    """Mirror of DINOv2NetMultiScaleBaseline.forward — one fused pallas_call."""
    B, Cin, H, W = x_nchw.shape
    assert H % PATCH == 0 and W % PATCH == 0
    ph, pw = H // PATCH, W // PATCH
    n_patch = ph * pw
    seq = 1 + n_patch
    seq_pad = _round_up(seq, 8)
    Hf, Wf = ph * RESIZE, pw * RESIZE

    # im2col: NCHW -> (B, n_patch, 14*14*Cin); zero-pad K to 640 (5*128) and
    # prepend a zero "cls slot" row + trailing zero rows so the in-kernel token
    # matmul already produces the (SEQ_PAD, EMB) token buffer.
    # TODO(synk): real DINOv2 Conv2d patch weights flatten as (cin, kh, kw);
    # permute them before loading into this (kh, kw, cin) layout.
    xh = jnp.transpose(x_nchw, (0, 2, 3, 1))
    patches = (xh.reshape(B, ph, PATCH, pw, PATCH, Cin)
                 .transpose(0, 1, 3, 2, 4, 5)
                 .reshape(B, n_patch, PATCH * PATCH * Cin))
    patches = jnp.pad(patches, ((0, 0), (1, seq_pad - seq), (0, K_PAD - K_RAW)))

    batch3 = lambda d1, d2: pl.BlockSpec((None, d1, d2), lambda b: (b, 0, 0))
    const2 = lambda d1, d2: pl.BlockSpec((d1, d2), lambda b: (0, 0))
    const3 = lambda d1, d2, d3: pl.BlockSpec((d1, d2, d3), lambda b: (0, 0, 0))

    # rough advisory cost estimate for the single fused call
    leaves = jax.tree_util.tree_leaves(params)
    w_bytes = sum(int(np.prod(l.shape)) * l.dtype.itemsize for l in leaves)
    out_elems = B * (Hf * Wf * DEC_C + Hf * Wf * CLS_PAD + H * W * CLS_PAD)
    flops = 2 * B * (
        seq_pad * K_PAD * EMB
        + DEPTH * (seq_pad * EMB * 3 * EMB
                   + 2 * NUM_HEADS * seq_pad * seq_pad * EMB
                   + seq_pad * EMB * EMB
                   + 2 * seq_pad * EMB * MLP_HIDDEN)
        + Hf * Wf * n_patch * DEC_C
        + Hf * Wf * DEC_C * DEC_HPAD
        + Hf * Wf * DEC_HPAD * CLS_PAD
        + H * W * Hf * Wf * CLS_PAD)
    transcendentals = B * (DEPTH * (NUM_HEADS * seq_pad * seq_pad
                                    + seq_pad * MLP_HIDDEN)
                           + Hf * Wf * DEC_HPAD)
    cost = pl.CostEstimate(
        flops=int(flops), transcendentals=int(transcendentals),
        bytes_accessed=int(patches.size * 4 + w_bytes + out_elems * 4))

    emb_flat, lemb_pad, logits_pad = pl.pallas_call(
        _model_kernel,
        out_shape=(
            jax.ShapeDtypeStruct((B, Hf * Wf, DEC_C), jnp.float32),
            jax.ShapeDtypeStruct((B, Hf * Wf, CLS_PAD), jnp.float32),
            jax.ShapeDtypeStruct((B, H * W, CLS_PAD), jnp.float32),
        ),
        grid=(B,),
        in_specs=[
            batch3(seq_pad, K_PAD),                            # patches
            const2(K_PAD, EMB),                                # patch-embed W
            const2(seq_pad, EMB),                              # cls+pos+bias
            const2(NUM_HEADS * seq_pad, EMB),                  # head masks
            const3(DEPTH, 1, EMB), const3(DEPTH, 1, EMB),              # ln1
            const3(DEPTH, EMB, 3 * EMB), const3(DEPTH, 1, 3 * EMB),    # qkv
            const3(DEPTH, EMB, EMB), const3(DEPTH, 1, EMB),            # proj
            const3(DEPTH, 1, EMB), const3(DEPTH, 1, EMB),              # ln2
            const3(DEPTH, EMB, MLP_HIDDEN), const3(DEPTH, 1, MLP_HIDDEN),
            const3(DEPTH, MLP_HIDDEN, EMB), const3(DEPTH, 1, EMB),
            const2(1, EMB), const2(1, EMB),                    # final norm
            const2(Hf * Wf, n_patch),                          # R_emb
            const2(DEC_C, DEC_HPAD), const2(1, DEC_HPAD),      # decoder fc1
            const2(DEC_HPAD, CLS_PAD), const2(1, CLS_PAD),     # decoder fc2
            const2(H * W, Hf * Wf),                            # R_log
        ],
        out_specs=(
            batch3(Hf * Wf, DEC_C),
            batch3(Hf * Wf, CLS_PAD),
            batch3(H * W, CLS_PAD),
        ),
        compiler_params=pltpu.CompilerParams(
            # Keep both (tiny) batch elements on one TensorCore: splitting a
            # ~µs workload across v7x's two TCs only duplicates weight DMAs.
            dimension_semantics=("arbitrary",)),
        cost_estimate=cost,
    )(patches,
      params["patch_w"], params["cls_pos"], params["mhead"],
      params["ln1_g"], params["ln1_b"], params["qkv_w"], params["qkv_b"],
      params["proj_w"], params["proj_b"], params["ln2_g"], params["ln2_b"],
      params["fc1_w"], params["fc1_b"], params["fc2_w"], params["fc2_b"],
      params["norm_g"], params["norm_b"],
      params["r_emb"], params["dec_w1"], params["dec_b1"],
      params["dec_w2"], params["dec_b2"], params["r_log"])

    emb = emb_flat.reshape(B, Hf, Wf, DEC_C)
    logits_embshape = lemb_pad.reshape(B, Hf, Wf, CLS_PAD)[..., :NUM_CLASSES]
    logits = logits_pad.reshape(B, H, W, CLS_PAD)[..., :NUM_CLASSES]
    return logits, emb, logits_embshape


# ----------------- host-precomputed bilinear matrices -----------------
def _interp_matrix_np(out_size, in_size):
    """Dense 1-D interpolation matrix reproducing
    F.interpolate(mode='bilinear', align_corners=False) along one axis."""
    ratio = in_size / out_size
    d = np.arange(out_size, dtype=np.float64)
    s = np.maximum((d + 0.5) * ratio - 0.5, 0.0)
    i0 = np.minimum(np.floor(s).astype(np.int64), in_size - 1)
    i1 = np.minimum(i0 + 1, in_size - 1)
    f = s - i0
    m = np.zeros((out_size, in_size), dtype=np.float64)
    m[np.arange(out_size), i0] += 1.0 - f
    m[np.arange(out_size), i1] += f
    return m


# ----------------- deterministic parameter init -----------------
def init_params(key, ph, pw, H, W):
    """Deterministic synthetic weights.
    TODO(synk): pretrained facebookresearch/dinov2 torch.hub weights cannot be
    loaded here; this is a structurally equivalent small ViT backbone."""
    counter = [0]

    def nxt():
        counter[0] += 1
        return jax.random.fold_in(key, counter[0])

    def normal(shape, scale=0.02):
        return scale * jax.random.normal(nxt(), shape, dtype=jnp.float32)

    def zeros(shape):
        return jnp.zeros(shape, dtype=jnp.float32)

    def ones(shape):
        return jnp.ones(shape, dtype=jnp.float32)

    def bf16(a):
        return a.astype(jnp.bfloat16)

    n_patch = ph * pw
    seq = 1 + n_patch
    seq_pad = _round_up(seq, 8)
    Hf, Wf = ph * RESIZE, pw * RESIZE

    # cls token + positional embedding + patch-embed bias folded into one
    # (SEQ_PAD, EMB) additive constant; padded token rows stay exactly zero.
    cls_token = normal((1, EMB))
    pos_embed = normal((seq, EMB))
    patch_b = normal((1, EMB))
    cls_pos = jnp.zeros((seq_pad, EMB), jnp.float32)
    cls_pos = cls_pos.at[0].set(cls_token[0] + pos_embed[0])
    cls_pos = cls_pos.at[1:seq].set(pos_embed[1:] + patch_b)

    # 0/1 per-head channel masks, one (SEQ_PAD, EMB) row block per head.
    head_id = np.arange(EMB) // HEAD_DIM
    masks = (head_id[None, :] == np.arange(NUM_HEADS)[:, None]).astype(np.float32)
    mhead = jnp.asarray(np.repeat(masks, seq_pad, axis=0), jnp.float32)

    # Bilinear resize matrices (align_corners=False), precomputed on host and
    # combined into single (out_h*out_w, in_h*in_w) Kronecker products.
    r_emb = jnp.asarray(np.kron(_interp_matrix_np(Hf, ph),
                                _interp_matrix_np(Wf, pw)), jnp.float32)
    r_log = jnp.asarray(np.kron(_interp_matrix_np(H, Hf),
                                _interp_matrix_np(W, Wf)), jnp.float32)

    # Decoder (two 1x1 convs) with hidden/output zero-padded to 128 lanes so
    # all Pallas stores are lane-dense; padded channels stay exactly zero.
    dec_w1 = normal((DEC_C, DEC_C))
    dec_b1 = normal((1, DEC_C))
    dec_w2 = normal((DEC_C, NUM_CLASSES))
    dec_b2 = normal((1, NUM_CLASSES))

    def stack(make):
        return jnp.stack([make() for _ in range(DEPTH)])

    return {
        "patch_w": bf16(jnp.pad(normal((K_RAW, EMB)),
                                ((0, K_PAD - K_RAW), (0, 0)))),
        "cls_pos": cls_pos,
        "mhead": mhead,
        "ln1_g": stack(lambda: ones((1, EMB))),
        "ln1_b": stack(lambda: zeros((1, EMB))),
        "qkv_w": bf16(stack(lambda: normal((EMB, 3 * EMB)))),
        "qkv_b": stack(lambda: normal((1, 3 * EMB))),
        "proj_w": bf16(stack(lambda: normal((EMB, EMB)))),
        "proj_b": stack(lambda: normal((1, EMB))),
        "ln2_g": stack(lambda: ones((1, EMB))),
        "ln2_b": stack(lambda: zeros((1, EMB))),
        "fc1_w": bf16(stack(lambda: normal((EMB, MLP_HIDDEN)))),
        "fc1_b": stack(lambda: normal((1, MLP_HIDDEN))),
        "fc2_w": bf16(stack(lambda: normal((MLP_HIDDEN, EMB)))),
        "fc2_b": stack(lambda: normal((1, EMB))),
        "norm_g": ones((1, EMB)),
        "norm_b": zeros((1, EMB)),
        "r_emb": r_emb,
        "dec_w1": bf16(jnp.pad(dec_w1, ((0, 0), (0, DEC_HPAD - DEC_C)))),
        "dec_b1": jnp.pad(dec_b1, ((0, 0), (0, DEC_HPAD - DEC_C))),
        "dec_w2": bf16(jnp.pad(dec_w2, ((0, DEC_HPAD - DEC_C),
                                        (0, CLS_PAD - NUM_CLASSES)))),
        "dec_b2": jnp.pad(dec_b2, ((0, 0), (0, CLS_PAD - NUM_CLASSES))),
        "r_log": r_log,
    }


if __name__ == "__main__":
    key = jax.random.PRNGKey(0)
    pkey, xkey = jax.random.split(key)

    # Input in PyTorch NCHW convention; H, W must be multiples of PATCH=14.
    x = jax.random.normal(xkey, (2, 3, 28, 28), dtype=jnp.float32)
    B, _, H, W = x.shape
    ph, pw = H // PATCH, W // PATCH
    params = init_params(pkey, ph, pw, H, W)

    fwd = jax.jit(forward)
    logits, emb, logits_embshape = fwd(x, params)
    jax.block_until_ready((logits, emb, logits_embshape))

    assert logits.shape == (B, H, W, NUM_CLASSES)
    assert emb.shape == (B, ph * RESIZE, pw * RESIZE, DEC_C)
    assert logits_embshape.shape == (B, ph * RESIZE, pw * RESIZE, NUM_CLASSES)
    assert bool(jnp.all(jnp.isfinite(logits)))
    assert bool(jnp.all(jnp.isfinite(emb)))
    assert bool(jnp.all(jnp.isfinite(logits_embshape)))

    print("KERNEL_OK")
</pallas_src>

<mosaic_0001>
module attributes {stable_mosaic.version = 11 : i64} {
  func.func @_model_kernel(%arg0: i32, %arg1: memref<1x8x640xf32, #tpu.memory_space<vmem>>, %arg2: memref<640x32xbf16, #tpu.memory_space<vmem>>, %arg3: memref<8x32xf32, #tpu.memory_space<vmem>>, %arg4: memref<32x32xf32, #tpu.memory_space<vmem>>, %arg5: memref<4x1x32xf32, #tpu.memory_space<vmem>>, %arg6: memref<4x1x32xf32, #tpu.memory_space<vmem>>, %arg7: memref<4x32x96xbf16, #tpu.memory_space<vmem>>, %arg8: memref<4x1x96xf32, #tpu.memory_space<vmem>>, %arg9: memref<4x32x32xbf16, #tpu.memory_space<vmem>>, %arg10: memref<4x1x32xf32, #tpu.memory_space<vmem>>, %arg11: memref<4x1x32xf32, #tpu.memory_space<vmem>>, %arg12: memref<4x1x32xf32, #tpu.memory_space<vmem>>, %arg13: memref<4x32x128xbf16, #tpu.memory_space<vmem>>, %arg14: memref<4x1x128xf32, #tpu.memory_space<vmem>>, %arg15: memref<4x128x32xbf16, #tpu.memory_space<vmem>>, %arg16: memref<4x1x32xf32, #tpu.memory_space<vmem>>, %arg17: memref<1x32xf32, #tpu.memory_space<vmem>>, %arg18: memref<1x32xf32, #tpu.memory_space<vmem>>, %arg19: memref<16x4xf32, #tpu.memory_space<vmem>>, %arg20: memref<64x128xbf16, #tpu.memory_space<vmem>>, %arg21: memref<1x128xf32, #tpu.memory_space<vmem>>, %arg22: memref<128x128xbf16, #tpu.memory_space<vmem>>, %arg23: memref<1x128xf32, #tpu.memory_space<vmem>>, %arg24: memref<784x16xf32, #tpu.memory_space<vmem>>, %arg25: memref<1x16x64xf32, #tpu.memory_space<vmem>>, %arg26: memref<1x16x128xf32, #tpu.memory_space<vmem>>, %arg27: memref<1x784x128xf32, #tpu.memory_space<vmem>>) attributes {dimension_semantics = [#tpu.dimension_semantics<arbitrary>], iteration_bounds = array<i64: 2>, scalar_prefetch = 0 : i64, scratch_operands = 0 : i64, tpu.core_type = #tpu.core_type<tc>, window_params = [{transform_indices = @transform_0, window_bounds = array<i64: 1, 8, 640>}, {pipeline_mode = #tpu.pipeline_mode<synchronous>, transform_indices = @transform_1, window_bounds = array<i64: 640, 32>}, {pipeline_mode = #tpu.pipeline_mode<synchronous>, transform_indices = @transform_2, window_bounds = array<i64: 8, 32>}, {pipeline_mode = #tpu.pipeline_mode<synchronous>, transform_indices = @transform_3, window_bounds = array<i64: 32, 32>}, {pipeline_mode = #tpu.pipeline_mode<synchronous>, transform_indices = @transform_4, window_bounds = array<i64: 4, 1, 32>}, {pipeline_mode = #tpu.pipeline_mode<synchronous>, transform_indices = @transform_5, window_bounds = array<i64: 4, 1, 32>}, {pipeline_mode = #tpu.pipeline_mode<synchronous>, transform_indices = @transform_6, window_bounds = array<i64: 4, 32, 96>}, {pipeline_mode = #tpu.pipeline_mode<synchronous>, transform_indices = @transform_7, window_bounds = array<i64: 4, 1, 96>}, {pipeline_mode = #tpu.pipeline_mode<synchronous>, transform_indices = @transform_8, window_bounds = array<i64: 4, 32, 32>}, {pipeline_mode = #tpu.pipeline_mode<synchronous>, transform_indices = @transform_9, window_bounds = array<i64: 4, 1, 32>}, {pipeline_mode = #tpu.pipeline_mode<synchronous>, transform_indices = @transform_10, window_bounds = array<i64: 4, 1, 32>}, {pipeline_mode = #tpu.pipeline_mode<synchronous>, transform_indices = @transform_11, window_bounds = array<i64: 4, 1, 32>}, {pipeline_mode = #tpu.pipeline_mode<synchronous>, transform_indices = @transform_12, window_bounds = array<i64: 4, 32, 128>}, {pipeline_mode = #tpu.pipeline_mode<synchronous>, transform_indices = @transform_13, window_bounds = array<i64: 4, 1, 128>}, {pipeline_mode = #tpu.pipeline_mode<synchronous>, transform_indices = @transform_14, window_bounds = array<i64: 4, 128, 32>}, {pipeline_mode = #tpu.pipeline_mode<synchronous>, transform_indices = @transform_15, window_bounds = array<i64: 4, 1, 32>}, {pipeline_mode = #tpu.pipeline_mode<synchronous>, transform_indices = @transform_16, window_bounds = array<i64: 1, 32>}, {pipeline_mode = #tpu.pipeline_mode<synchronous>, transform_indices = @transform_17, window_bounds = array<i64: 1, 32>}, {pipeline_mode = #tpu.pipeline_mode<synchronous>, transform_indices = @transform_18, window_bounds = array<i64: 16, 4>}, {pipeline_mode = #tpu.pipeline_mode<synchronous>, transform_indices = @transform_19, window_bounds = array<i64: 64, 128>}, {pipeline_mode = #tpu.pipeline_mode<synchronous>, transform_indices = @transform_20, window_bounds = array<i64: 1, 128>}, {pipeline_mode = #tpu.pipeline_mode<synchronous>, transform_indices = @transform_21, window_bounds = array<i64: 128, 128>}, {pipeline_mode = #tpu.pipeline_mode<synchronous>, transform_indices = @transform_22, window_bounds = array<i64: 1, 128>}, {pipeline_mode = #tpu.pipeline_mode<synchronous>, transform_indices = @transform_23, window_bounds = array<i64: 784, 16>}, {transform_indices = @transform_24, window_bounds = array<i64: 1, 16, 64>}, {transform_indices = @transform_25, window_bounds = array<i64: 1, 16, 128>}, {transform_indices = @transform_26, window_bounds = array<i64: 1, 784, 128>}]} {
    %c0 = arith.constant 0 : index
    %c0_0 = arith.constant 0 : index
    %c0_1 = arith.constant 0 : index
    %0 = vector.load %arg1[%c0, %c0_0, %c0_1] : memref<1x8x640xf32, #tpu.memory_space<vmem>>, vector<1x8x640xf32>
    %1 = vector.shape_cast %0 : vector<1x8x640xf32> to vector<8x640xf32>
    %2 = arith.truncf %1 : vector<8x640xf32> to vector<8x640xbf16>
    %c0_2 = arith.constant 0 : index
    %c0_3 = arith.constant 0 : index
    %3 = vector.load %arg2[%c0_2, %c0_3] : memref<640x32xbf16, #tpu.memory_space<vmem>>, vector<640x32xbf16>
    %cst = arith.constant dense<0.000000e+00> : vector<8x32xf32>
    %4 = tpu.matmul %2, %3, %cst {dimension_numbers = #tpu.dot_dimension_numbers<[1], [0], [0], [1], [0, 0, 1, 1], [], []>} : vector<8x640xbf16>, vector<640x32xbf16>, vector<8x32xf32> -> vector<8x32xf32>
    %c0_4 = arith.constant 0 : index
    %c0_5 = arith.constant 0 : index
    %5 = vector.load %arg3[%c0_4, %c0_5] : memref<8x32xf32, #tpu.memory_space<vmem>>, vector<8x32xf32>
    %6 = arith.addf %4, %5 : vector<8x32xf32>
    %c0_6 = arith.constant 0 : index
    %c0_7 = arith.constant 0 : index
    %7 = vector.load %arg4[%c0_6, %c0_7] : memref<32x32xf32, #tpu.memory_space<vmem>>, vector<32x32xf32>
    %8 = tpu.iota {dimensions = array<i32: 1>} : vector<1x8xi32>
    %c5_i32 = arith.constant 5 : i32
    %9 = vector.broadcast %c5_i32 : i32 to vector<1x8xi32>
    %10 = arith.cmpi slt, %8, %9 : vector<1x8xi32>
    %cst_8 = arith.constant 0.000000e+00 : f32
    %cst_9 = arith.constant -1.000000e+30 : f32
    %11 = vector.broadcast %cst_8 : f32 to vector<1x8xf32>
    %12 = vector.broadcast %cst_9 : f32 to vector<1x8xf32>
    %13 = arith.select %10, %11, %12 : vector<1x8xi1>, vector<1x8xf32>
    %c0_10 = arith.constant 0 : index
    %c0_11 = arith.constant 0 : index
    %c0_12 = arith.constant 0 : index
    %14 = vector.load %arg5[%c0_10, %c0_11, %c0_12] : memref<4x1x32xf32, #tpu.memory_space<vmem>>, vector<1x1x32xf32>
    %15 = vector.shape_cast %14 : vector<1x1x32xf32> to vector<1x32xf32>
    %c0_13 = arith.constant 0 : index
    %c0_14 = arith.constant 0 : index
    %c0_15 = arith.constant 0 : index
    %16 = vector.load %arg6[%c0_13, %c0_14, %c0_15] : memref<4x1x32xf32, #tpu.memory_space<vmem>>, vector<1x1x32xf32>
    %17 = vector.shape_cast %16 : vector<1x1x32xf32> to vector<1x32xf32>
    %cst_16 = arith.constant dense<0.000000e+00> : vector<8xf32>
    %18 = vector.multi_reduction <add>, %6, %cst_16 [1] : vector<8x32xf32> to vector<8xf32>
    %19 = vector.shape_cast %18 : vector<8xf32> to vector<8x1xf32>
    %cst_17 = arith.constant 3.200000e+01 : f32
    %20 = vector.broadcast %cst_17 : f32 to vector<8x1xf32>
    %21 = arith.divf %19, %20 : vector<8x1xf32>
    %22 = vector.broadcast %21 : vector<8x1xf32> to vector<8x32xf32>
    %23 = arith.subf %6, %22 : vector<8x32xf32>
    %24 = arith.mulf %23, %23 : vector<8x32xf32>
    %cst_18 = arith.constant dense<0.000000e+00> : vector<8xf32>
    %25 = vector.multi_reduction <add>, %24, %cst_18 [1] : vector<8x32xf32> to vector<8xf32>
    %26 = vector.shape_cast %25 : vector<8xf32> to vector<8x1xf32>
    %cst_19 = arith.constant 3.200000e+01 : f32
    %27 = vector.broadcast %cst_19 : f32 to vector<8x1xf32>
    %28 = arith.divf %26, %27 : vector<8x1xf32>
    %29 = vector.broadcast %21 : vector<8x1xf32> to vector<8x32xf32>
    %30 = arith.subf %6, %29 : vector<8x32xf32>
    %cst_20 = arith.constant 9.99999997E-7 : f32
    %31 = vector.broadcast %cst_20 : f32 to vector<8x1xf32>
    %32 = arith.addf %28, %31 : vector<8x1xf32>
    %33 = math.rsqrt %32 : vector<8x1xf32>
    %34 = vector.broadcast %33 : vector<8x1xf32> to vector<8x32xf32>
    %35 = arith.mulf %30, %34 : vector<8x32xf32>
    %36 = vector.broadcast %15 : vector<1x32xf32> to vector<8x32xf32>
    %37 = arith.mulf %35, %36 : vector<8x32xf32>
    %38 = vector.broadcast %17 : vector<1x32xf32> to vector<8x32xf32>
    %39 = arith.addf %37, %38 : vector<8x32xf32>
    %40 = arith.truncf %39 : vector<8x32xf32> to vector<8x32xbf16>
    %c0_21 = arith.constant 0 : index
    %c0_22 = arith.constant 0 : index
    %c0_23 = arith.constant 0 : index
    %41 = vector.load %arg7[%c0_21, %c0_22, %c0_23] : memref<4x32x96xbf16, #tpu.memory_space<vmem>>, vector<1x32x96xbf16>
    %42 = vector.shape_cast %41 : vector<1x32x96xbf16> to vector<32x96xbf16>
    %cst_24 = arith.constant dense<0.000000e+00> : vector<8x96xf32>
    %43 = tpu.matmul %40, %42, %cst_24 {dimension_numbers = #tpu.dot_dimension_numbers<[1], [0], [0], [1], [0, 0, 1, 1], [], []>} : vector<8x32xbf16>, vector<32x96xbf16>, vector<8x96xf32> -> vector<8x96xf32>
    %c0_25 = arith.constant 0 : index
    %c0_26 = arith.constant 0 : index
    %c0_27 = arith.constant 0 : index
    %44 = vector.load %arg8[%c0_25, %c0_26, %c0_27] : memref<4x1x96xf32, #tpu.memory_space<vmem>>, vector<1x1x96xf32>
    %45 = vector.shape_cast %44 : vector<1x1x96xf32> to vector<1x96xf32>
    %46 = vector.broadcast %45 : vector<1x96xf32> to vector<8x96xf32>
    %47 = arith.addf %43, %46 : vector<8x96xf32>
    %48 = vector.extract_strided_slice %47 {offsets = [0, 0], sizes = [8, 32], strides = [1, 1]} : vector<8x96xf32> to vector<8x32xf32>
    %49 = vector.extract_strided_slice %47 {offsets = [0, 32], sizes = [8, 32], strides = [1, 1]} : vector<8x96xf32> to vector<8x32xf32>
    %50 = arith.truncf %49 : vector<8x32xf32> to vector<8x32xbf16>
    %51 = vector.extract_strided_slice %47 {offsets = [0, 64], sizes = [8, 32], strides = [1, 1]} : vector<8x96xf32> to vector<8x32xf32>
    %52 = arith.truncf %51 : vector<8x32xf32> to vector<8x32xbf16>
    %53 = tpu.concatenate %48, %48, %48, %48 in 0 : vector<8x32xf32>, vector<8x32xf32>, vector<8x32xf32>, vector<8x32xf32> -> vector<32x32xf32>
    %54 = arith.mulf %53, %7 : vector<32x32xf32>
    %55 = arith.truncf %54 : vector<32x32xf32> to vector<32x32xbf16>
    %cst_28 = arith.constant dense<0.000000e+00> : vector<32x8xf32>
    %56 = tpu.matmul %55, %50, %cst_28 {dimension_numbers = #tpu.dot_dimension_numbers<[1], [1], [0], [0], [0, 0, 1, 0], [], []>} : vector<32x32xbf16>, vector<8x32xbf16>, vector<32x8xf32> -> vector<32x8xf32>
    %cst_29 = arith.constant 0.353553385 : f32
    %57 = vector.broadcast %cst_29 : f32 to vector<32x8xf32>
    %58 = arith.mulf %56, %57 : vector<32x8xf32>
    %59 = vector.broadcast %13 : vector<1x8xf32> to vector<32x8xf32>
    %60 = arith.addf %58, %59 : vector<32x8xf32>
    %cst_30 = arith.constant dense<0xFF800000> : vector<32xf32>
    %61 = vector.multi_reduction <maximumf>, %60, %cst_30 [1] : vector<32x8xf32> to vector<32xf32>
    %62 = vector.shape_cast %61 : vector<32xf32> to vector<32x1xf32>
    %63 = vector.broadcast %62 : vector<32x1xf32> to vector<32x8xf32>
    %64 = arith.subf %60, %63 : vector<32x8xf32>
    %65 = math.exp %64 : vector<32x8xf32>
    %cst_31 = arith.constant dense<0.000000e+00> : vector<32xf32>
    %66 = vector.multi_reduction <add>, %65, %cst_31 [1] : vector<32x8xf32> to vector<32xf32>
    %67 = vector.shape_cast %66 : vector<32xf32> to vector<32x1xf32>
    %68 = vector.broadcast %67 : vector<32x1xf32> to vector<32x8xf32>
    %69 = arith.divf %65, %68 : vector<32x8xf32>
    %70 = arith.truncf %69 : vector<32x8xf32> to vector<32x8xbf16>
    %cst_32 = arith.constant dense<0.000000e+00> : vector<32x32xf32>
    %71 = tpu.matmul %70, %52, %cst_32 {dimension_numbers = #tpu.dot_dimension_numbers<[1], [0], [0], [1], [0, 0, 1, 1], [], []>} : vector<32x8xbf16>, vector<8x32xbf16>, vector<32x32xf32> -> vector<32x32xf32>
    %72 = arith.mulf %71, %7 : vector<32x32xf32>
    %73 = vector.extract_strided_slice %72 {offsets = [0, 0], sizes = [8, 32], strides = [1, 1]} : vector<32x32xf32> to vector<8x32xf32>
    %74 = vector.extract_strided_slice %72 {offsets = [8, 0], sizes = [8, 32], strides = [1, 1]} : vector<32x32xf32> to vector<8x32xf32>
    %75 = arith.addf %73, %74 : vector<8x32xf32>
    %76 = vector.extract_strided_slice %72 {offsets = [16, 0], sizes = [8, 32], strides = [1, 1]} : vector<32x32xf32> to vector<8x32xf32>
    %77 = arith.addf %75, %76 : vector<8x32xf32>
    %78 = vector.extract_strided_slice %72 {offsets = [24, 0], sizes = [8, 32], strides = [1, 1]} : vector<32x32xf32> to vector<8x32xf32>
    %79 = arith.addf %77, %78 : vector<8x32xf32>
    %80 = arith.truncf %79 : vector<8x32xf32> to vector<8x32xbf16>
    %c0_33 = arith.constant 0 : index
    %c0_34 = arith.constant 0 : index
    %c0_35 = arith.constant 0 : index
    %81 = vector.load %arg9[%c0_33, %c0_34, %c0_35] : memref<4x32x32xbf16, #tpu.memory_space<vmem>>, vector<1x32x32xbf16>
    %82 = vector.shape_cast %81 : vector<1x32x32xbf16> to vector<32x32xbf16>
    %cst_36 = arith.constant dense<0.000000e+00> : vector<8x32xf32>
    %83 = tpu.matmul %80, %82, %cst_36 {dimension_numbers = #tpu.dot_dimension_numbers<[1], [0], [0], [1], [0, 0, 1, 1], [], []>} : vector<8x32xbf16>, vector<32x32xbf16>, vector<8x32xf32> -> vector<8x32xf32>
    %84 = arith.addf %6, %83 : vector<8x32xf32>
    %c0_37 = arith.constant 0 : index
    %c0_38 = arith.constant 0 : index
    %c0_39 = arith.constant 0 : index
    %85 = vector.load %arg10[%c0_37, %c0_38, %c0_39] : memref<4x1x32xf32, #tpu.memory_space<vmem>>, vector<1x1x32xf32>
    %86 = vector.shape_cast %85 : vector<1x1x32xf32> to vector<1x32xf32>
    %87 = vector.broadcast %86 : vector<1x32xf32> to vector<8x32xf32>
    %88 = arith.addf %84, %87 : vector<8x32xf32>
    %c0_40 = arith.constant 0 : index
    %c0_41 = arith.constant 0 : index
    %c0_42 = arith.constant 0 : index
    %89 = vector.load %arg11[%c0_40, %c0_41, %c0_42] : memref<4x1x32xf32, #tpu.memory_space<vmem>>, vector<1x1x32xf32>
    %90 = vector.shape_cast %89 : vector<1x1x32xf32> to vector<1x32xf32>
    %c0_43 = arith.constant 0 : index
    %c0_44 = arith.constant 0 : index
    %c0_45 = arith.constant 0 : index
    %91 = vector.load %arg12[%c0_43, %c0_44, %c0_45] : memref<4x1x32xf32, #tpu.memory_space<vmem>>, vector<1x1x32xf32>
    %92 = vector.shape_cast %91 : vector<1x1x32xf32> to vector<1x32xf32>
    %cst_46 = arith.constant dense<0.000000e+00> : vector<8xf32>
    %93 = vector.multi_reduction <add>, %88, %cst_46 [1] : vector<8x32xf32> to vector<8xf32>
    %94 = vector.shape_cast %93 : vector<8xf32> to vector<8x1xf32>
    %cst_47 = arith.constant 3.200000e+01 : f32
    %95 = vector.broadcast %cst_47 : f32 to vector<8x1xf32>
    %96 = arith.divf %94, %95 : vector<8x1xf32>
    %97 = vector.broadcast %96 : vector<8x1xf32> to vector<8x32xf32>
    %98 = arith.subf %88, %97 : vector<8x32xf32>
    %99 = arith.mulf %98, %98 : vector<8x32xf32>
    %cst_48 = arith.constant dense<0.000000e+00> : vector<8xf32>
    %100 = vector.multi_reduction <add>, %99, %cst_48 [1] : vector<8x32xf32> to vector<8xf32>
    %101 = vector.shape_cast %100 : vector<8xf32> to vector<8x1xf32>
    %cst_49 = arith.constant 3.200000e+01 : f32
    %102 = vector.broadcast %cst_49 : f32 to vector<8x1xf32>
    %103 = arith.divf %101, %102 : vector<8x1xf32>
    %104 = vector.broadcast %96 : vector<8x1xf32> to vector<8x32xf32>
    %105 = arith.subf %88, %104 : vector<8x32xf32>
    %cst_50 = arith.constant 9.99999997E-7 : f32
    %106 = vector.broadcast %cst_50 : f32 to vector<8x1xf32>
    %107 = arith.addf %103, %106 : vector<8x1xf32>
    %108 = math.rsqrt %107 : vector<8x1xf32>
    %109 = vector.broadcast %108 : vector<8x1xf32> to vector<8x32xf32>
    %110 = arith.mulf %105, %109 : vector<8x32xf32>
    %111 = vector.broadcast %90 : vector<1x32xf32> to vector<8x32xf32>
    %112 = arith.mulf %110, %111 : vector<8x32xf32>
    %113 = vector.broadcast %92 : vector<1x32xf32> to vector<8x32xf32>
    %114 = arith.addf %112, %113 : vector<8x32xf32>
    %115 = arith.truncf %114 : vector<8x32xf32> to vector<8x32xbf16>
    %c0_51 = arith.constant 0 : index
    %c0_52 = arith.constant 0 : index
    %c0_53 = arith.constant 0 : index
    %116 = vector.load %arg13[%c0_51, %c0_52, %c0_53] : memref<4x32x128xbf16, #tpu.memory_space<vmem>>, vector<1x32x128xbf16>
    %117 = vector.shape_cast %116 : vector<1x32x128xbf16> to vector<32x128xbf16>
    %cst_54 = arith.constant dense<0.000000e+00> : vector<8x128xf32>
    %118 = tpu.matmul %115, %117, %cst_54 {dimension_numbers = #tpu.dot_dimension_numbers<[1], [0], [0], [1], [0, 0, 1, 1], [], []>} : vector<8x32xbf16>, vector<32x128xbf16>, vector<8x128xf32> -> vector<8x128xf32>
    %c0_55 = arith.constant 0 : index
    %c0_56 = arith.constant 0 : index
    %c0_57 = arith.constant 0 : index
    %119 = vector.load %arg14[%c0_55, %c0_56, %c0_57] : memref<4x1x128xf32, #tpu.memory_space<vmem>>, vector<1x1x128xf32>
    %120 = vector.shape_cast %119 : vector<1x1x128xf32> to vector<1x128xf32>
    %121 = vector.broadcast %120 : vector<1x128xf32> to vector<8x128xf32>
    %122 = arith.addf %118, %121 : vector<8x128xf32>
    %cst_58 = arith.constant 5.000000e-01 : f32
    %123 = vector.broadcast %cst_58 : f32 to vector<8x128xf32>
    %124 = arith.mulf %123, %122 : vector<8x128xf32>
    %cst_59 = arith.constant 0.707106769 : f32
    %125 = vector.broadcast %cst_59 : f32 to vector<8x128xf32>
    %126 = arith.mulf %122, %125 : vector<8x128xf32>
    %127 = math.absf %126 : vector<8x128xf32>
    %cst_60 = arith.constant 0.327591091 : f32
    %128 = vector.broadcast %cst_60 : f32 to vector<8x128xf32>
    %129 = arith.mulf %128, %127 : vector<8x128xf32>
    %cst_61 = arith.constant 1.000000e+00 : f32
    %130 = vector.broadcast %cst_61 : f32 to vector<8x128xf32>
    %131 = arith.addf %130, %129 : vector<8x128xf32>
    %cst_62 = arith.constant 1.000000e+00 : f32
    %132 = vector.broadcast %cst_62 : f32 to vector<8x128xf32>
    %133 = arith.divf %132, %131 : vector<8x128xf32>
    %cst_63 = arith.constant 1.06140542 : f32
    %134 = vector.broadcast %cst_63 : f32 to vector<8x128xf32>
    %135 = arith.mulf %134, %133 : vector<8x128xf32>
    %cst_64 = arith.constant -1.45315206 : f32
    %136 = vector.broadcast %cst_64 : f32 to vector<8x128xf32>
    %137 = arith.addf %135, %136 : vector<8x128xf32>
    %138 = arith.mulf %137, %133 : vector<8x128xf32>
    %cst_65 = arith.constant 1.42141378 : f32
    %139 = vector.broadcast %cst_65 : f32 to vector<8x128xf32>
    %140 = arith.addf %138, %139 : vector<8x128xf32>
    %141 = arith.mulf %140, %133 : vector<8x128xf32>
    %cst_66 = arith.constant -0.284496725 : f32
    %142 = vector.broadcast %cst_66 : f32 to vector<8x128xf32>
    %143 = arith.addf %141, %142 : vector<8x128xf32>
    %144 = arith.mulf %143, %133 : vector<8x128xf32>
    %cst_67 = arith.constant 0.254829586 : f32
    %145 = vector.broadcast %cst_67 : f32 to vector<8x128xf32>
    %146 = arith.addf %144, %145 : vector<8x128xf32>
    %147 = arith.mulf %146, %133 : vector<8x128xf32>
    %cst_68 = arith.constant 0.000000e+00 : f32
    %148 = vector.broadcast %cst_68 : f32 to vector<8x128xf32>
    %149 = arith.subf %148, %127 : vector<8x128xf32>
    %150 = arith.mulf %149, %127 : vector<8x128xf32>
    %151 = math.exp %150 : vector<8x128xf32>
    %152 = arith.mulf %147, %151 : vector<8x128xf32>
    %cst_69 = arith.constant 1.000000e+00 : f32
    %153 = vector.broadcast %cst_69 : f32 to vector<8x128xf32>
    %154 = arith.subf %153, %152 : vector<8x128xf32>
    %cst_70 = arith.constant 0.000000e+00 : f32
    %155 = vector.broadcast %cst_70 : f32 to vector<8x128xf32>
    %156 = arith.cmpf oge, %126, %155 : vector<8x128xf32>
    %cst_71 = arith.constant 0.000000e+00 : f32
    %157 = vector.broadcast %cst_71 : f32 to vector<8x128xf32>
    %158 = arith.subf %157, %154 : vector<8x128xf32>
    %159 = arith.select %156, %154, %158 : vector<8x128xi1>, vector<8x128xf32>
    %cst_72 = arith.constant 1.000000e+00 : f32
    %160 = vector.broadcast %cst_72 : f32 to vector<8x128xf32>
    %161 = arith.addf %160, %159 : vector<8x128xf32>
    %162 = arith.mulf %124, %161 : vector<8x128xf32>
    %163 = arith.truncf %162 : vector<8x128xf32> to vector<8x128xbf16>
    %c0_73 = arith.constant 0 : index
    %c0_74 = arith.constant 0 : index
    %c0_75 = arith.constant 0 : index
    %164 = vector.load %arg15[%c0_73, %c0_74, %c0_75] : memref<4x128x32xbf16, #tpu.memory_space<vmem>>, vector<1x128x32xbf16>
    %165 = vector.shape_cast %164 : vector<1x128x32xbf16> to vector<128x32xbf16>
    %cst_76 = arith.constant dense<0.000000e+00> : vector<8x32xf32>
    %166 = tpu.matmul %163, %165, %cst_76 {dimension_numbers = #tpu.dot_dimension_numbers<[1], [0], [0], [1], [0, 0, 1, 1], [], []>} : vector<8x128xbf16>, vector<128x32xbf16>, vector<8x32xf32> -> vector<8x32xf32>
    %167 = arith.addf %88, %166 : vector<8x32xf32>
    %c0_77 = arith.constant 0 : index
    %c0_78 = arith.constant 0 : index
    %c0_79 = arith.constant 0 : index
    %168 = vector.load %arg16[%c0_77, %c0_78, %c0_79] : memref<4x1x32xf32, #tpu.memory_space<vmem>>, vector<1x1x32xf32>
    %169 = vector.shape_cast %168 : vector<1x1x32xf32> to vector<1x32xf32>
    %170 = vector.broadcast %169 : vector<1x32xf32> to vector<8x32xf32>
    %171 = arith.addf %167, %170 : vector<8x32xf32>
    %c1 = arith.constant 1 : index
    %c0_80 = arith.constant 0 : index
    %c0_81 = arith.constant 0 : index
    %172 = vector.load %arg5[%c1, %c0_80, %c0_81] : memref<4x1x32xf32, #tpu.memory_space<vmem>>, vector<1x1x32xf32>
    %173 = vector.shape_cast %172 : vector<1x1x32xf32> to vector<1x32xf32>
    %c1_82 = arith.constant 1 : index
    %c0_83 = arith.constant 0 : index
    %c0_84 = arith.constant 0 : index
    %174 = vector.load %arg6[%c1_82, %c0_83, %c0_84] : memref<4x1x32xf32, #tpu.memory_space<vmem>>, vector<1x1x32xf32>
    %175 = vector.shape_cast %174 : vector<1x1x32xf32> to vector<1x32xf32>
    %cst_85 = arith.constant dense<0.000000e+00> : vector<8xf32>
    %176 = vector.multi_reduction <add>, %171, %cst_85 [1] : vector<8x32xf32> to vector<8xf32>
    %177 = vector.shape_cast %176 : vector<8xf32> to vector<8x1xf32>
    %cst_86 = arith.constant 3.200000e+01 : f32
    %178 = vector.broadcast %cst_86 : f32 to vector<8x1xf32>
    %179 = arith.divf %177, %178 : vector<8x1xf32>
    %180 = vector.broadcast %179 : vector<8x1xf32> to vector<8x32xf32>
    %181 = arith.subf %171, %180 : vector<8x32xf32>
    %182 = arith.mulf %181, %181 : vector<8x32xf32>
    %cst_87 = arith.constant dense<0.000000e+00> : vector<8xf32>
    %183 = vector.multi_reduction <add>, %182, %cst_87 [1] : vector<8x32xf32> to vector<8xf32>
    %184 = vector.shape_cast %183 : vector<8xf32> to vector<8x1xf32>
    %cst_88 = arith.constant 3.200000e+01 : f32
    %185 = vector.broadcast %cst_88 : f32 to vector<8x1xf32>
    %186 = arith.divf %184, %185 : vector<8x1xf32>
    %187 = vector.broadcast %179 : vector<8x1xf32> to vector<8x32xf32>
    %188 = arith.subf %171, %187 : vector<8x32xf32>
    %cst_89 = arith.constant 9.99999997E-7 : f32
    %189 = vector.broadcast %cst_89 : f32 to vector<8x1xf32>
    %190 = arith.addf %186, %189 : vector<8x1xf32>
    %191 = math.rsqrt %190 : vector<8x1xf32>
    %192 = vector.broadcast %191 : vector<8x1xf32> to vector<8x32xf32>
    %193 = arith.mulf %188, %192 : vector<8x32xf32>
    %194 = vector.broadcast %173 : vector<1x32xf32> to vector<8x32xf32>
    %195 = arith.mulf %193, %194 : vector<8x32xf32>
    %196 = vector.broadcast %175 : vector<1x32xf32> to vector<8x32xf32>
    %197 = arith.addf %195, %196 : vector<8x32xf32>
    %198 = arith.truncf %197 : vector<8x32xf32> to vector<8x32xbf16>
    %c1_90 = arith.constant 1 : index
    %c0_91 = arith.constant 0 : index
    %c0_92 = arith.constant 0 : index
    %199 = vector.load %arg7[%c1_90, %c0_91, %c0_92] : memref<4x32x96xbf16, #tpu.memory_space<vmem>>, vector<1x32x96xbf16>
    %200 = vector.shape_cast %199 : vector<1x32x96xbf16> to vector<32x96xbf16>
    %cst_93 = arith.constant dense<0.000000e+00> : vector<8x96xf32>
    %201 = tpu.matmul %198, %200, %cst_93 {dimension_numbers = #tpu.dot_dimension_numbers<[1], [0], [0], [1], [0, 0, 1, 1], [], []>} : vector<8x32xbf16>, vector<32x96xbf16>, vector<8x96xf32> -> vector<8x96xf32>
    %c1_94 = arith.constant 1 : index
    %c0_95 = arith.constant 0 : index
    %c0_96 = arith.constant 0 : index
    %202 = vector.load %arg8[%c1_94, %c0_95, %c0_96] : memref<4x1x96xf32, #tpu.memory_space<vmem>>, vector<1x1x96xf32>
    %203 = vector.shape_cast %202 : vector<1x1x96xf32> to vector<1x96xf32>
    %204 = vector.broadcast %203 : vector<1x96xf32> to vector<8x96xf32>
    %205 = arith.addf %201, %204 : vector<8x96xf32>
    %206 = vector.extract_strided_slice %205 {offsets = [0, 0], sizes = [8, 32], strides = [1, 1]} : vector<8x96xf32> to vector<8x32xf32>
    %207 = vector.extract_strided_slice %205 {offsets = [0, 32], sizes = [8, 32], strides = [1, 1]} : vector<8x96xf32> to vector<8x32xf32>
    %208 = arith.truncf %207 : vector<8x32xf32> to vector<8x32xbf16>
    %209 = vector.extract_strided_slice %205 {offsets = [0, 64], sizes = [8, 32], strides = [1, 1]} : vector<8x96xf32> to vector<8x32xf32>
    %210 = arith.truncf %209 : vector<8x32xf32> to vector<8x32xbf16>
    %211 = tpu.concatenate %206, %206, %206, %206 in 0 : vector<8x32xf32>, vector<8x32xf32>, vector<8x32xf32>, vector<8x32xf32> -> vector<32x32xf32>
    %212 = arith.mulf %211, %7 : vector<32x32xf32>
    %213 = arith.truncf %212 : vector<32x32xf32> to vector<32x32xbf16>
    %cst_97 = arith.constant dense<0.000000e+00> : vector<32x8xf32>
    %214 = tpu.matmul %213, %208, %cst_97 {dimension_numbers = #tpu.dot_dimension_numbers<[1], [1], [0], [0], [0, 0, 1, 0], [], []>} : vector<32x32xbf16>, vector<8x32xbf16>, vector<32x8xf32> -> vector<32x8xf32>
    %cst_98 = arith.constant 0.353553385 : f32
    %215 = vector.broadcast %cst_98 : f32 to vector<32x8xf32>
    %216 = arith.mulf %214, %215 : vector<32x8xf32>
    %217 = vector.broadcast %13 : vector<1x8xf32> to vector<32x8xf32>
    %218 = arith.addf %216, %217 : vector<32x8xf32>
    %cst_99 = arith.constant dense<0xFF800000> : vector<32xf32>
    %219 = vector.multi_reduction <maximumf>, %218, %cst_99 [1] : vector<32x8xf32> to vector<32xf32>
    %220 = vector.shape_cast %219 : vector<32xf32> to vector<32x1xf32>
    %221 = vector.broadcast %220 : vector<32x1xf32> to vector<32x8xf32>
    %222 = arith.subf %218, %221 : vector<32x8xf32>
    %223 = math.exp %222 : vector<32x8xf32>
    %cst_100 = arith.constant dense<0.000000e+00> : vector<32xf32>
    %224 = vector.multi_reduction <add>, %223, %cst_100 [1] : vector<32x8xf32> to vector<32xf32>
    %225 = vector.shape_cast %224 : vector<32xf32> to vector<32x1xf32>
    %226 = vector.broadcast %225 : vector<32x1xf32> to vector<32x8xf32>
    %227 = arith.divf %223, %226 : vector<32x8xf32>
    %228 = arith.truncf %227 : vector<32x8xf32> to vector<32x8xbf16>
    %cst_101 = arith.constant dense<0.000000e+00> : vector<32x32xf32>
    %229 = tpu.matmul %228, %210, %cst_101 {dimension_numbers = #tpu.dot_dimension_numbers<[1], [0], [0], [1], [0, 0, 1, 1], [], []>} : vector<32x8xbf16>, vector<8x32xbf16>, vector<32x32xf32> -> vector<32x32xf32>
    %230 = arith.mulf %229, %7 : vector<32x32xf32>
    %231 = vector.extract_strided_slice %230 {offsets = [0, 0], sizes = [8, 32], strides = [1, 1]} : vector<32x32xf32> to vector<8x32xf32>
    %232 = vector.extract_strided_slice %230 {offsets = [8, 0], sizes = [8, 32], strides = [1, 1]} : vector<32x32xf32> to vector<8x32xf32>
    %233 = arith.addf %231, %232 : vector<8x32xf32>
    %234 = vector.extract_strided_slice %230 {offsets = [16, 0], sizes = [8, 32], strides = [1, 1]} : vector<32x32xf32> to vector<8x32xf32>
    %235 = arith.addf %233, %234 : vector<8x32xf32>
    %236 = vector.extract_strided_slice %230 {offsets = [24, 0], sizes = [8, 32], strides = [1, 1]} : vector<32x32xf32> to vector<8x32xf32>
    %237 = arith.addf %235, %236 : vector<8x32xf32>
    %238 = arith.truncf %237 : vector<8x32xf32> to vector<8x32xbf16>
    %c1_102 = arith.constant 1 : index
    %c0_103 = arith.constant 0 : index
    %c0_104 = arith.constant 0 : index
    %239 = vector.load %arg9[%c1_102, %c0_103, %c0_104] : memref<4x32x32xbf16, #tpu.memory_space<vmem>>, vector<1x32x32xbf16>
    %240 = vector.shape_cast %239 : vector<1x32x32xbf16> to vector<32x32xbf16>
    %cst_105 = arith.constant dense<0.000000e+00> : vector<8x32xf32>
    %241 = tpu.matmul %238, %240, %cst_105 {dimension_numbers = #tpu.dot_dimension_numbers<[1], [0], [0], [1], [0, 0, 1, 1], [], []>} : vector<8x32xbf16>, vector<32x32xbf16>, vector<8x32xf32> -> vector<8x32xf32>
    %242 = arith.addf %171, %241 : vector<8x32xf32>
    %c1_106 = arith.constant 1 : index
    %c0_107 = arith.constant 0 : index
    %c0_108 = arith.constant 0 : index
    %243 = vector.load %arg10[%c1_106, %c0_107, %c0_108] : memref<4x1x32xf32, #tpu.memory_space<vmem>>, vector<1x1x32xf32>
    %244 = vector.shape_cast %243 : vector<1x1x32xf32> to vector<1x32xf32>
    %245 = vector.broadcast %244 : vector<1x32xf32> to vector<8x32xf32>
    %246 = arith.addf %242, %245 : vector<8x32xf32>
    %c1_109 = arith.constant 1 : index
    %c0_110 = arith.constant 0 : index
    %c0_111 = arith.constant 0 : index
    %247 = vector.load %arg11[%c1_109, %c0_110, %c0_111] : memref<4x1x32xf32, #tpu.memory_space<vmem>>, vector<1x1x32xf32>
    %248 = vector.shape_cast %247 : vector<1x1x32xf32> to vector<1x32xf32>
    %c1_112 = arith.constant 1 : index
    %c0_113 = arith.constant 0 : index
    %c0_114 = arith.constant 0 : index
    %249 = vector.load %arg12[%c1_112, %c0_113, %c0_114] : memref<4x1x32xf32, #tpu.memory_space<vmem>>, vector<1x1x32xf32>
    %250 = vector.shape_cast %249 : vector<1x1x32xf32> to vector<1x32xf32>
    %cst_115 = arith.constant dense<0.000000e+00> : vector<8xf32>
    %251 = vector.multi_reduction <add>, %246, %cst_115 [1] : vector<8x32xf32> to vector<8xf32>
    %252 = vector.shape_cast %251 : vector<8xf32> to vector<8x1xf32>
    %cst_116 = arith.constant 3.200000e+01 : f32
    %253 = vector.broadcast %cst_116 : f32 to vector<8x1xf32>
    %254 = arith.divf %252, %253 : vector<8x1xf32>
    %255 = vector.broadcast %254 : vector<8x1xf32> to vector<8x32xf32>
    %256 = arith.subf %246, %255 : vector<8x32xf32>
    %257 = arith.mulf %256, %256 : vector<8x32xf32>
    %cst_117 = arith.constant dense<0.000000e+00> : vector<8xf32>
    %258 = vector.multi_reduction <add>, %257, %cst_117 [1] : vector<8x32xf32> to vector<8xf32>
    %259 = vector.shape_cast %258 : vector<8xf32> to vector<8x1xf32>
    %cst_118 = arith.constant 3.200000e+01 : f32
    %260 = vector.broadcast %cst_118 : f32 to vector<8x1xf32>
    %261 = arith.divf %259, %260 : vector<8x1xf32>
    %262 = vector.broadcast %254 : vector<8x1xf32> to vector<8x32xf32>
    %263 = arith.subf %246, %262 : vector<8x32xf32>
    %cst_119 = arith.constant 9.99999997E-7 : f32
    %264 = vector.broadcast %cst_119 : f32 to vector<8x1xf32>
    %265 = arith.addf %261, %264 : vector<8x1xf32>
    %266 = math.rsqrt %265 : vector<8x1xf32>
    %267 = vector.broadcast %266 : vector<8x1xf32> to vector<8x32xf32>
    %268 = arith.mulf %263, %267 : vector<8x32xf32>
    %269 = vector.broadcast %248 : vector<1x32xf32> to vector<8x32xf32>
    %270 = arith.mulf %268, %269 : vector<8x32xf32>
    %271 = vector.broadcast %250 : vector<1x32xf32> to vector<8x32xf32>
    %272 = arith.addf %270, %271 : vector<8x32xf32>
    %273 = arith.truncf %272 : vector<8x32xf32> to vector<8x32xbf16>
    %c1_120 = arith.constant 1 : index
    %c0_121 = arith.constant 0 : index
    %c0_122 = arith.constant 0 : index
    %274 = vector.load %arg13[%c1_120, %c0_121, %c0_122] : memref<4x32x128xbf16, #tpu.memory_space<vmem>>, vector<1x32x128xbf16>
    %275 = vector.shape_cast %274 : vector<1x32x128xbf16> to vector<32x128xbf16>
    %cst_123 = arith.constant dense<0.000000e+00> : vector<8x128xf32>
    %276 = tpu.matmul %273, %275, %cst_123 {dimension_numbers = #tpu.dot_dimension_numbers<[1], [0], [0], [1], [0, 0, 1, 1], [], []>} : vector<8x32xbf16>, vector<32x128xbf16>, vector<8x128xf32> -> vector<8x128xf32>
    %c1_124 = arith.constant 1 : index
    %c0_125 = arith.constant 0 : index
    %c0_126 = arith.constant 0 : index
    %277 = vector.load %arg14[%c1_124, %c0_125, %c0_126] : memref<4x1x128xf32, #tpu.memory_space<vmem>>, vector<1x1x128xf32>
    %278 = vector.shape_cast %277 : vector<1x1x128xf32> to vector<1x128xf32>
    %279 = vector.broadcast %278 : vector<1x128xf32> to vector<8x128xf32>
    %280 = arith.addf %276, %279 : vector<8x128xf32>
    %cst_127 = arith.constant 5.000000e-01 : f32
    %281 = vector.broadcast %cst_127 : f32 to vector<8x128xf32>
    %282 = arith.mulf %281, %280 : vector<8x128xf32>
    %cst_128 = arith.constant 0.707106769 : f32
    %283 = vector.broadcast %cst_128 : f32 to vector<8x128xf32>
    %284 = arith.mulf %280, %283 : vector<8x128xf32>
    %285 = math.absf %284 : vector<8x128xf32>
    %cst_129 = arith.constant 0.327591091 : f32
    %286 = vector.broadcast %cst_129 : f32 to vector<8x128xf32>
    %287 = arith.mulf %286, %285 : vector<8x128xf32>
    %cst_130 = arith.constant 1.000000e+00 : f32
    %288 = vector.broadcast %cst_130 : f32 to vector<8x128xf32>
    %289 = arith.addf %288, %287 : vector<8x128xf32>
    %cst_131 = arith.constant 1.000000e+00 : f32
    %290 = vector.broadcast %cst_131 : f32 to vector<8x128xf32>
    %291 = arith.divf %290, %289 : vector<8x128xf32>
    %cst_132 = arith.constant 1.06140542 : f32
    %292 = vector.broadcast %cst_132 : f32 to vector<8x128xf32>
    %293 = arith.mulf %292, %291 : vector<8x128xf32>
    %cst_133 = arith.constant -1.45315206 : f32
    %294 = vector.broadcast %cst_133 : f32 to vector<8x128xf32>
    %295 = arith.addf %293, %294 : vector<8x128xf32>
    %296 = arith.mulf %295, %291 : vector<8x128xf32>
    %cst_134 = arith.constant 1.42141378 : f32
    %297 = vector.broadcast %cst_134 : f32 to vector<8x128xf32>
    %298 = arith.addf %296, %297 : vector<8x128xf32>
    %299 = arith.mulf %298, %291 : vector<8x128xf32>
    %cst_135 = arith.constant -0.284496725 : f32
    %300 = vector.broadcast %cst_135 : f32 to vector<8x128xf32>
    %301 = arith.addf %299, %300 : vector<8x128xf32>
    %302 = arith.mulf %301, %291 : vector<8x128xf32>
    %cst_136 = arith.constant 0.254829586 : f32
    %303 = vector.broadcast %cst_136 : f32 to vector<8x128xf32>
    %304 = arith.addf %302, %303 : vector<8x128xf32>
    %305 = arith.mulf %304, %291 : vector<8x128xf32>
    %cst_137 = arith.constant 0.000000e+00 : f32
    %306 = vector.broadcast %cst_137 : f32 to vector<8x128xf32>
    %307 = arith.subf %306, %285 : vector<8x128xf32>
    %308 = arith.mulf %307, %285 : vector<8x128xf32>
    %309 = math.exp %308 : vector<8x128xf32>
    %310 = arith.mulf %305, %309 : vector<8x128xf32>
    %cst_138 = arith.constant 1.000000e+00 : f32
    %311 = vector.broadcast %cst_138 : f32 to vector<8x128xf32>
    %312 = arith.subf %311, %310 : vector<8x128xf32>
    %cst_139 = arith.constant 0.000000e+00 : f32
    %313 = vector.broadcast %cst_139 : f32 to vector<8x128xf32>
    %314 = arith.cmpf oge, %284, %313 : vector<8x128xf32>
    %cst_140 = arith.constant 0.000000e+00 : f32
    %315 = vector.broadcast %cst_140 : f32 to vector<8x128xf32>
    %316 = arith.subf %315, %312 : vector<8x128xf32>
    %317 = arith.select %314, %312, %316 : vector<8x128xi1>, vector<8x128xf32>
    %cst_141 = arith.constant 1.000000e+00 : f32
    %318 = vector.broadcast %cst_141 : f32 to vector<8x128xf32>
    %319 = arith.addf %318, %317 : vector<8x128xf32>
    %320 = arith.mulf %282, %319 : vector<8x128xf32>
    %321 = arith.truncf %320 : vector<8x128xf32> to vector<8x128xbf16>
    %c1_142 = arith.constant 1 : index
    %c0_143 = arith.constant 0 : index
    %c0_144 = arith.constant 0 : index
    %322 = vector.load %arg15[%c1_142, %c0_143, %c0_144] : memref<4x128x32xbf16, #tpu.memory_space<vmem>>, vector<1x128x32xbf16>
    %323 = vector.shape_cast %322 : vector<1x128x32xbf16> to vector<128x32xbf16>
    %cst_145 = arith.constant dense<0.000000e+00> : vector<8x32xf32>
    %324 = tpu.matmul %321, %323, %cst_145 {dimension_numbers = #tpu.dot_dimension_numbers<[1], [0], [0], [1], [0, 0, 1, 1], [], []>} : vector<8x128xbf16>, vector<128x32xbf16>, vector<8x32xf32> -> vector<8x32xf32>
    %325 = arith.addf %246, %324 : vector<8x32xf32>
    %c1_146 = arith.constant 1 : index
    %c0_147 = arith.constant 0 : index
    %c0_148 = arith.constant 0 : index
    %326 = vector.load %arg16[%c1_146, %c0_147, %c0_148] : memref<4x1x32xf32, #tpu.memory_space<vmem>>, vector<1x1x32xf32>
    %327 = vector.shape_cast %326 : vector<1x1x32xf32> to vector<1x32xf32>
    %328 = vector.broadcast %327 : vector<1x32xf32> to vector<8x32xf32>
    %329 = arith.addf %325, %328 : vector<8x32xf32>
    %c2 = arith.constant 2 : index
    %c0_149 = arith.constant 0 : index
    %c0_150 = arith.constant 0 : index
    %330 = vector.load %arg5[%c2, %c0_149, %c0_150] : memref<4x1x32xf32, #tpu.memory_space<vmem>>, vector<1x1x32xf32>
    %331 = vector.shape_cast %330 : vector<1x1x32xf32> to vector<1x32xf32>
    %c2_151 = arith.constant 2 : index
    %c0_152 = arith.constant 0 : index
    %c0_153 = arith.constant 0 : index
    %332 = vector.load %arg6[%c2_151, %c0_152, %c0_153] : memref<4x1x32xf32, #tpu.memory_space<vmem>>, vector<1x1x32xf32>
    %333 = vector.shape_cast %332 : vector<1x1x32xf32> to vector<1x32xf32>
    %cst_154 = arith.constant dense<0.000000e+00> : vector<8xf32>
    %334 = vector.multi_reduction <add>, %329, %cst_154 [1] : vector<8x32xf32> to vector<8xf32>
    %335 = vector.shape_cast %334 : vector<8xf32> to vector<8x1xf32>
    %cst_155 = arith.constant 3.200000e+01 : f32
    %336 = vector.broadcast %cst_155 : f32 to vector<8x1xf32>
    %337 = arith.divf %335, %336 : vector<8x1xf32>
    %338 = vector.broadcast %337 : vector<8x1xf32> to vector<8x32xf32>
    %339 = arith.subf %329, %338 : vector<8x32xf32>
    %340 = arith.mulf %339, %339 : vector<8x32xf32>
    %cst_156 = arith.constant dense<0.000000e+00> : vector<8xf32>
    %341 = vector.multi_reduction <add>, %340, %cst_156 [1] : vector<8x32xf32> to vector<8xf32>
    %342 = vector.shape_cast %341 : vector<8xf32> to vector<8x1xf32>
    %cst_157 = arith.constant 3.200000e+01 : f32
    %343 = vector.broadcast %cst_157 : f32 to vector<8x1xf32>
    %344 = arith.divf %342, %343 : vector<8x1xf32>
    %345 = vector.broadcast %337 : vector<8x1xf32> to vector<8x32xf32>
    %346 = arith.subf %329, %345 : vector<8x32xf32>
    %cst_158 = arith.constant 9.99999997E-7 : f32
    %347 = vector.broadcast %cst_158 : f32 to vector<8x1xf32>
    %348 = arith.addf %344, %347 : vector<8x1xf32>
    %349 = math.rsqrt %348 : vector<8x1xf32>
    %350 = vector.broadcast %349 : vector<8x1xf32> to vector<8x32xf32>
    %351 = arith.mulf %346, %350 : vector<8x32xf32>
    %352 = vector.broadcast %331 : vector<1x32xf32> to vector<8x32xf32>
    %353 = arith.mulf %351, %352 : vector<8x32xf32>
    %354 = vector.broadcast %333 : vector<1x32xf32> to vector<8x32xf32>
    %355 = arith.addf %353, %354 : vector<8x32xf32>
    %356 = arith.truncf %355 : vector<8x32xf32> to vector<8x32xbf16>
    %c2_159 = arith.constant 2 : index
    %c0_160 = arith.constant 0 : index
    %c0_161 = arith.constant 0 : index
    %357 = vector.load %arg7[%c2_159, %c0_160, %c0_161] : memref<4x32x96xbf16, #tpu.memory_space<vmem>>, vector<1x32x96xbf16>
    %358 = vector.shape_cast %357 : vector<1x32x96xbf16> to vector<32x96xbf16>
    %cst_162 = arith.constant dense<0.000000e+00> : vector<8x96xf32>
    %359 = tpu.matmul %356, %358, %cst_162 {dimension_numbers = #tpu.dot_dimension_numbers<[1], [0], [0], [1], [0, 0, 1, 1], [], []>} : vector<8x32xbf16>, vector<32x96xbf16>, vector<8x96xf32> -> vector<8x96xf32>
    %c2_163 = arith.constant 2 : index
    %c0_164 = arith.constant 0 : index
    %c0_165 = arith.constant 0 : index
    %360 = vector.load %arg8[%c2_163, %c0_164, %c0_165] : memref<4x1x96xf32, #tpu.memory_space<vmem>>, vector<1x1x96xf32>
    %361 = vector.shape_cast %360 : vector<1x1x96xf32> to vector<1x96xf32>
    %362 = vector.broadcast %361 : vector<1x96xf32> to vector<8x96xf32>
    %363 = arith.addf %359, %362 : vector<8x96xf32>
    %364 = vector.extract_strided_slice %363 {offsets = [0, 0], sizes = [8, 32], strides = [1, 1]} : vector<8x96xf32> to vector<8x32xf32>
    %365 = vector.extract_strided_slice %363 {offsets = [0, 32], sizes = [8, 32], strides = [1, 1]} : vector<8x96xf32> to vector<8x32xf32>
    %366 = arith.truncf %365 : vector<8x32xf32> to vector<8x32xbf16>
    %367 = vector.extract_strided_slice %363 {offsets = [0, 64], sizes = [8, 32], strides = [1, 1]} : vector<8x96xf32> to vector<8x32xf32>
    %368 = arith.truncf %367 : vector<8x32xf32> to vector<8x32xbf16>
    %369 = tpu.concatenate %364, %364, %364, %364 in 0 : vector<8x32xf32>, vector<8x32xf32>, vector<8x32xf32>, vector<8x32xf32> -> vector<32x32xf32>
    %370 = arith.mulf %369, %7 : vector<32x32xf32>
    %371 = arith.truncf %370 : vector<32x32xf32> to vector<32x32xbf16>
    %cst_166 = arith.constant dense<0.000000e+00> : vector<32x8xf32>
    %372 = tpu.matmul %371, %366, %cst_166 {dimension_numbers = #tpu.dot_dimension_numbers<[1], [1], [0], [0], [0, 0, 1, 0], [], []>} : vector<32x32xbf16>, vector<8x32xbf16>, vector<32x8xf32> -> vector<32x8xf32>
    %cst_167 = arith.constant 0.353553385 : f32
    %373 = vector.broadcast %cst_167 : f32 to vector<32x8xf32>
    %374 = arith.mulf %372, %373 : vector<32x8xf32>
    %375 = vector.broadcast %13 : vector<1x8xf32> to vector<32x8xf32>
    %376 = arith.addf %374, %375 : vector<32x8xf32>
    %cst_168 = arith.constant dense<0xFF800000> : vector<32xf32>
    %377 = vector.multi_reduction <maximumf>, %376, %cst_168 [1] : vector<32x8xf32> to vector<32xf32>
    %378 = vector.shape_cast %377 : vector<32xf32> to vector<32x1xf32>
    %379 = vector.broadcast %378 : vector<32x1xf32> to vector<32x8xf32>
    %380 = arith.subf %376, %379 : vector<32x8xf32>
    %381 = math.exp %380 : vector<32x8xf32>
    %cst_169 = arith.constant dense<0.000000e+00> : vector<32xf32>
    %382 = vector.multi_reduction <add>, %381, %cst_169 [1] : vector<32x8xf32> to vector<32xf32>
    %383 = vector.shape_cast %382 : vector<32xf32> to vector<32x1xf32>
    %384 = vector.broadcast %383 : vector<32x1xf32> to vector<32x8xf32>
    %385 = arith.divf %381, %384 : vector<32x8xf32>
    %386 = arith.truncf %385 : vector<32x8xf32> to vector<32x8xbf16>
    %cst_170 = arith.constant dense<0.000000e+00> : vector<32x32xf32>
    %387 = tpu.matmul %386, %368, %cst_170 {dimension_numbers = #tpu.dot_dimension_numbers<[1], [0], [0], [1], [0, 0, 1, 1], [], []>} : vector<32x8xbf16>, vector<8x32xbf16>, vector<32x32xf32> -> vector<32x32xf32>
    %388 = arith.mulf %387, %7 : vector<32x32xf32>
    %389 = vector.extract_strided_slice %388 {offsets = [0, 0], sizes = [8, 32], strides = [1, 1]} : vector<32x32xf32> to vector<8x32xf32>
    %390 = vector.extract_strided_slice %388 {offsets = [8, 0], sizes = [8, 32], strides = [1, 1]} : vector<32x32xf32> to vector<8x32xf32>
    %391 = arith.addf %389, %390 : vector<8x32xf32>
    %392 = vector.extract_strided_slice %388 {offsets = [16, 0], sizes = [8, 32], strides = [1, 1]} : vector<32x32xf32> to vector<8x32xf32>
    %393 = arith.addf %391, %392 : vector<8x32xf32>
    %394 = vector.extract_strided_slice %388 {offsets = [24, 0], sizes = [8, 32], strides = [1, 1]} : vector<32x32xf32> to vector<8x32xf32>
    %395 = arith.addf %393, %394 : vector<8x32xf32>
    %396 = arith.truncf %395 : vector<8x32xf32> to vector<8x32xbf16>
    %c2_171 = arith.constant 2 : index
    %c0_172 = arith.constant 0 : index
    %c0_173 = arith.constant 0 : index
    %397 = vector.load %arg9[%c2_171, %c0_172, %c0_173] : memref<4x32x32xbf16, #tpu.memory_space<vmem>>, vector<1x32x32xbf16>
    %398 = vector.shape_cast %397 : vector<1x32x32xbf16> to vector<32x32xbf16>
    %cst_174 = arith.constant dense<0.000000e+00> : vector<8x32xf32>
    %399 = tpu.matmul %396, %398, %cst_174 {dimension_numbers = #tpu.dot_dimension_numbers<[1], [0], [0], [1], [0, 0, 1, 1], [], []>} : vector<8x32xbf16>, vector<32x32xbf16>, vector<8x32xf32> -> vector<8x32xf32>
    %400 = arith.addf %329, %399 : vector<8x32xf32>
    %c2_175 = arith.constant 2 : index
    %c0_176 = arith.constant 0 : index
    %c0_177 = arith.constant 0 : index
    %401 = vector.load %arg10[%c2_175, %c0_176, %c0_177] : memref<4x1x32xf32, #tpu.memory_space<vmem>>, vector<1x1x32xf32>
    %402 = vector.shape_cast %401 : vector<1x1x32xf32> to vector<1x32xf32>
    %403 = vector.broadcast %402 : vector<1x32xf32> to vector<8x32xf32>
    %404 = arith.addf %400, %403 : vector<8x32xf32>
    %c2_178 = arith.constant 2 : index
    %c0_179 = arith.constant 0 : index
    %c0_180 = arith.constant 0 : index
    %405 = vector.load %arg11[%c2_178, %c0_179, %c0_180] : memref<4x1x32xf32, #tpu.memory_space<vmem>>, vector<1x1x32xf32>
    %406 = vector.shape_cast %405 : vector<1x1x32xf32> to vector<1x32xf32>
    %c2_181 = arith.constant 2 : index
    %c0_182 = arith.constant 0 : index
    %c0_183 = arith.constant 0 : index
    %407 = vector.load %arg12[%c2_181, %c0_182, %c0_183] : memref<4x1x32xf32, #tpu.memory_space<vmem>>, vector<1x1x32xf32>
    %408 = vector.shape_cast %407 : vector<1x1x32xf32> to vector<1x32xf32>
    %cst_184 = arith.constant dense<0.000000e+00> : vector<8xf32>
    %409 = vector.multi_reduction <add>, %404, %cst_184 [1] : vector<8x32xf32> to vector<8xf32>
    %410 = vector.shape_cast %409 : vector<8xf32> to vector<8x1xf32>
    %cst_185 = arith.constant 3.200000e+01 : f32
    %411 = vector.broadcast %cst_185 : f32 to vector<8x1xf32>
    %412 = arith.divf %410, %411 : vector<8x1xf32>
    %413 = vector.broadcast %412 : vector<8x1xf32> to vector<8x32xf32>
    %414 = arith.subf %404, %413 : vector<8x32xf32>
    %415 = arith.mulf %414, %414 : vector<8x32xf32>
    %cst_186 = arith.constant dense<0.000000e+00> : vector<8xf32>
    %416 = vector.multi_reduction <add>, %415, %cst_186 [1] : vector<8x32xf32> to vector<8xf32>
    %417 = vector.shape_cast %416 : vector<8xf32> to vector<8x1xf32>
    %cst_187 = arith.constant 3.200000e+01 : f32
    %418 = vector.broadcast %cst_187 : f32 to vector<8x1xf32>
    %419 = arith.divf %417, %418 : vector<8x1xf32>
    %420 = vector.broadcast %412 : vector<8x1xf32> to vector<8x32xf32>
    %421 = arith.subf %404, %420 : vector<8x32xf32>
    %cst_188 = arith.constant 9.99999997E-7 : f32
    %422 = vector.broadcast %cst_188 : f32 to vector<8x1xf32>
    %423 = arith.addf %419, %422 : vector<8x1xf32>
    %424 = math.rsqrt %423 : vector<8x1xf32>
    %425 = vector.broadcast %424 : vector<8x1xf32> to vector<8x32xf32>
    %426 = arith.mulf %421, %425 : vector<8x32xf32>
    %427 = vector.broadcast %406 : vector<1x32xf32> to vector<8x32xf32>
    %428 = arith.mulf %426, %427 : vector<8x32xf32>
    %429 = vector.broadcast %408 : vector<1x32xf32> to vector<8x32xf32>
    %430 = arith.addf %428, %429 : vector<8x32xf32>
    %431 = arith.truncf %430 : vector<8x32xf32> to vector<8x32xbf16>
    %c2_189 = arith.constant 2 : index
    %c0_190 = arith.constant 0 : index
    %c0_191 = arith.constant 0 : index
    %432 = vector.load %arg13[%c2_189, %c0_190, %c0_191] : memref<4x32x128xbf16, #tpu.memory_space<vmem>>, vector<1x32x128xbf16>
    %433 = vector.shape_cast %432 : vector<1x32x128xbf16> to vector<32x128xbf16>
    %cst_192 = arith.constant dense<0.000000e+00> : vector<8x128xf32>
    %434 = tpu.matmul %431, %433, %cst_192 {dimension_numbers = #tpu.dot_dimension_numbers<[1], [0], [0], [1], [0, 0, 1, 1], [], []>} : vector<8x32xbf16>, vector<32x128xbf16>, vector<8x128xf32> -> vector<8x128xf32>
    %c2_193 = arith.constant 2 : index
    %c0_194 = arith.constant 0 : index
    %c0_195 = arith.constant 0 : index
    %435 = vector.load %arg14[%c2_193, %c0_194, %c0_195] : memref<4x1x128xf32, #tpu.memory_space<vmem>>, vector<1x1x128xf32>
    %436 = vector.shape_cast %435 : vector<1x1x128xf32> to vector<1x128xf32>
    %437 = vector.broadcast %436 : vector<1x128xf32> to vector<8x128xf32>
    %438 = arith.addf %434, %437 : vector<8x128xf32>
    %cst_196 = arith.constant 5.000000e-01 : f32
    %439 = vector.broadcast %cst_196 : f32 to vector<8x128xf32>
    %440 = arith.mulf %439, %438 : vector<8x128xf32>
    %cst_197 = arith.constant 0.707106769 : f32
    %441 = vector.broadcast %cst_197 : f32 to vector<8x128xf32>
    %442 = arith.mulf %438, %441 : vector<8x128xf32>
    %443 = math.absf %442 : vector<8x128xf32>
    %cst_198 = arith.constant 0.327591091 : f32
    %444 = vector.broadcast %cst_198 : f32 to vector<8x128xf32>
    %445 = arith.mulf %444, %443 : vector<8x128xf32>
    %cst_199 = arith.constant 1.000000e+00 : f32
    %446 = vector.broadcast %cst_199 : f32 to vector<8x128xf32>
    %447 = arith.addf %446, %445 : vector<8x128xf32>
    %cst_200 = arith.constant 1.000000e+00 : f32
    %448 = vector.broadcast %cst_200 : f32 to vector<8x128xf32>
    %449 = arith.divf %448, %447 : vector<8x128xf32>
    %cst_201 = arith.constant 1.06140542 : f32
    %450 = vector.broadcast %cst_201 : f32 to vector<8x128xf32>
    %451 = arith.mulf %450, %449 : vector<8x128xf32>
    %cst_202 = arith.constant -1.45315206 : f32
    %452 = vector.broadcast %cst_202 : f32 to vector<8x128xf32>
    %453 = arith.addf %451, %452 : vector<8x128xf32>
    %454 = arith.mulf %453, %449 : vector<8x128xf32>
    %cst_203 = arith.constant 1.42141378 : f32
    %455 = vector.broadcast %cst_203 : f32 to vector<8x128xf32>
    %456 = arith.addf %454, %455 : vector<8x128xf32>
    %457 = arith.mulf %456, %449 : vector<8x128xf32>
    %cst_204 = arith.constant -0.284496725 : f32
    %458 = vector.broadcast %cst_204 : f32 to vector<8x128xf32>
    %459 = arith.addf %457, %458 : vector<8x128xf32>
    %460 = arith.mulf %459, %449 : vector<8x128xf32>
    %cst_205 = arith.constant 0.254829586 : f32
    %461 = vector.broadcast %cst_205 : f32 to vector<8x128xf32>
    %462 = arith.addf %460, %461 : vector<8x128xf32>
    %463 = arith.mulf %462, %449 : vector<8x128xf32>
    %cst_206 = arith.constant 0.000000e+00 : f32
    %464 = vector.broadcast %cst_206 : f32 to vector<8x128xf32>
    %465 = arith.subf %464, %443 : vector<8x128xf32>
    %466 = arith.mulf %465, %443 : vector<8x128xf32>
    %467 = math.exp %466 : vector<8x128xf32>
    %468 = arith.mulf %463, %467 : vector<8x128xf32>
    %cst_207 = arith.constant 1.000000e+00 : f32
    %469 = vector.broadcast %cst_207 : f32 to vector<8x128xf32>
    %470 = arith.subf %469, %468 : vector<8x128xf32>
    %cst_208 = arith.constant 0.000000e+00 : f32
    %471 = vector.broadcast %cst_208 : f32 to vector<8x128xf32>
    %472 = arith.cmpf oge, %442, %471 : vector<8x128xf32>
    %cst_209 = arith.constant 0.000000e+00 : f32
    %473 = vector.broadcast %cst_209 : f32 to vector<8x128xf32>
    %474 = arith.subf %473, %470 : vector<8x128xf32>
    %475 = arith.select %472, %470, %474 : vector<8x128xi1>, vector<8x128xf32>
    %cst_210 = arith.constant 1.000000e+00 : f32
    %476 = vector.broadcast %cst_210 : f32 to vector<8x128xf32>
    %477 = arith.addf %476, %475 : vector<8x128xf32>
    %478 = arith.mulf %440, %477 : vector<8x128xf32>
    %479 = arith.truncf %478 : vector<8x128xf32> to vector<8x128xbf16>
    %c2_211 = arith.constant 2 : index
    %c0_212 = arith.constant 0 : index
    %c0_213 = arith.constant 0 : index
    %480 = vector.load %arg15[%c2_211, %c0_212, %c0_213] : memref<4x128x32xbf16, #tpu.memory_space<vmem>>, vector<1x128x32xbf16>
    %481 = vector.shape_cast %480 : vector<1x128x32xbf16> to vector<128x32xbf16>
    %cst_214 = arith.constant dense<0.000000e+00> : vector<8x32xf32>
    %482 = tpu.matmul %479, %481, %cst_214 {dimension_numbers = #tpu.dot_dimension_numbers<[1], [0], [0], [1], [0, 0, 1, 1], [], []>} : vector<8x128xbf16>, vector<128x32xbf16>, vector<8x32xf32> -> vector<8x32xf32>
    %483 = arith.addf %404, %482 : vector<8x32xf32>
    %c2_215 = arith.constant 2 : index
    %c0_216 = arith.constant 0 : index
    %c0_217 = arith.constant 0 : index
    %484 = vector.load %arg16[%c2_215, %c0_216, %c0_217] : memref<4x1x32xf32, #tpu.memory_space<vmem>>, vector<1x1x32xf32>
    %485 = vector.shape_cast %484 : vector<1x1x32xf32> to vector<1x32xf32>
    %486 = vector.broadcast %485 : vector<1x32xf32> to vector<8x32xf32>
    %487 = arith.addf %483, %486 : vector<8x32xf32>
    %c0_218 = arith.constant 0 : index
    %c0_219 = arith.constant 0 : index
    %488 = vector.load %arg17[%c0_218, %c0_219] : memref<1x32xf32, #tpu.memory_space<vmem>>, vector<1x32xf32>
    %c0_220 = arith.constant 0 : index
    %c0_221 = arith.constant 0 : index
    %489 = vector.load %arg18[%c0_220, %c0_221] : memref<1x32xf32, #tpu.memory_space<vmem>>, vector<1x32xf32>
    %cst_222 = arith.constant dense<0.000000e+00> : vector<8xf32>
    %490 = vector.multi_reduction <add>, %487, %cst_222 [1] : vector<8x32xf32> to vector<8xf32>
    %491 = vector.shape_cast %490 : vector<8xf32> to vector<8x1xf32>
    %cst_223 = arith.constant 3.200000e+01 : f32
    %492 = vector.broadcast %cst_223 : f32 to vector<8x1xf32>
    %493 = arith.divf %491, %492 : vector<8x1xf32>
    %494 = vector.broadcast %493 : vector<8x1xf32> to vector<8x32xf32>
    %495 = arith.subf %487, %494 : vector<8x32xf32>
    %496 = arith.mulf %495, %495 : vector<8x32xf32>
    %cst_224 = arith.constant dense<0.000000e+00> : vector<8xf32>
    %497 = vector.multi_reduction <add>, %496, %cst_224 [1] : vector<8x32xf32> to vector<8xf32>
    %498 = vector.shape_cast %497 : vector<8xf32> to vector<8x1xf32>
    %cst_225 = arith.constant 3.200000e+01 : f32
    %499 = vector.broadcast %cst_225 : f32 to vector<8x1xf32>
    %500 = arith.divf %498, %499 : vector<8x1xf32>
    %501 = vector.broadcast %493 : vector<8x1xf32> to vector<8x32xf32>
    %502 = arith.subf %487, %501 : vector<8x32xf32>
    %cst_226 = arith.constant 9.99999997E-7 : f32
    %503 = vector.broadcast %cst_226 : f32 to vector<8x1xf32>
    %504 = arith.addf %500, %503 : vector<8x1xf32>
    %505 = math.rsqrt %504 : vector<8x1xf32>
    %506 = vector.broadcast %505 : vector<8x1xf32> to vector<8x32xf32>
    %507 = arith.mulf %502, %506 : vector<8x32xf32>
    %508 = vector.broadcast %488 : vector<1x32xf32> to vector<8x32xf32>
    %509 = arith.mulf %507, %508 : vector<8x32xf32>
    %510 = vector.broadcast %489 : vector<1x32xf32> to vector<8x32xf32>
    %511 = arith.addf %509, %510 : vector<8x32xf32>
    %512 = vector.extract_strided_slice %511 {offsets = [1, 0], sizes = [4, 32], strides = [1, 1]} : vector<8x32xf32> to vector<4x32xf32>
    %c3 = arith.constant 3 : index
    %c0_227 = arith.constant 0 : index
    %c0_228 = arith.constant 0 : index
    %513 = vector.load %arg5[%c3, %c0_227, %c0_228] : memref<4x1x32xf32, #tpu.memory_space<vmem>>, vector<1x1x32xf32>
    %514 = vector.shape_cast %513 : vector<1x1x32xf32> to vector<1x32xf32>
    %c3_229 = arith.constant 3 : index
    %c0_230 = arith.constant 0 : index
    %c0_231 = arith.constant 0 : index
    %515 = vector.load %arg6[%c3_229, %c0_230, %c0_231] : memref<4x1x32xf32, #tpu.memory_space<vmem>>, vector<1x1x32xf32>
    %516 = vector.shape_cast %515 : vector<1x1x32xf32> to vector<1x32xf32>
    %cst_232 = arith.constant dense<0.000000e+00> : vector<8xf32>
    %517 = vector.multi_reduction <add>, %487, %cst_232 [1] : vector<8x32xf32> to vector<8xf32>
    %518 = vector.shape_cast %517 : vector<8xf32> to vector<8x1xf32>
    %cst_233 = arith.constant 3.200000e+01 : f32
    %519 = vector.broadcast %cst_233 : f32 to vector<8x1xf32>
    %520 = arith.divf %518, %519 : vector<8x1xf32>
    %521 = vector.broadcast %520 : vector<8x1xf32> to vector<8x32xf32>
    %522 = arith.subf %487, %521 : vector<8x32xf32>
    %523 = arith.mulf %522, %522 : vector<8x32xf32>
    %cst_234 = arith.constant dense<0.000000e+00> : vector<8xf32>
    %524 = vector.multi_reduction <add>, %523, %cst_234 [1] : vector<8x32xf32> to vector<8xf32>
    %525 = vector.shape_cast %524 : vector<8xf32> to vector<8x1xf32>
    %cst_235 = arith.constant 3.200000e+01 : f32
    %526 = vector.broadcast %cst_235 : f32 to vector<8x1xf32>
    %527 = arith.divf %525, %526 : vector<8x1xf32>
    %528 = vector.broadcast %520 : vector<8x1xf32> to vector<8x32xf32>
    %529 = arith.subf %487, %528 : vector<8x32xf32>
    %cst_236 = arith.constant 9.99999997E-7 : f32
    %530 = vector.broadcast %cst_236 : f32 to vector<8x1xf32>
    %531 = arith.addf %527, %530 : vector<8x1xf32>
    %532 = math.rsqrt %531 : vector<8x1xf32>
    %533 = vector.broadcast %532 : vector<8x1xf32> to vector<8x32xf32>
    %534 = arith.mulf %529, %533 : vector<8x32xf32>
    %535 = vector.broadcast %514 : vector<1x32xf32> to vector<8x32xf32>
    %536 = arith.mulf %534, %535 : vector<8x32xf32>
    %537 = vector.broadcast %516 : vector<1x32xf32> to vector<8x32xf32>
    %538 = arith.addf %536, %537 : vector<8x32xf32>
    %539 = arith.truncf %538 : vector<8x32xf32> to vector<8x32xbf16>
    %c3_237 = arith.constant 3 : index
    %c0_238 = arith.constant 0 : index
    %c0_239 = arith.constant 0 : index
    %540 = vector.load %arg7[%c3_237, %c0_238, %c0_239] : memref<4x32x96xbf16, #tpu.memory_space<vmem>>, vector<1x32x96xbf16>
    %541 = vector.shape_cast %540 : vector<1x32x96xbf16> to vector<32x96xbf16>
    %cst_240 = arith.constant dense<0.000000e+00> : vector<8x96xf32>
    %542 = tpu.matmul %539, %541, %cst_240 {dimension_numbers = #tpu.dot_dimension_numbers<[1], [0], [0], [1], [0, 0, 1, 1], [], []>} : vector<8x32xbf16>, vector<32x96xbf16>, vector<8x96xf32> -> vector<8x96xf32>
    %c3_241 = arith.constant 3 : index
    %c0_242 = arith.constant 0 : index
    %c0_243 = arith.constant 0 : index
    %543 = vector.load %arg8[%c3_241, %c0_242, %c0_243] : memref<4x1x96xf32, #tpu.memory_space<vmem>>, vector<1x1x96xf32>
    %544 = vector.shape_cast %543 : vector<1x1x96xf32> to vector<1x96xf32>
    %545 = vector.broadcast %544 : vector<1x96xf32> to vector<8x96xf32>
    %546 = arith.addf %542, %545 : vector<8x96xf32>
    %547 = vector.extract_strided_slice %546 {offsets = [0, 0], sizes = [8, 32], strides = [1, 1]} : vector<8x96xf32> to vector<8x32xf32>
    %548 = vector.extract_strided_slice %546 {offsets = [0, 32], sizes = [8, 32], strides = [1, 1]} : vector<8x96xf32> to vector<8x32xf32>
    %549 = arith.truncf %548 : vector<8x32xf32> to vector<8x32xbf16>
    %550 = vector.extract_strided_slice %546 {offsets = [0, 64], sizes = [8, 32], strides = [1, 1]} : vector<8x96xf32> to vector<8x32xf32>
    %551 = arith.truncf %550 : vector<8x32xf32> to vector<8x32xbf16>
    %552 = tpu.concatenate %547, %547, %547, %547 in 0 : vector<8x32xf32>, vector<8x32xf32>, vector<8x32xf32>, vector<8x32xf32> -> vector<32x32xf32>
    %553 = arith.mulf %552, %7 : vector<32x32xf32>
    %554 = arith.truncf %553 : vector<32x32xf32> to vector<32x32xbf16>
    %cst_244 = arith.constant dense<0.000000e+00> : vector<32x8xf32>
    %555 = tpu.matmul %554, %549, %cst_244 {dimension_numbers = #tpu.dot_dimension_numbers<[1], [1], [0], [0], [0, 0, 1, 0], [], []>} : vector<32x32xbf16>, vector<8x32xbf16>, vector<32x8xf32> -> vector<32x8xf32>
    %cst_245 = arith.constant 0.353553385 : f32
    %556 = vector.broadcast %cst_245 : f32 to vector<32x8xf32>
    %557 = arith.mulf %555, %556 : vector<32x8xf32>
    %558 = vector.broadcast %13 : vector<1x8xf32> to vector<32x8xf32>
    %559 = arith.addf %557, %558 : vector<32x8xf32>
    %cst_246 = arith.constant dense<0xFF800000> : vector<32xf32>
    %560 = vector.multi_reduction <maximumf>, %559, %cst_246 [1] : vector<32x8xf32> to vector<32xf32>
    %561 = vector.shape_cast %560 : vector<32xf32> to vector<32x1xf32>
    %562 = vector.broadcast %561 : vector<32x1xf32> to vector<32x8xf32>
    %563 = arith.subf %559, %562 : vector<32x8xf32>
    %564 = math.exp %563 : vector<32x8xf32>
    %cst_247 = arith.constant dense<0.000000e+00> : vector<32xf32>
    %565 = vector.multi_reduction <add>, %564, %cst_247 [1] : vector<32x8xf32> to vector<32xf32>
    %566 = vector.shape_cast %565 : vector<32xf32> to vector<32x1xf32>
    %567 = vector.broadcast %566 : vector<32x1xf32> to vector<32x8xf32>
    %568 = arith.divf %564, %567 : vector<32x8xf32>
    %569 = arith.truncf %568 : vector<32x8xf32> to vector<32x8xbf16>
    %cst_248 = arith.constant dense<0.000000e+00> : vector<32x32xf32>
    %570 = tpu.matmul %569, %551, %cst_248 {dimension_numbers = #tpu.dot_dimension_numbers<[1], [0], [0], [1], [0, 0, 1, 1], [], []>} : vector<32x8xbf16>, vector<8x32xbf16>, vector<32x32xf32> -> vector<32x32xf32>
    %571 = arith.mulf %570, %7 : vector<32x32xf32>
    %572 = vector.extract_strided_slice %571 {offsets = [0, 0], sizes = [8, 32], strides = [1, 1]} : vector<32x32xf32> to vector<8x32xf32>
    %573 = vector.extract_strided_slice %571 {offsets = [8, 0], sizes = [8, 32], strides = [1, 1]} : vector<32x32xf32> to vector<8x32xf32>
    %574 = arith.addf %572, %573 : vector<8x32xf32>
    %575 = vector.extract_strided_slice %571 {offsets = [16, 0], sizes = [8, 32], strides = [1, 1]} : vector<32x32xf32> to vector<8x32xf32>
    %576 = arith.addf %574, %575 : vector<8x32xf32>
    %577 = vector.extract_strided_slice %571 {offsets = [24, 0], sizes = [8, 32], strides = [1, 1]} : vector<32x32xf32> to vector<8x32xf32>
    %578 = arith.addf %576, %577 : vector<8x32xf32>
    %579 = arith.truncf %578 : vector<8x32xf32> to vector<8x32xbf16>
    %c3_249 = arith.constant 3 : index
    %c0_250 = arith.constant 0 : index
    %c0_251 = arith.constant 0 : index
    %580 = vector.load %arg9[%c3_249, %c0_250, %c0_251] : memref<4x32x32xbf16, #tpu.memory_space<vmem>>, vector<1x32x32xbf16>
    %581 = vector.shape_cast %580 : vector<1x32x32xbf16> to vector<32x32xbf16>
    %cst_252 = arith.constant dense<0.000000e+00> : vector<8x32xf32>
    %582 = tpu.matmul %579, %581, %cst_252 {dimension_numbers = #tpu.dot_dimension_numbers<[1], [0], [0], [1], [0, 0, 1, 1], [], []>} : vector<8x32xbf16>, vector<32x32xbf16>, vector<8x32xf32> -> vector<8x32xf32>
    %583 = arith.addf %487, %582 : vector<8x32xf32>
    %c3_253 = arith.constant 3 : index
    %c0_254 = arith.constant 0 : index
    %c0_255 = arith.constant 0 : index
    %584 = vector.load %arg10[%c3_253, %c0_254, %c0_255] : memref<4x1x32xf32, #tpu.memory_space<vmem>>, vector<1x1x32xf32>
    %585 = vector.shape_cast %584 : vector<1x1x32xf32> to vector<1x32xf32>
    %586 = vector.broadcast %585 : vector<1x32xf32> to vector<8x32xf32>
    %587 = arith.addf %583, %586 : vector<8x32xf32>
    %c3_256 = arith.constant 3 : index
    %c0_257 = arith.constant 0 : index
    %c0_258 = arith.constant 0 : index
    %588 = vector.load %arg11[%c3_256, %c0_257, %c0_258] : memref<4x1x32xf32, #tpu.memory_space<vmem>>, vector<1x1x32xf32>
    %589 = vector.shape_cast %588 : vector<1x1x32xf32> to vector<1x32xf32>
    %c3_259 = arith.constant 3 : index
    %c0_260 = arith.constant 0 : index
    %c0_261 = arith.constant 0 : index
    %590 = vector.load %arg12[%c3_259, %c0_260, %c0_261] : memref<4x1x32xf32, #tpu.memory_space<vmem>>, vector<1x1x32xf32>
    %591 = vector.shape_cast %590 : vector<1x1x32xf32> to vector<1x32xf32>
    %cst_262 = arith.constant dense<0.000000e+00> : vector<8xf32>
    %592 = vector.multi_reduction <add>, %587, %cst_262 [1] : vector<8x32xf32> to vector<8xf32>
    %593 = vector.shape_cast %592 : vector<8xf32> to vector<8x1xf32>
    %cst_263 = arith.constant 3.200000e+01 : f32
    %594 = vector.broadcast %cst_263 : f32 to vector<8x1xf32>
    %595 = arith.divf %593, %594 : vector<8x1xf32>
    %596 = vector.broadcast %595 : vector<8x1xf32> to vector<8x32xf32>
    %597 = arith.subf %587, %596 : vector<8x32xf32>
    %598 = arith.mulf %597, %597 : vector<8x32xf32>
    %cst_264 = arith.constant dense<0.000000e+00> : vector<8xf32>
    %599 = vector.multi_reduction <add>, %598, %cst_264 [1] : vector<8x32xf32> to vector<8xf32>
    %600 = vector.shape_cast %599 : vector<8xf32> to vector<8x1xf32>
    %cst_265 = arith.constant 3.200000e+01 : f32
    %601 = vector.broadcast %cst_265 : f32 to vector<8x1xf32>
    %602 = arith.divf %600, %601 : vector<8x1xf32>
    %603 = vector.broadcast %595 : vector<8x1xf32> to vector<8x32xf32>
    %604 = arith.subf %587, %603 : vector<8x32xf32>
    %cst_266 = arith.constant 9.99999997E-7 : f32
    %605 = vector.broadcast %cst_266 : f32 to vector<8x1xf32>
    %606 = arith.addf %602, %605 : vector<8x1xf32>
    %607 = math.rsqrt %606 : vector<8x1xf32>
    %608 = vector.broadcast %607 : vector<8x1xf32> to vector<8x32xf32>
    %609 = arith.mulf %604, %608 : vector<8x32xf32>
    %610 = vector.broadcast %589 : vector<1x32xf32> to vector<8x32xf32>
    %611 = arith.mulf %609, %610 : vector<8x32xf32>
    %612 = vector.broadcast %591 : vector<1x32xf32> to vector<8x32xf32>
    %613 = arith.addf %611, %612 : vector<8x32xf32>
    %614 = arith.truncf %613 : vector<8x32xf32> to vector<8x32xbf16>
    %c3_267 = arith.constant 3 : index
    %c0_268 = arith.constant 0 : index
    %c0_269 = arith.constant 0 : index
    %615 = vector.load %arg13[%c3_267, %c0_268, %c0_269] : memref<4x32x128xbf16, #tpu.memory_space<vmem>>, vector<1x32x128xbf16>
    %616 = vector.shape_cast %615 : vector<1x32x128xbf16> to vector<32x128xbf16>
    %cst_270 = arith.constant dense<0.000000e+00> : vector<8x128xf32>
    %617 = tpu.matmul %614, %616, %cst_270 {dimension_numbers = #tpu.dot_dimension_numbers<[1], [0], [0], [1], [0, 0, 1, 1], [], []>} : vector<8x32xbf16>, vector<32x128xbf16>, vector<8x128xf32> -> vector<8x128xf32>
    %c3_271 = arith.constant 3 : index
    %c0_272 = arith.constant 0 : index
    %c0_273 = arith.constant 0 : index
    %618 = vector.load %arg14[%c3_271, %c0_272, %c0_273] : memref<4x1x128xf32, #tpu.memory_space<vmem>>, vector<1x1x128xf32>
    %619 = vector.shape_cast %618 : vector<1x1x128xf32> to vector<1x128xf32>
    %620 = vector.broadcast %619 : vector<1x128xf32> to vector<8x128xf32>
    %621 = arith.addf %617, %620 : vector<8x128xf32>
    %cst_274 = arith.constant 5.000000e-01 : f32
    %622 = vector.broadcast %cst_274 : f32 to vector<8x128xf32>
    %623 = arith.mulf %622, %621 : vector<8x128xf32>
    %cst_275 = arith.constant 0.707106769 : f32
    %624 = vector.broadcast %cst_275 : f32 to vector<8x128xf32>
    %625 = arith.mulf %621, %624 : vector<8x128xf32>
    %626 = math.absf %625 : vector<8x128xf32>
    %cst_276 = arith.constant 0.327591091 : f32
    %627 = vector.broadcast %cst_276 : f32 to vector<8x128xf32>
    %628 = arith.mulf %627, %626 : vector<8x128xf32>
    %cst_277 = arith.constant 1.000000e+00 : f32
    %629 = vector.broadcast %cst_277 : f32 to vector<8x128xf32>
    %630 = arith.addf %629, %628 : vector<8x128xf32>
    %cst_278 = arith.constant 1.000000e+00 : f32
    %631 = vector.broadcast %cst_278 : f32 to vector<8x128xf32>
    %632 = arith.divf %631, %630 : vector<8x128xf32>
    %cst_279 = arith.constant 1.06140542 : f32
    %633 = vector.broadcast %cst_279 : f32 to vector<8x128xf32>
    %634 = arith.mulf %633, %632 : vector<8x128xf32>
    %cst_280 = arith.constant -1.45315206 : f32
    %635 = vector.broadcast %cst_280 : f32 to vector<8x128xf32>
    %636 = arith.addf %634, %635 : vector<8x128xf32>
    %637 = arith.mulf %636, %632 : vector<8x128xf32>
    %cst_281 = arith.constant 1.42141378 : f32
    %638 = vector.broadcast %cst_281 : f32 to vector<8x128xf32>
    %639 = arith.addf %637, %638 : vector<8x128xf32>
    %640 = arith.mulf %639, %632 : vector<8x128xf32>
    %cst_282 = arith.constant -0.284496725 : f32
    %641 = vector.broadcast %cst_282 : f32 to vector<8x128xf32>
    %642 = arith.addf %640, %641 : vector<8x128xf32>
    %643 = arith.mulf %642, %632 : vector<8x128xf32>
    %cst_283 = arith.constant 0.254829586 : f32
    %644 = vector.broadcast %cst_283 : f32 to vector<8x128xf32>
    %645 = arith.addf %643, %644 : vector<8x128xf32>
    %646 = arith.mulf %645, %632 : vector<8x128xf32>
    %cst_284 = arith.constant 0.000000e+00 : f32
    %647 = vector.broadcast %cst_284 : f32 to vector<8x128xf32>
    %648 = arith.subf %647, %626 : vector<8x128xf32>
    %649 = arith.mulf %648, %626 : vector<8x128xf32>
    %650 = math.exp %649 : vector<8x128xf32>
    %651 = arith.mulf %646, %650 : vector<8x128xf32>
    %cst_285 = arith.constant 1.000000e+00 : f32
    %652 = vector.broadcast %cst_285 : f32 to vector<8x128xf32>
    %653 = arith.subf %652, %651 : vector<8x128xf32>
    %cst_286 = arith.constant 0.000000e+00 : f32
    %654 = vector.broadcast %cst_286 : f32 to vector<8x128xf32>
    %655 = arith.cmpf oge, %625, %654 : vector<8x128xf32>
    %cst_287 = arith.constant 0.000000e+00 : f32
    %656 = vector.broadcast %cst_287 : f32 to vector<8x128xf32>
    %657 = arith.subf %656, %653 : vector<8x128xf32>
    %658 = arith.select %655, %653, %657 : vector<8x128xi1>, vector<8x128xf32>
    %cst_288 = arith.constant 1.000000e+00 : f32
    %659 = vector.broadcast %cst_288 : f32 to vector<8x128xf32>
    %660 = arith.addf %659, %658 : vector<8x128xf32>
    %661 = arith.mulf %623, %660 : vector<8x128xf32>
    %662 = arith.truncf %661 : vector<8x128xf32> to vector<8x128xbf16>
    %c3_289 = arith.constant 3 : index
    %c0_290 = arith.constant 0 : index
    %c0_291 = arith.constant 0 : index
    %663 = vector.load %arg15[%c3_289, %c0_290, %c0_291] : memref<4x128x32xbf16, #tpu.memory_space<vmem>>, vector<1x128x32xbf16>
    %664 = vector.shape_cast %663 : vector<1x128x32xbf16> to vector<128x32xbf16>
    %cst_292 = arith.constant dense<0.000000e+00> : vector<8x32xf32>
    %665 = tpu.matmul %662, %664, %cst_292 {dimension_numbers = #tpu.dot_dimension_numbers<[1], [0], [0], [1], [0, 0, 1, 1], [], []>} : vector<8x128xbf16>, vector<128x32xbf16>, vector<8x32xf32> -> vector<8x32xf32>
    %666 = arith.addf %587, %665 : vector<8x32xf32>
    %c3_293 = arith.constant 3 : index
    %c0_294 = arith.constant 0 : index
    %c0_295 = arith.constant 0 : index
    %667 = vector.load %arg16[%c3_293, %c0_294, %c0_295] : memref<4x1x32xf32, #tpu.memory_space<vmem>>, vector<1x1x32xf32>
    %668 = vector.shape_cast %667 : vector<1x1x32xf32> to vector<1x32xf32>
    %669 = vector.broadcast %668 : vector<1x32xf32> to vector<8x32xf32>
    %670 = arith.addf %666, %669 : vector<8x32xf32>
    %c0_296 = arith.constant 0 : index
    %c0_297 = arith.constant 0 : index
    %671 = vector.load %arg17[%c0_296, %c0_297] : memref<1x32xf32, #tpu.memory_space<vmem>>, vector<1x32xf32>
    %c0_298 = arith.constant 0 : index
    %c0_299 = arith.constant 0 : index
    %672 = vector.load %arg18[%c0_298, %c0_299] : memref<1x32xf32, #tpu.memory_space<vmem>>, vector<1x32xf32>
    %cst_300 = arith.constant dense<0.000000e+00> : vector<8xf32>
    %673 = vector.multi_reduction <add>, %670, %cst_300 [1] : vector<8x32xf32> to vector<8xf32>
    %674 = vector.shape_cast %673 : vector<8xf32> to vector<8x1xf32>
    %cst_301 = arith.constant 3.200000e+01 : f32
    %675 = vector.broadcast %cst_301 : f32 to vector<8x1xf32>
    %676 = arith.divf %674, %675 : vector<8x1xf32>
    %677 = vector.broadcast %676 : vector<8x1xf32> to vector<8x32xf32>
    %678 = arith.subf %670, %677 : vector<8x32xf32>
    %679 = arith.mulf %678, %678 : vector<8x32xf32>
    %cst_302 = arith.constant dense<0.000000e+00> : vector<8xf32>
    %680 = vector.multi_reduction <add>, %679, %cst_302 [1] : vector<8x32xf32> to vector<8xf32>
    %681 = vector.shape_cast %680 : vector<8xf32> to vector<8x1xf32>
    %cst_303 = arith.constant 3.200000e+01 : f32
    %682 = vector.broadcast %cst_303 : f32 to vector<8x1xf32>
    %683 = arith.divf %681, %682 : vector<8x1xf32>
    %684 = vector.broadcast %676 : vector<8x1xf32> to vector<8x32xf32>
    %685 = arith.subf %670, %684 : vector<8x32xf32>
    %cst_304 = arith.constant 9.99999997E-7 : f32
    %686 = vector.broadcast %cst_304 : f32 to vector<8x1xf32>
    %687 = arith.addf %683, %686 : vector<8x1xf32>
    %688 = math.rsqrt %687 : vector<8x1xf32>
    %689 = vector.broadcast %688 : vector<8x1xf32> to vector<8x32xf32>
    %690 = arith.mulf %685, %689 : vector<8x32xf32>
    %691 = vector.broadcast %671 : vector<1x32xf32> to vector<8x32xf32>
    %692 = arith.mulf %690, %691 : vector<8x32xf32>
    %693 = vector.broadcast %672 : vector<1x32xf32> to vector<8x32xf32>
    %694 = arith.addf %692, %693 : vector<8x32xf32>
    %695 = vector.extract_strided_slice %694 {offsets = [1, 0], sizes = [4, 32], strides = [1, 1]} : vector<8x32xf32> to vector<4x32xf32>
    %696 = tpu.concatenate %512, %695 in 1 : vector<4x32xf32>, vector<4x32xf32> -> vector<4x64xf32>
    %c0_305 = arith.constant 0 : index
    %c0_306 = arith.constant 0 : index
    %697 = vector.load %arg19[%c0_305, %c0_306] : memref<16x4xf32, #tpu.memory_space<vmem>>, vector<16x4xf32>
    %cst_307 = arith.constant dense<0.000000e+00> : vector<16x64xf32>
    %698 = tpu.matmul %697, %696, %cst_307 {dimension_numbers = #tpu.dot_dimension_numbers<[1], [0], [0], [1], [0, 0, 1, 1], [], []>} : vector<16x4xf32>, vector<4x64xf32>, vector<16x64xf32> -> vector<16x64xf32>
    %c0_308 = arith.constant 0 : index
    %c0_309 = arith.constant 0 : index
    %c0_310 = arith.constant 0 : index
    %699 = vector.load %arg25[%c0_308, %c0_309, %c0_310] : memref<1x16x64xf32, #tpu.memory_space<vmem>>, vector<1x16x64xf32>
    %700 = vector.shape_cast %699 : vector<1x16x64xf32> to vector<16x64xf32>
    %701 = vector.shape_cast %698 : vector<16x64xf32> to vector<1x16x64xf32>
    tpu.vector_store %arg25[%c0_308, %c0_309, %c0_310], %701 {strides = array<i32>} : memref<1x16x64xf32, #tpu.memory_space<vmem>>, vector<1x16x64xf32>,
    %702 = arith.truncf %698 : vector<16x64xf32> to vector<16x64xbf16>
    %c0_311 = arith.constant 0 : index
    %c0_312 = arith.constant 0 : index
    %703 = vector.load %arg20[%c0_311, %c0_312] : memref<64x128xbf16, #tpu.memory_space<vmem>>, vector<64x128xbf16>
    %cst_313 = arith.constant dense<0.000000e+00> : vector<16x128xf32>
    %704 = tpu.matmul %702, %703, %cst_313 {dimension_numbers = #tpu.dot_dimension_numbers<[1], [0], [0], [1], [0, 0, 1, 1], [], []>} : vector<16x64xbf16>, vector<64x128xbf16>, vector<16x128xf32> -> vector<16x128xf32>
    %c0_314 = arith.constant 0 : index
    %c0_315 = arith.constant 0 : index
    %705 = vector.load %arg21[%c0_314, %c0_315] : memref<1x128xf32, #tpu.memory_space<vmem>>, vector<1x128xf32>
    %706 = vector.broadcast %705 : vector<1x128xf32> to vector<16x128xf32>
    %707 = arith.addf %704, %706 : vector<16x128xf32>
    %cst_316 = arith.constant 5.000000e-01 : f32
    %708 = vector.broadcast %cst_316 : f32 to vector<16x128xf32>
    %709 = arith.mulf %708, %707 : vector<16x128xf32>
    %cst_317 = arith.constant 0.707106769 : f32
    %710 = vector.broadcast %cst_317 : f32 to vector<16x128xf32>
    %711 = arith.mulf %707, %710 : vector<16x128xf32>
    %712 = math.absf %711 : vector<16x128xf32>
    %cst_318 = arith.constant 0.327591091 : f32
    %713 = vector.broadcast %cst_318 : f32 to vector<16x128xf32>
    %714 = arith.mulf %713, %712 : vector<16x128xf32>
    %cst_319 = arith.constant 1.000000e+00 : f32
    %715 = vector.broadcast %cst_319 : f32 to vector<16x128xf32>
    %716 = arith.addf %715, %714 : vector<16x128xf32>
    %cst_320 = arith.constant 1.000000e+00 : f32
    %717 = vector.broadcast %cst_320 : f32 to vector<16x128xf32>
    %718 = arith.divf %717, %716 : vector<16x128xf32>
    %cst_321 = arith.constant 1.06140542 : f32
    %719 = vector.broadcast %cst_321 : f32 to vector<16x128xf32>
    %720 = arith.mulf %719, %718 : vector<16x128xf32>
    %cst_322 = arith.constant -1.45315206 : f32
    %721 = vector.broadcast %cst_322 : f32 to vector<16x128xf32>
    %722 = arith.addf %720, %721 : vector<16x128xf32>
    %723 = arith.mulf %722, %718 : vector<16x128xf32>
    %cst_323 = arith.constant 1.42141378 : f32
    %724 = vector.broadcast %cst_323 : f32 to vector<16x128xf32>
    %725 = arith.addf %723, %724 : vector<16x128xf32>
    %726 = arith.mulf %725, %718 : vector<16x128xf32>
    %cst_324 = arith.constant -0.284496725 : f32
    %727 = vector.broadcast %cst_324 : f32 to vector<16x128xf32>
    %728 = arith.addf %726, %727 : vector<16x128xf32>
    %729 = arith.mulf %728, %718 : vector<16x128xf32>
    %cst_325 = arith.constant 0.254829586 : f32
    %730 = vector.broadcast %cst_325 : f32 to vector<16x128xf32>
    %731 = arith.addf %729, %730 : vector<16x128xf32>
    %732 = arith.mulf %731, %718 : vector<16x128xf32>
    %cst_326 = arith.constant 0.000000e+00 : f32
    %733 = vector.broadcast %cst_326 : f32 to vector<16x128xf32>
    %734 = arith.subf %733, %712 : vector<16x128xf32>
    %735 = arith.mulf %734, %712 : vector<16x128xf32>
    %736 = math.exp %735 : vector<16x128xf32>
    %737 = arith.mulf %732, %736 : vector<16x128xf32>
    %cst_327 = arith.constant 1.000000e+00 : f32
    %738 = vector.broadcast %cst_327 : f32 to vector<16x128xf32>
    %739 = arith.subf %738, %737 : vector<16x128xf32>
    %cst_328 = arith.constant 0.000000e+00 : f32
    %740 = vector.broadcast %cst_328 : f32 to vector<16x128xf32>
    %741 = arith.cmpf oge, %711, %740 : vector<16x128xf32>
    %cst_329 = arith.constant 0.000000e+00 : f32
    %742 = vector.broadcast %cst_329 : f32 to vector<16x128xf32>
    %743 = arith.subf %742, %739 : vector<16x128xf32>
    %744 = arith.select %741, %739, %743 : vector<16x128xi1>, vector<16x128xf32>
    %cst_330 = arith.constant 1.000000e+00 : f32
    %745 = vector.broadcast %cst_330 : f32 to vector<16x128xf32>
    %746 = arith.addf %745, %744 : vector<16x128xf32>
    %747 = arith.mulf %709, %746 : vector<16x128xf32>
    %748 = arith.truncf %747 : vector<16x128xf32> to vector<16x128xbf16>
    %c0_331 = arith.constant 0 : index
    %c0_332 = arith.constant 0 : index
    %749 = vector.load %arg22[%c0_331, %c0_332] : memref<128x128xbf16, #tpu.memory_space<vmem>>, vector<128x128xbf16>
    %cst_333 = arith.constant dense<0.000000e+00> : vector<16x128xf32>
    %750 = tpu.matmul %748, %749, %cst_333 {dimension_numbers = #tpu.dot_dimension_numbers<[1], [0], [0], [1], [0, 0, 1, 1], [], []>} : vector<16x128xbf16>, vector<128x128xbf16>, vector<16x128xf32> -> vector<16x128xf32>
    %c0_334 = arith.constant 0 : index
    %c0_335 = arith.constant 0 : index
    %751 = vector.load %arg23[%c0_334, %c0_335] : memref<1x128xf32, #tpu.memory_space<vmem>>, vector<1x128xf32>
    %752 = vector.broadcast %751 : vector<1x128xf32> to vector<16x128xf32>
    %753 = arith.addf %750, %752 : vector<16x128xf32>
    %c0_336 = arith.constant 0 : index
    %c0_337 = arith.constant 0 : index
    %c0_338 = arith.constant 0 : index
    %754 = vector.load %arg26[%c0_336, %c0_337, %c0_338] : memref<1x16x128xf32, #tpu.memory_space<vmem>>, vector<1x16x128xf32>
    %755 = vector.shape_cast %754 : vector<1x16x128xf32> to vector<16x128xf32>
    %756 = vector.shape_cast %753 : vector<16x128xf32> to vector<1x16x128xf32>
    tpu.vector_store %arg26[%c0_336, %c0_337, %c0_338], %756 {strides = array<i32>} : memref<1x16x128xf32, #tpu.memory_space<vmem>>, vector<1x16x128xf32>,
    %c0_339 = arith.constant 0 : index
    %c0_340 = arith.constant 0 : index
    %757 = vector.load %arg24[%c0_339, %c0_340] : memref<784x16xf32, #tpu.memory_space<vmem>>, vector<784x16xf32>
    %cst_341 = arith.constant dense<0.000000e+00> : vector<784x128xf32>
    %758 = tpu.matmul %757, %753, %cst_341 {dimension_numbers = #tpu.dot_dimension_numbers<[1], [0], [0], [1], [0, 0, 1, 1], [], []>} : vector<784x16xf32>, vector<16x128xf32>, vector<784x128xf32> -> vector<784x128xf32>
    %c0_342 = arith.constant 0 : index
    %c0_343 = arith.constant 0 : index
    %c0_344 = arith.constant 0 : index
    %759 = vector.load %arg27[%c0_342, %c0_343, %c0_344] : memref<1x784x128xf32, #tpu.memory_space<vmem>>, vector<1x784x128xf32>
    %760 = vector.shape_cast %759 : vector<1x784x128xf32> to vector<784x128xf32>
    %761 = vector.shape_cast %758 : vector<784x128xf32> to vector<1x784x128xf32>
    tpu.vector_store %arg27[%c0_342, %c0_343, %c0_344], %761 {strides = array<i32>} : memref<1x784x128xf32, #tpu.memory_space<vmem>>, vector<1x784x128xf32>,
    return
  }
  func.func @transform_0(%arg0: i32) -> (i32, i32, i32) {
    %c0_i32 = arith.constant 0 : i32
    %c0_i32_0 = arith.constant 0 : i32
    %c0_i32_1 = arith.constant 0 : i32
    return %arg0, %c0_i32, %c0_i32_0 : i32, i32, i32
  }
  func.func @transform_1(%arg0: i32) -> (i32, i32) {
    %c0_i32 = arith.constant 0 : i32
    %c0_i32_0 = arith.constant 0 : i32
    %c0_i32_1 = arith.constant 0 : i32
    return %c0_i32, %c0_i32_0 : i32, i32
  }
  func.func @transform_2(%arg0: i32) -> (i32, i32) {
    %c0_i32 = arith.constant 0 : i32
    %c0_i32_0 = arith.constant 0 : i32
    %c0_i32_1 = arith.constant 0 : i32
    return %c0_i32, %c0_i32_0 : i32, i32
  }
  func.func @transform_3(%arg0: i32) -> (i32, i32) {
    %c0_i32 = arith.constant 0 : i32
    %c0_i32_0 = arith.constant 0 : i32
    %c0_i32_1 = arith.constant 0 : i32
    return %c0_i32, %c0_i32_0 : i32, i32
  }
  func.func @transform_4(%arg0: i32) -> (i32, i32, i32) {
    %c0_i32 = arith.constant 0 : i32
    %c0_i32_0 = arith.constant 0 : i32
    %c0_i32_1 = arith.constant 0 : i32
    %c0_i32_2 = arith.constant 0 : i32
    return %c0_i32, %c0_i32_0, %c0_i32_1 : i32, i32, i32
  }
  func.func @transform_5(%arg0: i32) -> (i32, i32, i32) {
    %c0_i32 = arith.constant 0 : i32
    %c0_i32_0 = arith.constant 0 : i32
    %c0_i32_1 = arith.constant 0 : i32
    %c0_i32_2 = arith.constant 0 : i32
    return %c0_i32, %c0_i32_0, %c0_i32_1 : i32, i32, i32
  }
  func.func @transform_6(%arg0: i32) -> (i32, i32, i32) {
    %c0_i32 = arith.constant 0 : i32
    %c0_i32_0 = arith.constant 0 : i32
    %c0_i32_1 = arith.constant 0 : i32
    %c0_i32_2 = arith.constant 0 : i32
    return %c0_i32, %c0_i32_0, %c0_i32_1 : i32, i32, i32
  }
  func.func @transform_7(%arg0: i32) -> (i32, i32, i32) {
    %c0_i32 = arith.constant 0 : i32
    %c0_i32_0 = arith.constant 0 : i32
    %c0_i32_1 = arith.constant 0 : i32
    %c0_i32_2 = arith.constant 0 : i32
    return %c0_i32, %c0_i32_0, %c0_i32_1 : i32, i32, i32
  }
  func.func @transform_8(%arg0: i32) -> (i32, i32, i32) {
    %c0_i32 = arith.constant 0 : i32
    %c0_i32_0 = arith.constant 0 : i32
    %c0_i32_1 = arith.constant 0 : i32
    %c0_i32_2 = arith.constant 0 : i32
    return %c0_i32, %c0_i32_0, %c0_i32_1 : i32, i32, i32
  }
  func.func @transform_9(%arg0: i32) -> (i32, i32, i32) {
    %c0_i32 = arith.constant 0 : i32
    %c0_i32_0 = arith.constant 0 : i32
    %c0_i32_1 = arith.constant 0 : i32
    %c0_i32_2 = arith.constant 0 : i32
    return %c0_i32, %c0_i32_0, %c0_i32_1 : i32, i32, i32
  }
  func.func @transform_10(%arg0: i32) -> (i32, i32, i32) {
    %c0_i32 = arith.constant 0 : i32
    %c0_i32_0 = arith.constant 0 : i32
    %c0_i32_1 = arith.constant 0 : i32
    %c0_i32_2 = arith.constant 0 : i32
    return %c0_i32, %c0_i32_0, %c0_i32_1 : i32, i32, i32
  }
  func.func @transform_11(%arg0: i32) -> (i32, i32, i32) {
    %c0_i32 = arith.constant 0 : i32
    %c0_i32_0 = arith.constant 0 : i32
    %c0_i32_1 = arith.constant 0 : i32
    %c0_i32_2 = arith.constant 0 : i32
    return %c0_i32, %c0_i32_0, %c0_i32_1 : i32, i32, i32
  }
  func.func @transform_12(%arg0: i32) -> (i32, i32, i32) {
    %c0_i32 = arith.constant 0 : i32
    %c0_i32_0 = arith.constant 0 : i32
    %c0_i32_1 = arith.constant 0 : i32
    %c0_i32_2 = arith.constant 0 : i32
    return %c0_i32, %c0_i32_0, %c0_i32_1 : i32, i32, i32
  }
  func.func @transform_13(%arg0: i32) -> (i32, i32, i32) {
    %c0_i32 = arith.constant 0 : i32
    %c0_i32_0 = arith.constant 0 : i32
    %c0_i32_1 = arith.constant 0 : i32
    %c0_i32_2 = arith.constant 0 : i32
    return %c0_i32, %c0_i32_0, %c0_i32_1 : i32, i32, i32
  }
  func.func @transform_14(%arg0: i32) -> (i32, i32, i32) {
    %c0_i32 = arith.constant 0 : i32
    %c0_i32_0 = arith.constant 0 : i32
    %c0_i32_1 = arith.constant 0 : i32
    %c0_i32_2 = arith.constant 0 : i32
    return %c0_i32, %c0_i32_0, %c0_i32_1 : i32, i32, i32
  }
  func.func @transform_15(%arg0: i32) -> (i32, i32, i32) {
    %c0_i32 = arith.constant 0 : i32
    %c0_i32_0 = arith.constant 0 : i32
    %c0_i32_1 = arith.constant 0 : i32
    %c0_i32_2 = arith.constant 0 : i32
    return %c0_i32, %c0_i32_0, %c0_i32_1 : i32, i32, i32
  }
  func.func @transform_16(%arg0: i32) -> (i32, i32) {
    %c0_i32 = arith.constant 0 : i32
    %c0_i32_0 = arith.constant 0 : i32
    %c0_i32_1 = arith.constant 0 : i32
    return %c0_i32, %c0_i32_0 : i32, i32
  }
  func.func @transform_17(%arg0: i32) -> (i32, i32) {
    %c0_i32 = arith.constant 0 : i32
    %c0_i32_0 = arith.constant 0 : i32
    %c0_i32_1 = arith.constant 0 : i32
    return %c0_i32, %c0_i32_0 : i32, i32
  }
  func.func @transform_18(%arg0: i32) -> (i32, i32) {
    %c0_i32 = arith.constant 0 : i32
    %c0_i32_0 = arith.constant 0 : i32
    %c0_i32_1 = arith.constant 0 : i32
    return %c0_i32, %c0_i32_0 : i32, i32
  }
  func.func @transform_19(%arg0: i32) -> (i32, i32) {
    %c0_i32 = arith.constant 0 : i32
    %c0_i32_0 = arith.constant 0 : i32
    %c0_i32_1 = arith.constant 0 : i32
    return %c0_i32, %c0_i32_0 : i32, i32
  }
  func.func @transform_20(%arg0: i32) -> (i32, i32) {
    %c0_i32 = arith.constant 0 : i32
    %c0_i32_0 = arith.constant 0 : i32
    %c0_i32_1 = arith.constant 0 : i32
    return %c0_i32, %c0_i32_0 : i32, i32
  }
  func.func @transform_21(%arg0: i32) -> (i32, i32) {
    %c0_i32 = arith.constant 0 : i32
    %c0_i32_0 = arith.constant 0 : i32
    %c0_i32_1 = arith.constant 0 : i32
    return %c0_i32, %c0_i32_0 : i32, i32
  }
  func.func @transform_22(%arg0: i32) -> (i32, i32) {
    %c0_i32 = arith.constant 0 : i32
    %c0_i32_0 = arith.constant 0 : i32
    %c0_i32_1 = arith.constant 0 : i32
    return %c0_i32, %c0_i32_0 : i32, i32
  }
  func.func @transform_23(%arg0: i32) -> (i32, i32) {
    %c0_i32 = arith.constant 0 : i32
    %c0_i32_0 = arith.constant 0 : i32
    %c0_i32_1 = arith.constant 0 : i32
    return %c0_i32, %c0_i32_0 : i32, i32
  }
  func.func @transform_24(%arg0: i32) -> (i32, i32, i32) {
    %c0_i32 = arith.constant 0 : i32
    %c0_i32_0 = arith.constant 0 : i32
    %c0_i32_1 = arith.constant 0 : i32
    return %arg0, %c0_i32, %c0_i32_0 : i32, i32, i32
  }
  func.func @transform_25(%arg0: i32) -> (i32, i32, i32) {
    %c0_i32 = arith.constant 0 : i32
    %c0_i32_0 = arith.constant 0 : i32
    %c0_i32_1 = arith.constant 0 : i32
    return %arg0, %c0_i32, %c0_i32_0 : i32, i32, i32
  }
  func.func @transform_26(%arg0: i32) -> (i32, i32, i32) {
    %c0_i32 = arith.constant 0 : i32
    %c0_i32_0 = arith.constant 0 : i32
    %c0_i32_1 = arith.constant 0 : i32
    return %arg0, %c0_i32, %c0_i32_0 : i32, i32, i32
  }
}

</mosaic_0001>

<llo_original>
// kernel: forward.1
$region0: #{forward.1}
  #allocation0 [shape = 'u32[]', space=smem, size = 0x4, offset = 0x4, fixed_abs, tag = 'smem constant byte address 0x4 - core index']
  #allocation1 [shape = 'u32[72,128]{1,0:T(1,128)}', space=vmem, size = 0x9000, scoped, tag = 'internal scratch']
  %s0 = inlined_call_operand.vmem [shape: f32[2,8,640], index: 0, kind: input, shape index: {}]
  %s1 = inlined_call_operand.vmem [shape: bf16[640,32], index: 1, kind: input, shape index: {}]
  %s2 = inlined_call_operand.vmem [shape: f32[8,32], index: 2, kind: input, shape index: {}]
  %s3 = inlined_call_operand.vmem [shape: f32[32,32], index: 3, kind: input, shape index: {}]
  %s4 = inlined_call_operand.vmem [shape: f32[4,1,32], index: 4, kind: input, shape index: {}]
  %s5 = inlined_call_operand.vmem [shape: f32[4,1,32], index: 5, kind: input, shape index: {}]
  %s6 = inlined_call_operand.vmem [shape: bf16[4,32,96], index: 6, kind: input, shape index: {}]
  %s7 = inlined_call_operand.vmem [shape: f32[4,1,96], index: 7, kind: input, shape index: {}]
  %s8 = inlined_call_operand.vmem [shape: bf16[4,32,32], index: 8, kind: input, shape index: {}]
  %s9 = inlined_call_operand.vmem [shape: f32[4,1,32], index: 9, kind: input, shape index: {}]
  %s10 = inlined_call_operand.vmem [shape: f32[4,1,32], index: 10, kind: input, shape index: {}]
  %s11 = inlined_call_operand.vmem [shape: f32[4,1,32], index: 11, kind: input, shape index: {}]
  %s12 = inlined_call_operand.vmem [shape: bf16[4,32,128], index: 12, kind: input, shape index: {}]
  %s13 = inlined_call_operand.vmem [shape: f32[4,1,128], index: 13, kind: input, shape index: {}]
  %s14 = inlined_call_operand.vmem [shape: bf16[4,128,32], index: 14, kind: input, shape index: {}]
  %s15 = inlined_call_operand.vmem [shape: f32[4,1,32], index: 15, kind: input, shape index: {}]
  %s16 = inlined_call_operand.vmem [shape: f32[1,32], index: 16, kind: input, shape index: {}]
  %s17 = inlined_call_operand.vmem [shape: f32[1,32], index: 17, kind: input, shape index: {}]
  %s18 = inlined_call_operand.vmem [shape: f32[16,4], index: 18, kind: input, shape index: {}]
  %s19 = inlined_call_operand.vmem [shape: bf16[64,128], index: 19, kind: input, shape index: {}]
  %s20 = inlined_call_operand.vmem [shape: f32[1,128], index: 20, kind: input, shape index: {}]
  %s21 = inlined_call_operand.vmem [shape: bf16[128,128], index: 21, kind: input, shape index: {}]
  %s22 = inlined_call_operand.vmem [shape: f32[1,128], index: 22, kind: input, shape index: {}]
  %s23 = inlined_call_operand.vmem [shape: f32[784,16], index: 23, kind: input, shape index: {}]
  %s24 = inlined_call_operand.hbm [shape: f32[2,16,64], index: 24, kind: output, shape index: {0}]
  %s25 = inlined_call_operand.hbm [shape: f32[2,16,128], index: 25, kind: output, shape index: {1}]
  %s26 = inlined_call_operand.vmem [shape: f32[2,784,128], index: 26, kind: output, shape index: {2}]
  %27 = xla_tuple %s24, %s25, %s26
  %s28 = sld [smem:[#allocation0]]
  $region145: #{forward.1} parent=0
    _
  %s30 = ssub.s32 1, %s28
  %s31 = scalar_select 0, %s30, %s28
  $region1: #{forward.1} parent=0
    #allocation2 [shape = 'u8[16384]{0}', space=vmem, size = 0x4000, scoped, tag = 'output window, operand 0']
    #allocation3 [shape = 's32[2]{0}', space=sflag, size = 0x8, scoped, tag = 'scoped memory for forward.1']
    #allocation4 [shape = 'u8[16384]{0}', space=vmem, size = 0x4000, scoped, tag = 'output window, operand 1']
    #allocation5 [shape = 's32[2]{0}', space=sflag, size = 0x8, scoped, tag = 'scoped memory for forward.1']
    %32 = vsyncpa [#allocation3], 0
    %s33 = scalar_lea.sflag [#allocation3], 1
    %34 = vsyncpa %s33, 0
    %35 = vsyncpa [#allocation5], 0
    %s36 = scalar_lea.sflag [#allocation5], 1
    %37 = vsyncpa %s36, 0
    loop: start=0, step=1, limit=4
    $region2: #{forward.1} parent=1 // loop_pre_header
      _
    $region3: #{forward.1} parent=1 // loop_header
      %s39 = sphi 0, %s43
      %p40 = scmp.ge.s32.totalorder %s39, 4
      %s49 = sphi 0, %s51
      %s52 = sphi 0, %s49
      %s53 = sphi 0, %s52
      %s69 = sphi 0, %s53
      %s73 = sphi 0, %s73
      %s75 = sphi 0, %s73
      %s76 = sphi 0, %s75
      %s90 = sphi 0, %s76
      %s94 = sphi 0, %s94
      %s96 = sphi 0, %s94
      %s97 = sphi 0, %s96
      %s111 = sphi 0, %s97
      %s115 = sphi 0, %s115
      %s117 = sphi 0, %s115
      %s118 = sphi 0, %s117
      %s132 = sphi 0, %s118
      %s136 = sphi 0, %s136
      %s138 = sphi 0, %s136
      %s139 = sphi 0, %s138
      %s153 = sphi 0, %s139
      %s157 = sphi 0, %s157
      %s159 = sphi 0, %s157
      %s160 = sphi 0, %s159
      %s174 = sphi 0, %s160
      %s178 = sphi 0, %s178
      %s180 = sphi 0, %s178
      %s181 = sphi 0, %s180
      %s195 = sphi 0, %s181
      %s199 = sphi 0, %s199
      %s201 = sphi 0, %s199
      %s202 = sphi 0, %s201
      %s216 = sphi 0, %s202
      %s220 = sphi 0, %s220
      %s222 = sphi 0, %s220
      %s223 = sphi 0, %s222
      %s237 = sphi 0, %s223
      %s241 = sphi 0, %s241
      %s243 = sphi 0, %s241
      %s244 = sphi 0, %s243
      %s258 = sphi 0, %s244
      %s262 = sphi 0, %s262
      %s264 = sphi 0, %s262
      %s265 = sphi 0, %s264
      %s279 = sphi 0, %s265
      %s283 = sphi 0, %s283
      %s285 = sphi 0, %s283
      %s286 = sphi 0, %s285
      %s300 = sphi 0, %s286
      %s304 = sphi 0, %s304
      %s306 = sphi 0, %s304
      %s307 = sphi 0, %s306
      %s321 = sphi 0, %s307
      %s325 = sphi 0, %s325
      %s327 = sphi 0, %s325
      %s328 = sphi 0, %s327
      %s342 = sphi 0, %s328
      %s346 = sphi 0, %s346
      %s348 = sphi 0, %s346
      %s349 = sphi 0, %s348
      %s363 = sphi 0, %s349
      %s367 = sphi 0, %s367
      %s369 = sphi 0, %s367
      %s370 = sphi 0, %s369
      %s384 = sphi 0, %s370
      %s388 = sphi 0, %s388
      %s390 = sphi 0, %s388
      %s391 = sphi 0, %s390
      %s405 = sphi 0, %s391
      %s409 = sphi 0, %s409
      %s411 = sphi 0, %s409
      %s412 = sphi 0, %s411
      %s426 = sphi 0, %s412
      %s430 = sphi 0, %s430
      %s432 = sphi 0, %s430
      %s433 = sphi 0, %s432
      %s447 = sphi 0, %s433
      %s451 = sphi 0, %s451
      %s453 = sphi 0, %s451
      %s454 = sphi 0, %s453
      %s468 = sphi 0, %s454
      %s472 = sphi 0, %s472
      %s474 = sphi 0, %s472
      %s475 = sphi 0, %s474
      %s489 = sphi 0, %s475
      %s493 = sphi 0, %s493
      %s495 = sphi 0, %s493
      %s496 = sphi 0, %s495
      %s510 = sphi 0, %s496
      %s514 = sphi 0, %s514
      %s516 = sphi 0, %s514
      %s517 = sphi 0, %s516
      %s531 = sphi 0, %s517
      %s535 = sphi 0, %s535
      %s537 = sphi 0, %s535
      %s538 = sphi 0, %s537
      %s552 = sphi 0, %s538
      %s558 = sphi 0, %s560
      %s561 = sphi 0, %s558
      %s562 = sphi 0, %s561
      %s578 = sphi 0, %s562
      %s584 = sphi 0, %s586
      %s587 = sphi 0, %s584
      %s588 = sphi 0, %s587
      %s604 = sphi 0, %s588
      %s610 = sphi 0, %s612
      %s613 = sphi 0, %s610
      %s614 = sphi 0, %s613
      %s630 = sphi 0, %s614
    $region4: #{forward.1} parent=1 // loop_header_branch
      %42 = sbr.rel (%p40) target = $region8
    $region5: #{forward.1} parent=1 // loop_body
      %s44 = ssub.s32 %s39, 1
      %s45 = ssub.s32 %s39, 2
      %s46 = sadd.s32 %s39, 1
      %s47 = ssub.s32 %s39, %s46
      %p48 = scmp.eq.s32.totalorder %s47, 0
      %s50 = sadd.s32 %s49, 1
      %s51 = scalar_select %p48, %s49, %s50
      %p54 = pneg %p48
      %p55 = scmp.eq.s32.totalorder %s39, 1
      %p56 = por %p54, %p55
      %p57 = scmp.ne.s32.totalorder %s49, %s52
      %p58 = scmp.eq.s32.totalorder %s39, 0
      %p59 = por %p57, %p58
      %p60 = scmp.ne.s32.totalorder %s49, %s52
      %p61 = scmp.eq.s32.totalorder %s44, 1
      %p62 = por %p60, %p61
      %p63 = scmp.ne.s32.totalorder %s52, %s53
      %p64 = scmp.eq.s32.totalorder %s44, 0
      %p65 = por %p63, %p64
      %p66 = scmp.ne.s32.totalorder %s52, %s53
      %p67 = scmp.eq.s32.totalorder %s45, 1
      %p68 = por %p66, %p67
      %p70 = scmp.ne.s32.totalorder %s53, %s69
      %p71 = scmp.eq.s32.totalorder %s45, 0
      %p72 = por %p70, %p71
      %s74 = sadd.s32 %s73, 1
      %p77 = scmp.eq.s32.totalorder %s39, 1
      %p78 = scmp.ne.s32.totalorder %s73, %s75
      %p79 = scmp.eq.s32.totalorder %s39, 0
      %p80 = por %p78, %p79
      %p81 = scmp.ne.s32.totalorder %s73, %s75
      %p82 = scmp.eq.s32.totalorder %s44, 1
      %p83 = por %p81, %p82
      %p84 = scmp.ne.s32.totalorder %s75, %s76
      %p85 = scmp.eq.s32.totalorder %s44, 0
      %p86 = por %p84, %p85
      %p87 = scmp.ne.s32.totalorder %s75, %s76
      %p88 = scmp.eq.s32.totalorder %s45, 1
      %p89 = por %p87, %p88
      %p91 = scmp.ne.s32.totalorder %s76, %s90
      %p92 = scmp.eq.s32.totalorder %s45, 0
      %p93 = por %p91, %p92
      %s95 = sadd.s32 %s94, 1
      %p98 = scmp.eq.s32.totalorder %s39, 1
      %p99 = scmp.ne.s32.totalorder %s94, %s96
      %p100 = scmp.eq.s32.totalorder %s39, 0
      %p101 = por %p99, %p100
      %p102 = scmp.ne.s32.totalorder %s94, %s96
      %p103 = scmp.eq.s32.totalorder %s44, 1
      %p104 = por %p102, %p103
      %p105 = scmp.ne.s32.totalorder %s96, %s97
      %p106 = scmp.eq.s32.totalorder %s44, 0
      %p107 = por %p105, %p106
      %p108 = scmp.ne.s32.totalorder %s96, %s97
      %p109 = scmp.eq.s32.totalorder %s45, 1
      %p110 = por %p108, %p109
      %p112 = scmp.ne.s32.totalorder %s97, %s111
      %p113 = scmp.eq.s32.totalorder %s45, 0
      %p114 = por %p112, %p113
      %s116 = sadd.s32 %s115, 1
      %p119 = scmp.eq.s32.totalorder %s39, 1
      %p120 = scmp.ne.s32.totalorder %s115, %s117
      %p121 = scmp.eq.s32.totalorder %s39, 0
      %p122 = por %p120, %p121
      %p123 = scmp.ne.s32.totalorder %s115, %s117
      %p124 = scmp.eq.s32.totalorder %s44, 1
      %p125 = por %p123, %p124
      %p126 = scmp.ne.s32.totalorder %s117, %s118
      %p127 = scmp.eq.s32.totalorder %s44, 0
      %p128 = por %p126, %p127
      %p129 = scmp.ne.s32.totalorder %s117, %s118
      %p130 = scmp.eq.s32.totalorder %s45, 1
      %p131 = por %p129, %p130
      %p133 = scmp.ne.s32.totalorder %s118, %s132
      %p134 = scmp.eq.s32.totalorder %s45, 0
      %p135 = por %p133, %p134
      %s137 = sadd.s32 %s136, 1
      %p140 = scmp.eq.s32.totalorder %s39, 1
      %p141 = scmp.ne.s32.totalorder %s136, %s138
      %p142 = scmp.eq.s32.totalorder %s39, 0
      %p143 = por %p141, %p142
      %p144 = scmp.ne.s32.totalorder %s136, %s138
      %p145 = scmp.eq.s32.totalorder %s44, 1
      %p146 = por %p144, %p145
      %p147 = scmp.ne.s32.totalorder %s138, %s139
      %p148 = scmp.eq.s32.totalorder %s44, 0
      %p149 = por %p147, %p148
      %p150 = scmp.ne.s32.totalorder %s138, %s139
      %p151 = scmp.eq.s32.totalorder %s45, 1
      %p152 = por %p150, %p151
      %p154 = scmp.ne.s32.totalorder %s139, %s153
      %p155 = scmp.eq.s32.totalorder %s45, 0
      %p156 = por %p154, %p155
      %s158 = sadd.s32 %s157, 1
      %p161 = scmp.eq.s32.totalorder %s39, 1
      %p162 = scmp.ne.s32.totalorder %s157, %s159
      %p163 = scmp.eq.s32.totalorder %s39, 0
      %p164 = por %p162, %p163
      %p165 = scmp.ne.s32.totalorder %s157, %s159
      %p166 = scmp.eq.s32.totalorder %s44, 1
      %p167 = por %p165, %p166
      %p168 = scmp.ne.s32.totalorder %s159, %s160
      %p169 = scmp.eq.s32.totalorder %s44, 0
      %p170 = por %p168, %p169
      %p171 = scmp.ne.s32.totalorder %s159, %s160
      %p172 = scmp.eq.s32.totalorder %s45, 1
      %p173 = por %p171, %p172
      %p175 = scmp.ne.s32.totalorder %s160, %s174
      %p176 = scmp.eq.s32.totalorder %s45, 0
      %p177 = por %p175, %p176
      %s179 = sadd.s32 %s178, 1
      %p182 = scmp.eq.s32.totalorder %s39, 1
      %p183 = scmp.ne.s32.totalorder %s178, %s180
      %p184 = scmp.eq.s32.totalorder %s39, 0
      %p185 = por %p183, %p184
      %p186 = scmp.ne.s32.totalorder %s178, %s180
      %p187 = scmp.eq.s32.totalorder %s44, 1
      %p188 = por %p186, %p187
      %p189 = scmp.ne.s32.totalorder %s180, %s181
      %p190 = scmp.eq.s32.totalorder %s44, 0
      %p191 = por %p189, %p190
      %p192 = scmp.ne.s32.totalorder %s180, %s181
      %p193 = scmp.eq.s32.totalorder %s45, 1
      %p194 = por %p192, %p193
      %p196 = scmp.ne.s32.totalorder %s181, %s195
      %p197 = scmp.eq.s32.totalorder %s45, 0
      %p198 = por %p196, %p197
      %s200 = sadd.s32 %s199, 1
      %p203 = scmp.eq.s32.totalorder %s39, 1
      %p204 = scmp.ne.s32.totalorder %s199, %s201
      %p205 = scmp.eq.s32.totalorder %s39, 0
      %p206 = por %p204, %p205
      %p207 = scmp.ne.s32.totalorder %s199, %s201
      %p208 = scmp.eq.s32.totalorder %s44, 1
      %p209 = por %p207, %p208
      %p210 = scmp.ne.s32.totalorder %s201, %s202
      %p211 = scmp.eq.s32.totalorder %s44, 0
      %p212 = por %p210, %p211
      %p213 = scmp.ne.s32.totalorder %s201, %s202
      %p214 = scmp.eq.s32.totalorder %s45, 1
      %p215 = por %p213, %p214
      %p217 = scmp.ne.s32.totalorder %s202, %s216
      %p218 = scmp.eq.s32.totalorder %s45, 0
      %p219 = por %p217, %p218
      %s221 = sadd.s32 %s220, 1
      %p224 = scmp.eq.s32.totalorder %s39, 1
      %p225 = scmp.ne.s32.totalorder %s220, %s222
      %p226 = scmp.eq.s32.totalorder %s39, 0
      %p227 = por %p225, %p226
      %p228 = scmp.ne.s32.totalorder %s220, %s222
      %p229 = scmp.eq.s32.totalorder %s44, 1
      %p230 = por %p228, %p229
      %p231 = scmp.ne.s32.totalorder %s222, %s223
      %p232 = scmp.eq.s32.totalorder %s44, 0
      %p233 = por %p231, %p232
      %p234 = scmp.ne.s32.totalorder %s222, %s223
      %p235 = scmp.eq.s32.totalorder %s45, 1
      %p236 = por %p234, %p235
      %p238 = scmp.ne.s32.totalorder %s223, %s237
      %p239 = scmp.eq.s32.totalorder %s45, 0
      %p240 = por %p238, %p239
      %s242 = sadd.s32 %s241, 1
      %p245 = scmp.eq.s32.totalorder %s39, 1
      %p246 = scmp.ne.s32.totalorder %s241, %s243
      %p247 = scmp.eq.s32.totalorder %s39, 0
      %p248 = por %p246, %p247
      %p249 = scmp.ne.s32.totalorder %s241, %s243
      %p250 = scmp.eq.s32.totalorder %s44, 1
      %p251 = por %p249, %p250
      %p252 = scmp.ne.s32.totalorder %s243, %s244
      %p253 = scmp.eq.s32.totalorder %s44, 0
      %p254 = por %p252, %p253
      %p255 = scmp.ne.s32.totalorder %s243, %s244
      %p256 = scmp.eq.s32.totalorder %s45, 1
      %p257 = por %p255, %p256
      %p259 = scmp.ne.s32.totalorder %s244, %s258
      %p260 = scmp.eq.s32.totalorder %s45, 0
      %p261 = por %p259, %p260
      %s263 = sadd.s32 %s262, 1
      %p266 = scmp.eq.s32.totalorder %s39, 1
      %p267 = scmp.ne.s32.totalorder %s262, %s264
      %p268 = scmp.eq.s32.totalorder %s39, 0
      %p269 = por %p267, %p268
      %p270 = scmp.ne.s32.totalorder %s262, %s264
      %p271 = scmp.eq.s32.totalorder %s44, 1
      %p272 = por %p270, %p271
      %p273 = scmp.ne.s32.totalorder %s264, %s265
      %p274 = scmp.eq.s32.totalorder %s44, 0
      %p275 = por %p273, %p274
      %p276 = scmp.ne.s32.totalorder %s264, %s265
      %p277 = scmp.eq.s32.totalorder %s45, 1
      %p278 = por %p276, %p277
      %p280 = scmp.ne.s32.totalorder %s265, %s279
      %p281 = scmp.eq.s32.totalorder %s45, 0
      %p282 = por %p280, %p281
      %s284 = sadd.s32 %s283, 1
      %p287 = scmp.eq.s32.totalorder %s39, 1
      %p288 = scmp.ne.s32.totalorder %s283, %s285
      %p289 = scmp.eq.s32.totalorder %s39, 0
      %p290 = por %p288, %p289
      %p291 = scmp.ne.s32.totalorder %s283, %s285
      %p292 = scmp.eq.s32.totalorder %s44, 1
      %p293 = por %p291, %p292
      %p294 = scmp.ne.s32.totalorder %s285, %s286
      %p295 = scmp.eq.s32.totalorder %s44, 0
      %p296 = por %p294, %p295
      %p297 = scmp.ne.s32.totalorder %s285, %s286
      %p298 = scmp.eq.s32.totalorder %s45, 1
      %p299 = por %p297, %p298
      %p301 = scmp.ne.s32.totalorder %s286, %s300
      %p302 = scmp.eq.s32.totalorder %s45, 0
      %p303 = por %p301, %p302
      %s305 = sadd.s32 %s304, 1
      %p308 = scmp.eq.s32.totalorder %s39, 1
      %p309 = scmp.ne.s32.totalorder %s304, %s306
      %p310 = scmp.eq.s32.totalorder %s39, 0
      %p311 = por %p309, %p310
      %p312 = scmp.ne.s32.totalorder %s304, %s306
      %p313 = scmp.eq.s32.totalorder %s44, 1
      %p314 = por %p312, %p313
      %p315 = scmp.ne.s32.totalorder %s306, %s307
      %p316 = scmp.eq.s32.totalorder %s44, 0
      %p317 = por %p315, %p316
      %p318 = scmp.ne.s32.totalorder %s306, %s307
      %p319 = scmp.eq.s32.totalorder %s45, 1
      %p320 = por %p318, %p319
      %p322 = scmp.ne.s32.totalorder %s307, %s321
      %p323 = scmp.eq.s32.totalorder %s45, 0
      %p324 = por %p322, %p323
      %s326 = sadd.s32 %s325, 1
      %p329 = scmp.eq.s32.totalorder %s39, 1
      %p330 = scmp.ne.s32.totalorder %s325, %s327
      %p331 = scmp.eq.s32.totalorder %s39, 0
      %p332 = por %p330, %p331
      %p333 = scmp.ne.s32.totalorder %s325, %s327
      %p334 = scmp.eq.s32.totalorder %s44, 1
      %p335 = por %p333, %p334
      %p336 = scmp.ne.s32.totalorder %s327, %s328
      %p337 = scmp.eq.s32.totalorder %s44, 0
      %p338 = por %p336, %p337
      %p339 = scmp.ne.s32.totalorder %s327, %s328
      %p340 = scmp.eq.s32.totalorder %s45, 1
      %p341 = por %p339, %p340
      %p343 = scmp.ne.s32.totalorder %s328, %s342
      %p344 = scmp.eq.s32.totalorder %s45, 0
      %p345 = por %p343, %p344
      %s347 = sadd.s32 %s346, 1
      %p350 = scmp.eq.s32.totalorder %s39, 1
      %p351 = scmp.ne.s32.totalorder %s346, %s348
      %p352 = scmp.eq.s32.totalorder %s39, 0
      %p353 = por %p351, %p352
      %p354 = scmp.ne.s32.totalorder %s346, %s348
      %p355 = scmp.eq.s32.totalorder %s44, 1
      %p356 = por %p354, %p355
      %p357 = scmp.ne.s32.totalorder %s348, %s349
      %p358 = scmp.eq.s32.totalorder %s44, 0
      %p359 = por %p357, %p358
      %p360 = scmp.ne.s32.totalorder %s348, %s349
      %p361 = scmp.eq.s32.totalorder %s45, 1
      %p362 = por %p360, %p361
      %p364 = scmp.ne.s32.totalorder %s349, %s363
      %p365 = scmp.eq.s32.totalorder %s45, 0
      %p366 = por %p364, %p365
      %s368 = sadd.s32 %s367, 1
      %p371 = scmp.eq.s32.totalorder %s39, 1
      %p372 = scmp.ne.s32.totalorder %s367, %s369
      %p373 = scmp.eq.s32.totalorder %s39, 0
      %p374 = por %p372, %p373
      %p375 = scmp.ne.s32.totalorder %s367, %s369
      %p376 = scmp.eq.s32.totalorder %s44, 1
      %p377 = por %p375, %p376
      %p378 = scmp.ne.s32.totalorder %s369, %s370
      %p379 = scmp.eq.s32.totalorder %s44, 0
      %p380 = por %p378, %p379
      %p381 = scmp.ne.s32.totalorder %s369, %s370
      %p382 = scmp.eq.s32.totalorder %s45, 1
      %p383 = por %p381, %p382
      %p385 = scmp.ne.s32.totalorder %s370, %s384
      %p386 = scmp.eq.s32.totalorder %s45, 0
      %p387 = por %p385, %p386
      %s389 = sadd.s32 %s388, 1
      %p392 = scmp.eq.s32.totalorder %s39, 1
      %p393 = scmp.ne.s32.totalorder %s388, %s390
      %p394 = scmp.eq.s32.totalorder %s39, 0
      %p395 = por %p393, %p394
      %p396 = scmp.ne.s32.totalorder %s388, %s390
      %p397 = scmp.eq.s32.totalorder %s44, 1
      %p398 = por %p396, %p397
      %p399 = scmp.ne.s32.totalorder %s390, %s391
      %p400 = scmp.eq.s32.totalorder %s44, 0
      %p401 = por %p399, %p400
      %p402 = scmp.ne.s32.totalorder %s390, %s391
      %p403 = scmp.eq.s32.totalorder %s45, 1
      %p404 = por %p402, %p403
      %p406 = scmp.ne.s32.totalorder %s391, %s405
      %p407 = scmp.eq.s32.totalorder %s45, 0
      %p408 = por %p406, %p407
      %s410 = sadd.s32 %s409, 1
      %p413 = scmp.eq.s32.totalorder %s39, 1
      %p414 = scmp.ne.s32.totalorder %s409, %s411
      %p415 = scmp.eq.s32.totalorder %s39, 0
      %p416 = por %p414, %p415
      %p417 = scmp.ne.s32.totalorder %s409, %s411
      %p418 = scmp.eq.s32.totalorder %s44, 1
      %p419 = por %p417, %p418
      %p420 = scmp.ne.s32.totalorder %s411, %s412
      %p421 = scmp.eq.s32.totalorder %s44, 0
      %p422 = por %p420, %p421
      %p423 = scmp.ne.s32.totalorder %s411, %s412
      %p424 = scmp.eq.s32.totalorder %s45, 1
      %p425 = por %p423, %p424
      %p427 = scmp.ne.s32.totalorder %s412, %s426
      %p428 = scmp.eq.s32.totalorder %s45, 0
      %p429 = por %p427, %p428
      %s431 = sadd.s32 %s430, 1
      %p434 = scmp.eq.s32.totalorder %s39, 1
      %p435 = scmp.ne.s32.totalorder %s430, %s432
      %p436 = scmp.eq.s32.totalorder %s39, 0
      %p437 = por %p435, %p436
      %p438 = scmp.ne.s32.totalorder %s430, %s432
      %p439 = scmp.eq.s32.totalorder %s44, 1
      %p440 = por %p438, %p439
      %p441 = scmp.ne.s32.totalorder %s432, %s433
      %p442 = scmp.eq.s32.totalorder %s44, 0
      %p443 = por %p441, %p442
      %p444 = scmp.ne.s32.totalorder %s432, %s433
      %p445 = scmp.eq.s32.totalorder %s45, 1
      %p446 = por %p444, %p445
      %p448 = scmp.ne.s32.totalorder %s433, %s447
      %p449 = scmp.eq.s32.totalorder %s45, 0
      %p450 = por %p448, %p449
      %s452 = sadd.s32 %s451, 1
      %p455 = scmp.eq.s32.totalorder %s39, 1
      %p456 = scmp.ne.s32.totalorder %s451, %s453
      %p457 = scmp.eq.s32.totalorder %s39, 0
      %p458 = por %p456, %p457
      %p459 = scmp.ne.s32.totalorder %s451, %s453
      %p460 = scmp.eq.s32.totalorder %s44, 1
      %p461 = por %p459, %p460
      %p462 = scmp.ne.s32.totalorder %s453, %s454
      %p463 = scmp.eq.s32.totalorder %s44, 0
      %p464 = por %p462, %p463
      %p465 = scmp.ne.s32.totalorder %s453, %s454
      %p466 = scmp.eq.s32.totalorder %s45, 1
      %p467 = por %p465, %p466
      %p469 = scmp.ne.s32.totalorder %s454, %s468
      %p470 = scmp.eq.s32.totalorder %s45, 0
      %p471 = por %p469, %p470
      %s473 = sadd.s32 %s472, 1
      %p476 = scmp.eq.s32.totalorder %s39, 1
      %p477 = scmp.ne.s32.totalorder %s472, %s474
      %p478 = scmp.eq.s32.totalorder %s39, 0
      %p479 = por %p477, %p478
      %p480 = scmp.ne.s32.totalorder %s472, %s474
      %p481 = scmp.eq.s32.totalorder %s44, 1
      %p482 = por %p480, %p481
      %p483 = scmp.ne.s32.totalorder %s474, %s475
      %p484 = scmp.eq.s32.totalorder %s44, 0
      %p485 = por %p483, %p484
      %p486 = scmp.ne.s32.totalorder %s474, %s475
      %p487 = scmp.eq.s32.totalorder %s45, 1
      %p488 = por %p486, %p487
      %p490 = scmp.ne.s32.totalorder %s475, %s489
      %p491 = scmp.eq.s32.totalorder %s45, 0
      %p492 = por %p490, %p491
      %s494 = sadd.s32 %s493, 1
      %p497 = scmp.eq.s32.totalorder %s39, 1
      %p498 = scmp.ne.s32.totalorder %s493, %s495
      %p499 = scmp.eq.s32.totalorder %s39, 0
      %p500 = por %p498, %p499
      %p501 = scmp.ne.s32.totalorder %s493, %s495
      %p502 = scmp.eq.s32.totalorder %s44, 1
      %p503 = por %p501, %p502
      %p504 = scmp.ne.s32.totalorder %s495, %s496
      %p505 = scmp.eq.s32.totalorder %s44, 0
      %p506 = por %p504, %p505
      %p507 = scmp.ne.s32.totalorder %s495, %s496
      %p508 = scmp.eq.s32.totalorder %s45, 1
      %p509 = por %p507, %p508
      %p511 = scmp.ne.s32.totalorder %s496, %s510
      %p512 = scmp.eq.s32.totalorder %s45, 0
      %p513 = por %p511, %p512
      %s515 = sadd.s32 %s514, 1
      %p518 = scmp.eq.s32.totalorder %s39, 1
      %p519 = scmp.ne.s32.totalorder %s514, %s516
      %p520 = scmp.eq.s32.totalorder %s39, 0
      %p521 = por %p519, %p520
      %p522 = scmp.ne.s32.totalorder %s514, %s516
      %p523 = scmp.eq.s32.totalorder %s44, 1
      %p524 = por %p522, %p523
      %p525 = scmp.ne.s32.totalorder %s516, %s517
      %p526 = scmp.eq.s32.totalorder %s44, 0
      %p527 = por %p525, %p526
      %p528 = scmp.ne.s32.totalorder %s516, %s517
      %p529 = scmp.eq.s32.totalorder %s45, 1
      %p530 = por %p528, %p529
      %p532 = scmp.ne.s32.totalorder %s517, %s531
      %p533 = scmp.eq.s32.totalorder %s45, 0
      %p534 = por %p532, %p533
      %s536 = sadd.s32 %s535, 1
      %p539 = scmp.eq.s32.totalorder %s39, 1
      %p540 = scmp.ne.s32.totalorder %s535, %s537
      %p541 = scmp.eq.s32.totalorder %s39, 0
      %p542 = por %p540, %p541
      %p543 = scmp.ne.s32.totalorder %s535, %s537
      %p544 = scmp.eq.s32.totalorder %s44, 1
      %p545 = por %p543, %p544
      %p546 = scmp.ne.s32.totalorder %s537, %s538
      %p547 = scmp.eq.s32.totalorder %s44, 0
      %p548 = por %p546, %p547
      %p549 = scmp.ne.s32.totalorder %s537, %s538
      %p550 = scmp.eq.s32.totalorder %s45, 1
      %p551 = por %p549, %p550
      %p553 = scmp.ne.s32.totalorder %s538, %s552
      %p554 = scmp.eq.s32.totalorder %s45, 0
      %p555 = por %p553, %p554
      %s556 = ssub.s32 %s39, %s46
      %p557 = scmp.eq.s32.totalorder %s556, 0
      %s559 = sadd.s32 %s558, 1
      %s560 = scalar_select %p557, %s558, %s559
      %p563 = pneg %p557
      %p564 = scmp.eq.s32.totalorder %s39, 1
      %p565 = por %p563, %p564
      %p566 = scmp.ne.s32.totalorder %s558, %s561
      %p567 = scmp.eq.s32.totalorder %s39, 0
      %p568 = por %p566, %p567
      %p569 = scmp.ne.s32.totalorder %s558, %s561
      %p570 = scmp.eq.s32.totalorder %s44, 1
      %p571 = por %p569, %p570
      %p572 = scmp.ne.s32.totalorder %s561, %s562
      %p573 = scmp.eq.s32.totalorder %s44, 0
      %p574 = por %p572, %p573
      %p575 = scmp.ne.s32.totalorder %s561, %s562
      %p576 = scmp.eq.s32.totalorder %s45, 1
      %p577 = por %p575, %p576
      %p579 = scmp.ne.s32.totalorder %s562, %s578
      %p580 = scmp.eq.s32.totalorder %s45, 0
      %p581 = por %p579, %p580
      %s582 = ssub.s32 %s39, %s46
      %p583 = scmp.eq.s32.totalorder %s582, 0
      %s585 = sadd.s32 %s584, 1
      %s586 = scalar_select %p583, %s584, %s585
      %p589 = pneg %p583
      %p590 = scmp.eq.s32.totalorder %s39, 1
      %p591 = por %p589, %p590
      %p592 = scmp.ne.s32.totalorder %s584, %s587
      %p593 = scmp.eq.s32.totalorder %s39, 0
      %p594 = por %p592, %p593
      %p595 = scmp.ne.s32.totalorder %s584, %s587
      %p596 = scmp.eq.s32.totalorder %s44, 1
      %p597 = por %p595, %p596
      %p598 = scmp.ne.s32.totalorder %s587, %s588
      %p599 = scmp.eq.s32.totalorder %s44, 0
      %p600 = por %p598, %p599
      %p601 = scmp.ne.s32.totalorder %s587, %s588
      %p602 = scmp.eq.s32.totalorder %s45, 1
      %p603 = por %p601, %p602
      %p605 = scmp.ne.s32.totalorder %s588, %s604
      %p606 = scmp.eq.s32.totalorder %s45, 0
      %p607 = por %p605, %p606
      %s608 = ssub.s32 %s39, %s46
      %p609 = scmp.eq.s32.totalorder %s608, 0
      %s611 = sadd.s32 %s610, 1
      %s612 = scalar_select %p609, %s610, %s611
      %p615 = pneg %p609
      %p616 = scmp.eq.s32.totalorder %s39, 1
      %p617 = por %p615, %p616
      %p618 = scmp.ne.s32.totalorder %s610, %s613
      %p619 = scmp.eq.s32.totalorder %s39, 0
      %p620 = por %p618, %p619
      %p621 = scmp.ne.s32.totalorder %s610, %s613
      %p622 = scmp.eq.s32.totalorder %s44, 1
      %p623 = por %p621, %p622
      %p624 = scmp.ne.s32.totalorder %s613, %s614
      %p625 = scmp.eq.s32.totalorder %s44, 0
      %p626 = por %p624, %p625
      %p627 = scmp.ne.s32.totalorder %s613, %s614
      %p628 = scmp.eq.s32.totalorder %s45, 1
      %p629 = por %p627, %p628
      %p631 = scmp.ne.s32.totalorder %s614, %s630
      %p632 = scmp.eq.s32.totalorder %s45, 0
      %p633 = por %p631, %p632
      %p634 = scmp.le.s32.totalorder 1, %s39
      %p635 = scmp.lt.s32.totalorder %s39, 3
      %p636 = pnand %p634, %p635
      %p637 = pneg %p636
      // Predicated region
      $region9: #{forward.1} parent=5 // pred_check
        _
      $region10: #{forward.1} parent=5 // pred_check_branch
        %639 = sbr.rel (%p636) target = $region12
      $region11: #{forward.1} parent=5 // pred_region
        %s640 = ssub.s32 %s39, 1
        // Predicated region
        $region13: #{forward.1} parent=11 // pred_check
          %p641 = pneg %p86
        $region14: #{forward.1} parent=11 // pred_check_branch
          %643 = sbr.rel (%p641) target = $region16
        $region15: #{forward.1} parent=11 // pred_region
          _
        $region16: #{forward.1} parent=11 // pred_fallthru
          _
        // Predicated region
        $region17: #{forward.1} parent=11 // pred_check
          %p644 = pneg %p107
        $region18: #{forward.1} parent=11 // pred_check_branch
          %646 = sbr.rel (%p644) target = $region20
        $region19: #{forward.1} parent=11 // pred_region
          _
        $region20: #{forward.1} parent=11 // pred_fallthru
          _
        // Predicated region
        $region21: #{forward.1} parent=11 // pred_check
          %p647 = pneg %p128
        $region22: #{forward.1} parent=11 // pred_check_branch
          %649 = sbr.rel (%p647) target = $region24
        $region23: #{forward.1} parent=11 // pred_region
          _
        $region24: #{forward.1} parent=11 // pred_fallthru
          _
        // Predicated region
        $region25: #{forward.1} parent=11 // pred_check
          %p650 = pneg %p149
        $region26: #{forward.1} parent=11 // pred_check_branch
          %652 = sbr.rel (%p650) target = $region28
        $region27: #{forward.1} parent=11 // pred_region
          _
        $region28: #{forward.1} parent=11 // pred_fallthru
          _
        // Predicated region
        $region29: #{forward.1} parent=11 // pred_check
          %p653 = pneg %p170
        $region30: #{forward.1} parent=11 // pred_check_branch
          %655 = sbr.rel (%p653) target = $region32
        $region31: #{forward.1} parent=11 // pred_region
          _
        $region32: #{forward.1} parent=11 // pred_fallthru
          _
        // Predicated region
        $region33: #{forward.1} parent=11 // pred_check
          %p656 = pneg %p191
        $region34: #{forward.1} parent=11 // pred_check_branch
          %658 = sbr.rel (%p656) target = $region36
        $region35: #{forward.1} parent=11 // pred_region
          _
        $region36: #{forward.1} parent=11 // pred_fallthru
          _
        // Predicated region
        $region37: #{forward.1} parent=11 // pred_check
          %p659 = pneg %p212
        $region38: #{forward.1} parent=11 // pred_check_branch
          %661 = sbr.rel (%p659) target = $region40
        $region39: #{forward.1} parent=11 // pred_region
          _
        $region40: #{forward.1} parent=11 // pred_fallthru
          _
        // Predicated region
        $region41: #{forward.1} parent=11 // pred_check
          %p662 = pneg %p233
        $region42: #{forward.1} parent=11 // pred_check_branch
          %664 = sbr.rel (%p662) target = $region44
        $region43: #{forward.1} parent=11 // pred_region
          _
        $region44: #{forward.1} parent=11 // pred_fallthru
          _
        // Predicated region
        $region45: #{forward.1} parent=11 // pred_check
          %p665 = pneg %p254
        $region46: #{forward.1} parent=11 // pred_check_branch
          %667 = sbr.rel (%p665) target = $region48
        $region47: #{forward.1} parent=11 // pred_region
          _
        $region48: #{forward.1} parent=11 // pred_fallthru
          _
        // Predicated region
        $region49: #{forward.1} parent=11 // pred_check
          %p668 = pneg %p275
        $region50: #{forward.1} parent=11 // pred_check_branch
          %670 = sbr.rel (%p668) target = $region52
        $region51: #{forward.1} parent=11 // pred_region
          _
        $region52: #{forward.1} parent=11 // pred_fallthru
          _
        // Predicated region
        $region53: #{forward.1} parent=11 // pred_check
          %p671 = pneg %p296
        $region54: #{forward.1} parent=11 // pred_check_branch
          %673 = sbr.rel (%p671) target = $region56
        $region55: #{forward.1} parent=11 // pred_region
          _
        $region56: #{forward.1} parent=11 // pred_fallthru
          _
        // Predicated region
        $region57: #{forward.1} parent=11 // pred_check
          %p674 = pneg %p317
        $region58: #{forward.1} parent=11 // pred_check_branch
          %676 = sbr.rel (%p674) target = $region60
        $region59: #{forward.1} parent=11 // pred_region
          _
        $region60: #{forward.1} parent=11 // pred_fallthru
          _
        // Predicated region
        $region61: #{forward.1} parent=11 // pred_check
          %p677 = pneg %p338
        $region62: #{forward.1} parent=11 // pred_check_branch
          %679 = sbr.rel (%p677) target = $region64
        $region63: #{forward.1} parent=11 // pred_region
          _
        $region64: #{forward.1} parent=11 // pred_fallthru
          _
        // Predicated region
        $region65: #{forward.1} parent=11 // pred_check
          %p680 = pneg %p359
        $region66: #{forward.1} parent=11 // pred_check_branch
          %682 = sbr.rel (%p680) target = $region68
        $region67: #{forward.1} parent=11 // pred_region
          _
        $region68: #{forward.1} parent=11 // pred_fallthru
          _
        // Predicated region
        $region69: #{forward.1} parent=11 // pred_check
          %p683 = pneg %p380
        $region70: #{forward.1} parent=11 // pred_check_branch
          %685 = sbr.rel (%p683) target = $region72
        $region71: #{forward.1} parent=11 // pred_region
          _
        $region72: #{forward.1} parent=11 // pred_fallthru
          _
        // Predicated region
        $region73: #{forward.1} parent=11 // pred_check
          %p686 = pneg %p401
        $region74: #{forward.1} parent=11 // pred_check_branch
          %688 = sbr.rel (%p686) target = $region76
        $region75: #{forward.1} parent=11 // pred_region
          _
        $region76: #{forward.1} parent=11 // pred_fallthru
          _
        // Predicated region
        $region77: #{forward.1} parent=11 // pred_check
          %p689 = pneg %p422
        $region78: #{forward.1} parent=11 // pred_check_branch
          %691 = sbr.rel (%p689) target = $region80
        $region79: #{forward.1} parent=11 // pred_region
          _
        $region80: #{forward.1} parent=11 // pred_fallthru
          _
        // Predicated region
        $region81: #{forward.1} parent=11 // pred_check
          %p692 = pneg %p443
        $region82: #{forward.1} parent=11 // pred_check_branch
          %694 = sbr.rel (%p692) target = $region84
        $region83: #{forward.1} parent=11 // pred_region
          _
        $region84: #{forward.1} parent=11 // pred_fallthru
          _
        // Predicated region
        $region85: #{forward.1} parent=11 // pred_check
          %p695 = pneg %p464
        $region86: #{forward.1} parent=11 // pred_check_branch
          %697 = sbr.rel (%p695) target = $region88
        $region87: #{forward.1} parent=11 // pred_region
          _
        $region88: #{forward.1} parent=11 // pred_fallthru
          _
        // Predicated region
        $region89: #{forward.1} parent=11 // pred_check
          %p698 = pneg %p485
        $region90: #{forward.1} parent=11 // pred_check_branch
          %700 = sbr.rel (%p698) target = $region92
        $region91: #{forward.1} parent=11 // pred_region
          _
        $region92: #{forward.1} parent=11 // pred_fallthru
          _
        // Predicated region
        $region93: #{forward.1} parent=11 // pred_check
          %p701 = pneg %p506
        $region94: #{forward.1} parent=11 // pred_check_branch
          %703 = sbr.rel (%p701) target = $region96
        $region95: #{forward.1} parent=11 // pred_region
          _
        $region96: #{forward.1} parent=11 // pred_fallthru
          _
        // Predicated region
        $region97: #{forward.1} parent=11 // pred_check
          %p704 = pneg %p527
        $region98: #{forward.1} parent=11 // pred_check_branch
          %706 = sbr.rel (%p704) target = $region100
        $region99: #{forward.1} parent=11 // pred_region
          _
        $region100: #{forward.1} parent=11 // pred_fallthru
          _
        // Predicated region
        $region101: #{forward.1} parent=11 // pred_check
          %p707 = pneg %p548
        $region102: #{forward.1} parent=11 // pred_check_branch
          %709 = sbr.rel (%p707) target = $region104
        $region103: #{forward.1} parent=11 // pred_region
          _
        $region104: #{forward.1} parent=11 // pred_fallthru
          _
      $region12: #{forward.1} parent=5 // pred_fallthru
        _
      %p710 = scmp.lt.s32.totalorder %s39, 2
      // Predicated region
      $region105: #{forward.1} parent=5 // pred_check
        %p711 = pneg %p710
      $region106: #{forward.1} parent=5 // pred_check_branch
        %713 = sbr.rel (%p711) target = $region108
      $region107: #{forward.1} parent=5 // pred_region
        // Predicated region
        $region109: #{forward.1} parent=107 // pred_check
          %p714 = pneg %p59
        $region110: #{forward.1} parent=107 // pred_check_branch
          %716 = sbr.rel (%p714) target = $region112
        $region111: #{forward.1} parent=107 // pred_region
          %p717 = scmp.lt.s32.totalorder %s39, 1
          %s718 = scalar_select %p717, %s39, 1
          %s719 = smul.addr %s718, 5
          %s720 = smul.addr %s719, 8
          %s721 = scalar_lea.vmem %s0, %s720
        $region112: #{forward.1} parent=107 // pred_fallthru
          _
      $region108: #{forward.1} parent=5 // pred_fallthru
        _
      %p722 = scmp.le.s32.totalorder 1, %s39
      %p723 = scmp.lt.s32.totalorder %s39, 3
      %p724 = pnand %p722, %p723
      %p725 = pneg %p724
      // Predicated region
      $region113: #{forward.1} parent=5 // pred_check
        _
      $region114: #{forward.1} parent=5 // pred_check_branch
        %727 = sbr.rel (%p724) target = $region116
      $region115: #{forward.1} parent=5 // pred_region
        %s728 = ssub.s32 %s39, 1
        %p729 = scmp.lt.s32.totalorder %s44, 1
        %s730 = scalar_select %p729, %s44, 1
        %s731 = smul.addr %s730, 5
        %s732 = smul.addr %s731, 8
        %s733 = scalar_lea.vmem %s0, %s732
        %p734 = pneg %p65
        %p735 = pneg %p62
        %p736 = pneg %p86
        %p737 = pneg %p83
        %p738 = pneg %p107
        %p739 = pneg %p104
        %p740 = pneg %p128
        %p741 = pneg %p125
        %p742 = pneg %p149
        %p743 = pneg %p146
        %p744 = pneg %p170
        %p745 = pneg %p167
        %p746 = pneg %p191
        %p747 = pneg %p188
        %p748 = pneg %p212
        %p749 = pneg %p209
        %p750 = pneg %p233
        %p751 = pneg %p230
        %p752 = pneg %p254
        %p753 = pneg %p251
        %p754 = pneg %p275
        %p755 = pneg %p272
        %p756 = pneg %p296
        %p757 = pneg %p293
        %p758 = pneg %p317
        %p759 = pneg %p314
        %p760 = pneg %p338
        %p761 = pneg %p335
        %p762 = pneg %p359
        %p763 = pneg %p356
        %p764 = pneg %p380
        %p765 = pneg %p377
        %p766 = pneg %p401
        %p767 = pneg %p398
        %p768 = pneg %p422
        %p769 = pneg %p419
        %p770 = pneg %p443
        %p771 = pneg %p440
        %p772 = pneg %p464
        %p773 = pneg %p461
        %p774 = pneg %p485
        %p775 = pneg %p482
        %p776 = pneg %p506
        %p777 = pneg %p503
        %p778 = pneg %p527
        %p779 = pneg %p524
        %p780 = pneg %p548
        %p781 = pneg %p545
        %p782 = pneg %p574
        %p783 = pneg %p571
        %s784 = sand.u32 %s561, 1
        %s785 = scalar_lea.sflag [#allocation3], %s784
        %s786 = sand.u32 %s561, 1
        %s787 = smul.addr %s786, 16
        %s788 = scalar_lea.vmem [#allocation2], %s787
        %p789 = pneg %p600
        %p790 = pneg %p597
        %s791 = sand.u32 %s587, 1
        %s792 = scalar_lea.sflag [#allocation5], %s791
        %s793 = sand.u32 %s587, 1
        %s794 = smul.addr %s793, 16
        %s795 = scalar_lea.vmem [#allocation4], %s794
        %p796 = pneg %p626
        %p797 = pneg %p623
        %p798 = scmp.lt.s32.totalorder %s44, 1
        %s799 = scalar_select %p798, %s44, 1
        %s800 = smul.addr %s799, 98
        %s801 = smul.addr %s800, 8
        %s802 = scalar_lea.vmem %s26, %s801
        %p803 = scmp.lt.s32.totalorder %s44, 1
        %s804 = scalar_select %p803, %s44, 1
        %s805 = smul.addr %s804, 5
        %s806 = smul.addr %s805, 8
        %s807 = scalar_lea.vmem %s0, %s806
        %p808 = scmp.lt.s32.totalorder %s44, 1
        %s809 = scalar_select %p808, %s44, 1
        %s810 = smul.addr %s809, 98
        %s811 = smul.addr %s810, 8
        %s812 = scalar_lea.vmem %s26, %s811
        %v814 = vld [vmem:[%s807] sm:$0xff]
        %v815 = vld [vmem:[%s807 + $0x8] sm:$0xff]
        %v816 = vld [vmem:[%s807 + $0x10] sm:$0xff]
        %v817 = vld [vmem:[%s807 + $0x18] sm:$0xff]
        %v818 = vld [vmem:[%s807 + $0x20] sm:$0xff]
        %v819 = vpack.c.bf16 %v814, %v814
        %v820 = vpack.c.bf16 %v815, %v815
        %v821 = vpack.c.bf16 %v816, %v816
        %v822 = vpack.c.bf16 %v817, %v817
        %v823 = vpack.c.bf16 %v818, %v818
        %v824 = vld [vmem:[%s1] sm:$0xf]
        %v825 = vld [vmem:[%s1 + $0x4] sm:$0xf]
        %v826 = vld [vmem:[%s1 + $0x8] sm:$0xf]
        %v827 = vld [vmem:[%s1 + $0xc] sm:$0xf]
        %v828 = vld [vmem:[%s1 + $0x10] sm:$0xf]
        %v829 = vld [vmem:[%s1 + $0x14] sm:$0xf]
        %v830 = vld [vmem:[%s1 + $0x18] sm:$0xf]
        %v831 = vld [vmem:[%s1 + $0x1c] sm:$0xf]
        %v832 = vld [vmem:[%s1 + $0x20] sm:$0xf]
        %v833 = vld [vmem:[%s1 + $0x24] sm:$0xf]
        %v834 = vld [vmem:[%s1 + $0x28] sm:$0xf]
        %v835 = vld [vmem:[%s1 + $0x2c] sm:$0xf]
        %v836 = vld [vmem:[%s1 + $0x30] sm:$0xf]
        %v837 = vld [vmem:[%s1 + $0x34] sm:$0xf]
        %v838 = vld [vmem:[%s1 + $0x38] sm:$0xf]
        %v839 = vld [vmem:[%s1 + $0x3c] sm:$0xf]
        %v840 = vld [vmem:[%s1 + $0x40] sm:$0xf]
        %v841 = vld [vmem:[%s1 + $0x44] sm:$0xf]
        %v842 = vld [vmem:[%s1 + $0x48] sm:$0xf]
        %v843 = vld [vmem:[%s1 + $0x4c] sm:$0xf]
        %v844 = vld [vmem:[%s1 + $0x50] sm:$0xf]
        %v845 = vld [vmem:[%s1 + $0x54] sm:$0xf]
        %v846 = vld [vmem:[%s1 + $0x58] sm:$0xf]
        %v847 = vld [vmem:[%s1 + $0x5c] sm:$0xf]
        %v848 = vld [vmem:[%s1 + $0x60] sm:$0xf]
        %v849 = vld [vmem:[%s1 + $0x64] sm:$0xf]
        %v850 = vld [vmem:[%s1 + $0x68] sm:$0xf]
        %v851 = vld [vmem:[%s1 + $0x6c] sm:$0xf]
        %v852 = vld [vmem:[%s1 + $0x70] sm:$0xf]
        %v853 = vld [vmem:[%s1 + $0x74] sm:$0xf]
        %v854 = vld [vmem:[%s1 + $0x78] sm:$0xf]
        %v855 = vld [vmem:[%s1 + $0x7c] sm:$0xf]
        %v856 = vld [vmem:[%s1 + $0x80] sm:$0xf]
        %v857 = vld [vmem:[%s1 + $0x84] sm:$0xf]
        %v858 = vld [vmem:[%s1 + $0x88] sm:$0xf]
        %v859 = vld [vmem:[%s1 + $0x8c] sm:$0xf]
        %v860 = vld [vmem:[%s1 + $0x90] sm:$0xf]
        %v861 = vld [vmem:[%s1 + $0x94] sm:$0xf]
        %v862 = vld [vmem:[%s1 + $0x98] sm:$0xf]
        %v863 = vld [vmem:[%s1 + $0x9c] sm:$0xf]
        %v864 = vld [vmem:[%s1 + $0xa0] sm:$0xf]
        %v865 = vld [vmem:[%s1 + $0xa4] sm:$0xf]
        %v866 = vld [vmem:[%s1 + $0xa8] sm:$0xf]
        %v867 = vld [vmem:[%s1 + $0xac] sm:$0xf]
        %v868 = vld [vmem:[%s1 + $0xb0] sm:$0xf]
        %v869 = vld [vmem:[%s1 + $0xb4] sm:$0xf]
        %v870 = vld [vmem:[%s1 + $0xb8] sm:$0xf]
        %v871 = vld [vmem:[%s1 + $0xbc] sm:$0xf]
        %v872 = vld [vmem:[%s1 + $0xc0] sm:$0xf]
        %v873 = vld [vmem:[%s1 + $0xc4] sm:$0xf]
        %v874 = vld [vmem:[%s1 + $0xc8] sm:$0xf]
        %v875 = vld [vmem:[%s1 + $0xcc] sm:$0xf]
        %v876 = vld [vmem:[%s1 + $0xd0] sm:$0xf]
        %v877 = vld [vmem:[%s1 + $0xd4] sm:$0xf]
        %v878 = vld [vmem:[%s1 + $0xd8] sm:$0xf]
        %v879 = vld [vmem:[%s1 + $0xdc] sm:$0xf]
        %v880 = vld [vmem:[%s1 + $0xe0] sm:$0xf]
        %v881 = vld [vmem:[%s1 + $0xe4] sm:$0xf]
        %v882 = vld [vmem:[%s1 + $0xe8] sm:$0xf]
        %v883 = vld [vmem:[%s1 + $0xec] sm:$0xf]
        %v884 = vld [vmem:[%s1 + $0xf0] sm:$0xf]
        %v885 = vld [vmem:[%s1 + $0xf4] sm:$0xf]
        %v886 = vld [vmem:[%s1 + $0xf8] sm:$0xf]
        %v887 = vld [vmem:[%s1 + $0xfc] sm:$0xf]
        %v888 = vld [vmem:[%s1 + $0x100] sm:$0xf]
        %v889 = vld [vmem:[%s1 + $0x104] sm:$0xf]
        %v890 = vld [vmem:[%s1 + $0x108] sm:$0xf]
        %v891 = vld [vmem:[%s1 + $0x10c] sm:$0xf]
        %v892 = vld [vmem:[%s1 + $0x110] sm:$0xf]
        %v893 = vld [vmem:[%s1 + $0x114] sm:$0xf]
        %v894 = vld [vmem:[%s1 + $0x118] sm:$0xf]
        %v895 = vld [vmem:[%s1 + $0x11c] sm:$0xf]
        %v896 = vld [vmem:[%s1 + $0x120] sm:$0xf]
        %v897 = vld [vmem:[%s1 + $0x124] sm:$0xf]
        %v898 = vld [vmem:[%s1 + $0x128] sm:$0xf]
        %v899 = vld [vmem:[%s1 + $0x12c] sm:$0xf]
        %v900 = vld [vmem:[%s1 + $0x130] sm:$0xf]
        %v901 = vld [vmem:[%s1 + $0x134] sm:$0xf]
        %v902 = vld [vmem:[%s1 + $0x138] sm:$0xf]
        %v903 = vld [vmem:[%s1 + $0x13c] sm:$0xf]
        %v904 = vld [vmem:[%s2] sm:$0xff]
        %v985 = vunpack.c.l.b16 %v824
        %v986 = vunpack.c.l.b16 %v825
        %v987 = vunpack.c.l.b16 %v826
        %v988 = vunpack.c.l.b16 %v827
        %v989 = vunpack.c.l.b16 %v828
        %v990 = vunpack.c.l.b16 %v829
        %v991 = vunpack.c.l.b16 %v830
        %v992 = vunpack.c.l.b16 %v831
        %v993 = vunpack.c.l.b16 %v832
        %v994 = vunpack.c.l.b16 %v833
        %v995 = vunpack.c.l.b16 %v834
        %v996 = vunpack.c.l.b16 %v835
        %v997 = vunpack.c.l.b16 %v836
        %v998 = vunpack.c.l.b16 %v837
        %v999 = vunpack.c.l.b16 %v838
        %v1000 = vunpack.c.l.b16 %v839
        %v1001 = vunpack.c.l.b16 %v840
        %v1002 = vunpack.c.l.b16 %v841
        %v1003 = vunpack.c.l.b16 %v842
        %v1004 = vunpack.c.l.b16 %v843
        %v1005 = vunpack.c.l.b16 %v844
        %v1006 = vunpack.c.l.b16 %v845
        %v1007 = vunpack.c.l.b16 %v846
        %v1008 = vunpack.c.l.b16 %v847
        %v1009 = vunpack.c.l.b16 %v848
        %v1010 = vunpack.c.l.b16 %v849
        %v1011 = vunpack.c.l.b16 %v850
        %v1012 = vunpack.c.l.b16 %v851
        %v1013 = vunpack.c.l.b16 %v852
        %v1014 = vunpack.c.l.b16 %v853
        %v1015 = vunpack.c.l.b16 %v854
        %v1016 = vunpack.c.l.b16 %v855
        %v1017 = vunpack.c.l.b16 %v856
        %v1018 = vunpack.c.l.b16 %v857
        %v1019 = vunpack.c.l.b16 %v858
        %v1020 = vunpack.c.l.b16 %v859
        %v1021 = vunpack.c.l.b16 %v860
        %v1022 = vunpack.c.l.b16 %v861
        %v1023 = vunpack.c.l.b16 %v862
        %v1024 = vunpack.c.l.b16 %v863
        %v1025 = vunpack.c.l.b16 %v864
        %v1026 = vunpack.c.l.b16 %v865
        %v1027 = vunpack.c.l.b16 %v866
        %v1028 = vunpack.c.l.b16 %v867
        %v1029 = vunpack.c.l.b16 %v868
        %v1030 = vunpack.c.l.b16 %v869
        %v1031 = vunpack.c.l.b16 %v870
        %v1032 = vunpack.c.l.b16 %v871
        %v1033 = vunpack.c.l.b16 %v872
        %v1034 = vunpack.c.l.b16 %v873
        %v1035 = vunpack.c.l.b16 %v874
        %v1036 = vunpack.c.l.b16 %v875
        %v1037 = vunpack.c.l.b16 %v876
        %v1038 = vunpack.c.l.b16 %v877
        %v1039 = vunpack.c.l.b16 %v878
        %v1040 = vunpack.c.l.b16 %v879
        %v1041 = vunpack.c.l.b16 %v880
        %v1042 = vunpack.c.l.b16 %v881
        %v1043 = vunpack.c.l.b16 %v882
        %v1044 = vunpack.c.l.b16 %v883
        %v1045 = vunpack.c.l.b16 %v884
        %v1046 = vunpack.c.l.b16 %v885
        %v1047 = vunpack.c.l.b16 %v886
        %v1048 = vunpack.c.l.b16 %v887
        %v1049 = vunpack.c.l.b16 %v888
        %v1050 = vunpack.c.l.b16 %v889
        %v1051 = vunpack.c.l.b16 %v890
        %v1052 = vunpack.c.l.b16 %v891
        %v1053 = vunpack.c.l.b16 %v892
        %v1054 = vunpack.c.l.b16 %v893
        %v1055 = vunpack.c.l.b16 %v894
        %v1056 = vunpack.c.l.b16 %v895
        %v1057 = vunpack.c.l.b16 %v896
        %v1058 = vunpack.c.l.b16 %v897
        %v1059 = vunpack.c.l.b16 %v898
        %v1060 = vunpack.c.l.b16 %v899
        %v1061 = vunpack.c.l.b16 %v900
        %v1062 = vunpack.c.l.b16 %v901
        %v1063 = vunpack.c.l.b16 %v902
        %v1064 = vunpack.c.l.b16 %v903
        %v1065 = vpack.c.b16 %v986, %v985
        %v1066 = vpack.c.b16 %v988, %v987
        %v1067 = vpack.c.b16 %v990, %v989
        %v1068 = vpack.c.b16 %v992, %v991
        %v1069 = vpack.c.b16 %v994, %v993
        %v1070 = vpack.c.b16 %v996, %v995
        %v1071 = vpack.c.b16 %v998, %v997
        %v1072 = vpack.c.b16 %v1000, %v999
        %v1073 = vpack.c.b16 %v1002, %v1001
        %v1074 = vpack.c.b16 %v1004, %v1003
        %v1075 = vpack.c.b16 %v1006, %v1005
        %v1076 = vpack.c.b16 %v1008, %v1007
        %v1077 = vpack.c.b16 %v1010, %v1009
        %v1078 = vpack.c.b16 %v1012, %v1011
        %v1079 = vpack.c.b16 %v1014, %v1013
        %v1080 = vpack.c.b16 %v1016, %v1015
        %v1081 = vpack.c.b16 %v1018, %v1017
        %v1082 = vpack.c.b16 %v1020, %v1019
        %v1083 = vpack.c.b16 %v1022, %v1021
        %v1084 = vpack.c.b16 %v1024, %v1023
        %v1085 = vpack.c.b16 %v1026, %v1025
        %v1086 = vpack.c.b16 %v1028, %v1027
        %v1087 = vpack.c.b16 %v1030, %v1029
        %v1088 = vpack.c.b16 %v1032, %v1031
        %v1089 = vpack.c.b16 %v1034, %v1033
        %v1090 = vpack.c.b16 %v1036, %v1035
        %v1091 = vpack.c.b16 %v1038, %v1037
        %v1092 = vpack.c.b16 %v1040, %v1039
        %v1093 = vpack.c.b16 %v1042, %v1041
        %v1094 = vpack.c.b16 %v1044, %v1043
        %v1095 = vpack.c.b16 %v1046, %v1045
        %v1096 = vpack.c.b16 %v1048, %v1047
        %v1097 = vpack.c.b16 %v1050, %v1049
        %v1098 = vpack.c.b16 %v1052, %v1051
        %v1099 = vpack.c.b16 %v1054, %v1053
        %v1100 = vpack.c.b16 %v1056, %v1055
        %v1101 = vpack.c.b16 %v1058, %v1057
        %v1102 = vpack.c.b16 %v1060, %v1059
        %v1103 = vpack.c.b16 %v1062, %v1061
        %v1104 = vpack.c.b16 %v1064, %v1063
        %1145 = vmatpush.bf16.msra.mxu0 %v1072
        %1146 = vmatpush.bf16.msra.mxu0 %v1071
        %1147 = vmatpush.bf16.msra.mxu0 %v1070
        %1148 = vmatpush.bf16.msra.mxu0 %v1069
        %1149 = vmatpush.bf16.msra.mxu0 %v1068
        %1150 = vmatpush.bf16.msra.mxu0 %v1067
        %1151 = vmatpush.bf16.msra.mxu0 %v1066
        %1152 = vmatpush.bf16.msra.mxu0 %v1065
        %1153 = vmatmul.bf16.gmra.mxu0 %v819
        %v1154 = vpop.f32.mrf.mxu0
        %v1155 = vadd.f32 %v904, %v1154
        %v1156 = vpop.f32.mrf.mxu0
        %1157 = vdwg.mxu0
        %1158 = vmatpush.bf16.msra.mxu0 %v1080
        %1159 = vmatpush.bf16.msra.mxu0 %v1079
        %1160 = vmatpush.bf16.msra.mxu0 %v1078
        %1161 = vmatpush.bf16.msra.mxu0 %v1077
        %1162 = vmatpush.bf16.msra.mxu0 %v1076
        %1163 = vmatpush.bf16.msra.mxu0 %v1075
        %1164 = vmatpush.bf16.msra.mxu0 %v1074
        %1165 = vmatpush.bf16.msra.mxu0 %v1073
        %1166 = vmatmul.bf16.gmra.mxu0 %v820
        %v1167 = vpop.f32.mrf.mxu0
        %v1168 = vadd.f32 %v1155, %v1167
        %v1169 = vpop.f32.mrf.mxu0
        %1170 = vdwg.mxu0
        %1171 = vmatpush.bf16.msra.mxu0 %v1088
        %1172 = vmatpush.bf16.msra.mxu0 %v1087
        %1173 = vmatpush.bf16.msra.mxu0 %v1086
        %1174 = vmatpush.bf16.msra.mxu0 %v1085
        %1175 = vmatpush.bf16.msra.mxu0 %v1084
        %1176 = vmatpush.bf16.msra.mxu0 %v1083
        %1177 = vmatpush.bf16.msra.mxu0 %v1082
        %1178 = vmatpush.bf16.msra.mxu0 %v1081
        %1179 = vmatmul.bf16.gmra.mxu0 %v821
        %v1180 = vpop.f32.mrf.mxu0
        %v1181 = vadd.f32 %v1168, %v1180
        %v1182 = vpop.f32.mrf.mxu0
        %1183 = vdwg.mxu0
        %1184 = vmatpush.bf16.msra.mxu0 %v1096
        %1185 = vmatpush.bf16.msra.mxu0 %v1095
        %1186 = vmatpush.bf16.msra.mxu0 %v1094
        %1187 = vmatpush.bf16.msra.mxu0 %v1093
        %1188 = vmatpush.bf16.msra.mxu0 %v1092
        %1189 = vmatpush.bf16.msra.mxu0 %v1091
        %1190 = vmatpush.bf16.msra.mxu0 %v1090
        %1191 = vmatpush.bf16.msra.mxu0 %v1089
        %1192 = vmatmul.bf16.gmra.mxu0 %v822
        %v1193 = vpop.f32.mrf.mxu0
        %v1194 = vadd.f32 %v1181, %v1193
        %v1195 = vpop.f32.mrf.mxu0
        %1196 = vdwg.mxu0
        %1197 = vmatpush.bf16.msra.mxu0 %v1104
        %1198 = vmatpush.bf16.msra.mxu0 %v1103
        %1199 = vmatpush.bf16.msra.mxu0 %v1102
        %1200 = vmatpush.bf16.msra.mxu0 %v1101
        %1201 = vmatpush.bf16.msra.mxu0 %v1100
        %1202 = vmatpush.bf16.msra.mxu0 %v1099
        %1203 = vmatpush.bf16.msra.mxu0 %v1098
        %1204 = vmatpush.bf16.msra.mxu0 %v1097
        %1205 = vmatmul.bf16.gmra.mxu0 %v823
        %v1206 = vpop.f32.mrf.mxu0
        %v1207 = vadd.f32 %v1194, %v1206
        %v1208 = vpop.f32.mrf.mxu0
        %1209 = vdwg.mxu0
        %v1210 = vld [vmem:[%s3] sm:$0xff]
        %v1211 = vld [vmem:[%s3 + $0x8] sm:$0xff]
        %v1212 = vld [vmem:[%s3 + $0x10] sm:$0xff]
        %v1213 = vld [vmem:[%s3 + $0x18] sm:$0xff]
        %v1214 = vlaneseq
        %v1215 = vand.u32 %v1214, 127
        %vm1216 = vcmp.lt.s32.totalorder %v1215, 5
        %v1217 = vsel %vm1216, 0.0, -1e+30
        %v1218 = vld [vmem:[%s4] sm:$0x1]
        %v1219 = vld [vmem:[%s5] sm:$0x1]
        %vm1220 = vcmask 261120
        %v1221 = vsel %vm1220, %v1207, 0.0
        %1222 = vadd.xlane.f32.xlu0 %v1221
        %v1223 = vpop.xlane.xlu0 %1222
        %v1224 = vrcp.pop 32.0
        %v1225 = vmul.f32 32.0, %v1224
        %v1226 = vsub.f32 1.0, %v1225
        %v1227 = vmul.f32 %v1224, %v1226
        %v1228 = vadd.f32 %v1224, %v1227
        %vm1229 = vweird.f32 %v1224
        %v1230 = vsel %vm1229, %v1224, %v1228
        %v1231 = vmul.f32 %v1223, %v1230
        %v1232 = vsub.f32 %v1207, %v1231
        %v1233 = vmul.f32 %v1232, %v1232
        %v1234 = vsel %vm1220, %v1233, 0.0
        %1235 = vadd.xlane.f32.xlu0 %v1234
        %v1236 = vpop.xlane.xlu0 %1235
        %v1237 = vmul.f32 %v1236, %v1230
        %v1238 = vadd.f32 %v1237, 1e-06
        %v1239 = vrsqrt.pop %v1238
        %v1240 = vmul.f32 %v1239, %v1238
        %v1241 = vmul.f32 %v1240, %v1239
        %v1242 = vmul.f32 0.5, %v1241
        %v1243 = vsub.f32 1.5, %v1242
        %v1244 = vmul.f32 %v1239, %v1243
        %vm1245 = vweird.f32 %v1238
        %vm1246 = vweird.f32 %v1239
        %vm1247 = vmor %vm1245, %vm1246
        %v1248 = vsel %vm1247, %v1239, %v1244
        %v1249 = vmul.f32 %v1232, %v1248
        %v1251 = vperm.slane %v1218, 0
        %v1253 = vmul.f32 %v1249, %v1251
        %v1255 = vperm.slane %v1219, 0
        %v1257 = vadd.f32 %v1253, %v1255
        %v1258 = vpack.c.bf16 %v1257, %v1257
        %v1259 = vld [vmem:[%s6] sm:$0xf]
        %v1260 = vld [vmem:[%s6 + $0x4] sm:$0xf]
        %v1261 = vld [vmem:[%s6 + $0x8] sm:$0xf]
        %v1262 = vld [vmem:[%s6 + $0xc] sm:$0xf]
        %v1263 = vld [vmem:[%s7] sm:$0x1]
        %v1265 = vperm.slane %v1263, 0
        %v1271 = vunpack.c.l.b16 %v1259
        %v1272 = vunpack.c.l.b16 %v1260
        %v1273 = vunpack.c.l.b16 %v1261
        %v1274 = vunpack.c.l.b16 %v1262
        %v1275 = vpack.c.b16 %v1272, %v1271
        %v1276 = vpack.c.b16 %v1274, %v1273
        %v1280 = vsel %vm1220, %v1258, 0
        %1282 = vmatpush.bf16.msra.mxu0 0
        %1283 = vmatpush.bf16.msra.mxu0 0
        %1284 = vmatpush.bf16.msra.mxu0 0
        %1285 = vmatpush.bf16.msra.mxu0 0
        %1286 = vmatpush.bf16.msra.mxu0 0
        %1287 = vmatpush.bf16.msra.mxu0 0
        %1288 = vmatpush.bf16.msra.mxu0 %v1276
        %1289 = vmatpush.bf16.msra.mxu0 %v1275
        %1290 = vmatmul.bf16.gmra.mxu0 %v1280
        %v1291 = vpop.f32.mrf.mxu0
        %v1292 = vadd.f32 %v1265, %v1291
        %v1293 = vpop.f32.mrf.mxu0
        %1294 = vdwg.mxu0
        %v1295 = vpack.c.bf16 %v1292, %v1292
        %v1296 = vmul.f32 %v1292, %v1210
        %v1297 = vmul.f32 %v1292, %v1211
        %v1298 = vmul.f32 %v1292, %v1212
        %v1299 = vmul.f32 %v1292, %v1213
        %v1300 = vpack.c.bf16 %v1297, %v1296
        %v1301 = vpack.c.bf16 %v1299, %v1298
        %1303 = vrot.lane.b32.xlu0 %v1295, 96
        %v1304 = vpop.permute.xlu0 %1303
        %v1306 = vsel %vm1220, %v1300, 0
        %v1309 = vsel %vm1220, %v1301, 0
        %v1312 = vsel %vm1220, %v1304, 0
        %1314 = vmatpush.bf16.xpose.msra.mxu0 0
        %1315 = vmatpush.bf16.xpose.msra.mxu0 0
        %1316 = vmatpush.bf16.xpose.msra.mxu0 0
        %1317 = vmatpush.bf16.xpose.msra.mxu0 0
        %1318 = vmatpush.bf16.xpose.msra.mxu0 0
        %1319 = vmatpush.bf16.xpose.msra.mxu0 0
        %1320 = vmatpush.bf16.xpose.msra.mxu0 0
        %1321 = vmatpush.bf16.xpose.msra.mxu0 %v1312
        %1322 = vmatmul.bf16.gmra.mxu0 %v1306
        %v1323 = vpop.f32.mrf.mxu0
        %v1324 = vadd.f32 0.0, %v1323
        %v1325 = vpop.f32.mrf.mxu0
        %v1326 = vadd.f32 0.0, %v1325
        %1327 = vmatmul.bf16.gmra.mxu0 %v1309
        %v1328 = vpop.f32.mrf.mxu0
        %v1329 = vadd.f32 0.0, %v1328
        %v1330 = vpop.f32.mrf.mxu0
        %v1331 = vadd.f32 0.0, %v1330
        %1332 = vdwg.mxu0
        %v1333 = vmul.f32 %v1324, 0.35355338
        %v1334 = vmul.f32 %v1326, 0.35355338
        %v1335 = vmul.f32 %v1329, 0.35355338
        %v1336 = vmul.f32 %v1331, 0.35355338
        %v1337 = vadd.f32 %v1333, %v1217
        %v1338 = vadd.f32 %v1334, %v1217
        %v1339 = vadd.f32 %v1335, %v1217
        %v1340 = vadd.f32 %v1336, %v1217
        %vm1341 = vcmask 64512
        %v1342 = vsel %vm1341, %v1337, -inf
        %1343 = vmax.xlane.f32.xlu0 %v1342
        %v1344 = vpop.xlane.xlu0 %1343
        %v1345 = vsel %vm1341, %v1338, -inf
        %1346 = vmax.xlane.f32.xlu0 %v1345
        %v1347 = vpop.xlane.xlu0 %1346
        %v1348 = vsel %vm1341, %v1339, -inf
        %1349 = vmax.xlane.f32.xlu0 %v1348
        %v1350 = vpop.xlane.xlu0 %1349
        %v1351 = vsel %vm1341, %v1340, -inf
        %1352 = vmax.xlane.f32.xlu0 %v1351
        %v1353 = vpop.xlane.xlu0 %1352
        %v1354 = vsub.f32 %v1337, %v1344
        %v1355 = vsub.f32 %v1338, %v1347
        %v1356 = vsub.f32 %v1339, %v1350
        %v1357 = vsub.f32 %v1340, %v1353
        %v1358 = vmul.f32 %v1354, 1.442695
        %v1359 = vpow.pop %v1358
        %v1360 = vmul.f32 %v1355, 1.442695
        %v1361 = vpow.pop %v1360
        %v1362 = vmul.f32 %v1356, 1.442695
        %v1363 = vpow.pop %v1362
        %v1364 = vmul.f32 %v1357, 1.442695
        %v1365 = vpow.pop %v1364
        %v1366 = vsel %vm1341, %v1359, 0.0
        %1367 = vadd.xlane.f32.xlu0 %v1366
        %v1368 = vpop.xlane.xlu0 %1367
        %v1369 = vsel %vm1341, %v1361, 0.0
        %1370 = vadd.xlane.f32.xlu0 %v1369
        %v1371 = vpop.xlane.xlu0 %1370
        %v1372 = vsel %vm1341, %v1363, 0.0
        %1373 = vadd.xlane.f32.xlu0 %v1372
        %v1374 = vpop.xlane.xlu0 %1373
        %v1375 = vsel %vm1341, %v1365, 0.0
        %1376 = vadd.xlane.f32.xlu0 %v1375
        %v1377 = vpop.xlane.xlu0 %1376
        %v1378 = vrcp.pop %v1368
        %v1379 = vmul.f32 %v1368, %v1378
        %v1380 = vsub.f32 1.0, %v1379
        %v1381 = vmul.f32 %v1378, %v1380
        %v1382 = vadd.f32 %v1378, %v1381
        %vm1383 = vweird.f32 %v1368
        %vm1384 = vweird.f32 %v1378
        %vm1385 = vmor %vm1383, %vm1384
        %v1386 = vsel %vm1385, %v1378, %v1382
        %v1387 = vand.u32 2147483647, %v1368
        %vm1388 = vcmp.eq.f32.partialorder %v1387, 8.507059e+37
        %v1389 = vand.u32 %v1368, 2147483648
        %v1390 = vor.u32 1.1754944e-38, %v1389
        %v1391 = vsel %vm1388, %v1390, %v1386
        %v1392 = vmul.f32 %v1359, %v1391
        %v1393 = vrcp.pop %v1371
        %v1394 = vmul.f32 %v1371, %v1393
        %v1395 = vsub.f32 1.0, %v1394
        %v1396 = vmul.f32 %v1393, %v1395
        %v1397 = vadd.f32 %v1393, %v1396
        %vm1398 = vweird.f32 %v1371
        %vm1399 = vweird.f32 %v1393
        %vm1400 = vmor %vm1398, %vm1399
        %v1401 = vsel %vm1400, %v1393, %v1397
        %v1402 = vand.u32 2147483647, %v1371
        %vm1403 = vcmp.eq.f32.partialorder %v1402, 8.507059e+37
        %v1404 = vand.u32 %v1371, 2147483648
        %v1405 = vor.u32 1.1754944e-38, %v1404
        %v1406 = vsel %vm1403, %v1405, %v1401
        %v1407 = vmul.f32 %v1361, %v1406
        %v1408 = vrcp.pop %v1374
        %v1409 = vmul.f32 %v1374, %v1408
        %v1410 = vsub.f32 1.0, %v1409
        %v1411 = vmul.f32 %v1408, %v1410
        %v1412 = vadd.f32 %v1408, %v1411
        %vm1413 = vweird.f32 %v1374
        %vm1414 = vweird.f32 %v1408
        %vm1415 = vmor %vm1413, %vm1414
        %v1416 = vsel %vm1415, %v1408, %v1412
        %v1417 = vand.u32 2147483647, %v1374
        %vm1418 = vcmp.eq.f32.partialorder %v1417, 8.507059e+37
        %v1419 = vand.u32 %v1374, 2147483648
        %v1420 = vor.u32 1.1754944e-38, %v1419
        %v1421 = vsel %vm1418, %v1420, %v1416
        %v1422 = vmul.f32 %v1363, %v1421
        %v1423 = vrcp.pop %v1377
        %v1424 = vmul.f32 %v1377, %v1423
        %v1425 = vsub.f32 1.0, %v1424
        %v1426 = vmul.f32 %v1423, %v1425
        %v1427 = vadd.f32 %v1423, %v1426
        %vm1428 = vweird.f32 %v1377
        %vm1429 = vweird.f32 %v1423
        %vm1430 = vmor %vm1428, %vm1429
        %v1431 = vsel %vm1430, %v1423, %v1427
        %v1432 = vand.u32 2147483647, %v1377
        %vm1433 = vcmp.eq.f32.partialorder %v1432, 8.507059e+37
        %v1434 = vand.u32 %v1377, 2147483648
        %v1435 = vor.u32 1.1754944e-38, %v1434
        %v1436 = vsel %vm1433, %v1435, %v1431
        %v1437 = vmul.f32 %v1365, %v1436
        %v1438 = vpack.c.bf16 %v1407, %v1392
        %v1439 = vpack.c.bf16 %v1437, %v1422
        %1440 = vrot.lane.b32.xlu0 %v1295, 64
        %v1441 = vpop.permute.xlu0 %1440
        %v1443 = vsel %vm1341, %v1438, 0
        %v1446 = vsel %vm1341, %v1439, 0
        %vm1448 = vcmask 1043456
        %v1450 = vsel %vm1448, %v1441, 0
        %1452 = vmatpush.bf16.msra.mxu0 0
        %1453 = vmatpush.bf16.msra.mxu0 0
        %1454 = vmatpush.bf16.msra.mxu0 0
        %1455 = vmatpush.bf16.msra.mxu0 0
        %1456 = vmatpush.bf16.msra.mxu0 0
        %1457 = vmatpush.bf16.msra.mxu0 0
        %1458 = vmatpush.bf16.msra.mxu0 0
        %1459 = vmatpush.bf16.msra.mxu0 %v1450
        %1460 = vmatmul.bf16.gmra.mxu0 %v1443
        %v1461 = vpop.f32.mrf.mxu0
        %v1462 = vadd.f32 0.0, %v1461
        %v1463 = vpop.f32.mrf.mxu0
        %v1464 = vadd.f32 0.0, %v1463
        %1465 = vmatmul.bf16.gmra.mxu0 %v1446
        %v1466 = vpop.f32.mrf.mxu0
        %v1467 = vadd.f32 0.0, %v1466
        %v1468 = vpop.f32.mrf.mxu0
        %v1469 = vadd.f32 0.0, %v1468
        %1470 = vdwg.mxu0
        %v1471 = vmul.f32 %v1462, %v1210
        %v1472 = vmul.f32 %v1464, %v1211
        %v1473 = vmul.f32 %v1467, %v1212
        %v1474 = vmul.f32 %v1469, %v1213
        %v1475 = vadd.f32 %v1471, %v1472
        %v1476 = vadd.f32 %v1475, %v1473
        %v1477 = vadd.f32 %v1476, %v1474
        %v1478 = vpack.c.bf16 %v1477, %v1477
        %v1479 = vld [vmem:[%s8] sm:$0xf]
        %v1480 = vld [vmem:[%s8 + $0x4] sm:$0xf]
        %v1481 = vld [vmem:[%s8 + $0x8] sm:$0xf]
        %v1482 = vld [vmem:[%s8 + $0xc] sm:$0xf]
        %v1487 = vunpack.c.l.b16 %v1479
        %v1488 = vunpack.c.l.b16 %v1480
        %v1489 = vunpack.c.l.b16 %v1481
        %v1490 = vunpack.c.l.b16 %v1482
        %v1491 = vpack.c.b16 %v1488, %v1487
        %v1492 = vpack.c.b16 %v1490, %v1489
        %v1496 = vsel %vm1220, %v1478, 0
        %1498 = vmatpush.bf16.msra.mxu0 0
        %1499 = vmatpush.bf16.msra.mxu0 0
        %1500 = vmatpush.bf16.msra.mxu0 0
        %1501 = vmatpush.bf16.msra.mxu0 0
        %1502 = vmatpush.bf16.msra.mxu0 0
        %1503 = vmatpush.bf16.msra.mxu0 0
        %1504 = vmatpush.bf16.msra.mxu0 %v1492
        %1505 = vmatpush.bf16.msra.mxu0 %v1491
        %1506 = vmatmul.bf16.gmra.mxu0 %v1496
        %v1507 = vpop.f32.mrf.mxu0
        %v1508 = vadd.f32 0.0, %v1507
        %v1509 = vpop.f32.mrf.mxu0
        %1510 = vdwg.mxu0
        %v1511 = vadd.f32 %v1207, %v1508
        %v1512 = vld [vmem:[%s9] sm:$0x1]
        %v1514 = vperm.slane %v1512, 0
        %v1516 = vadd.f32 %v1511, %v1514
        %v1517 = vld [vmem:[%s10] sm:$0x1]
        %v1518 = vld [vmem:[%s11] sm:$0x1]
        %v1519 = vsel %vm1220, %v1516, 0.0
        %1520 = vadd.xlane.f32.xlu0 %v1519
        %v1521 = vpop.xlane.xlu0 %1520
        %v1522 = vmul.f32 %v1521, %v1230
        %v1523 = vsub.f32 %v1516, %v1522
        %v1524 = vmul.f32 %v1523, %v1523
        %v1525 = vsel %vm1220, %v1524, 0.0
        %1526 = vadd.xlane.f32.xlu0 %v1525
        %v1527 = vpop.xlane.xlu0 %1526
        %v1528 = vmul.f32 %v1527, %v1230
        %v1529 = vadd.f32 %v1528, 1e-06
        %v1530 = vrsqrt.pop %v1529
        %v1531 = vmul.f32 %v1530, %v1529
        %v1532 = vmul.f32 %v1531, %v1530
        %v1533 = vmul.f32 0.5, %v1532
        %v1534 = vsub.f32 1.5, %v1533
        %v1535 = vmul.f32 %v1530, %v1534
        %vm1536 = vweird.f32 %v1529
        %vm1537 = vweird.f32 %v1530
        %vm1538 = vmor %vm1536, %vm1537
        %v1539 = vsel %vm1538, %v1530, %v1535
        %v1540 = vmul.f32 %v1523, %v1539
        %v1542 = vperm.slane %v1517, 0
        %v1544 = vmul.f32 %v1540, %v1542
        %v1546 = vperm.slane %v1518, 0
        %v1548 = vadd.f32 %v1544, %v1546
        %v1549 = vpack.c.bf16 %v1548, %v1548
        %v1550 = vld [vmem:[%s12] sm:$0xf]
        %v1551 = vld [vmem:[%s12 + $0x4] sm:$0xf]
        %v1552 = vld [vmem:[%s12 + $0x8] sm:$0xf]
        %v1553 = vld [vmem:[%s12 + $0xc] sm:$0xf]
        %v1554 = vld [vmem:[%s13] sm:$0x1]
        %v1556 = vperm.slane %v1554, 0
        %v1562 = vunpack.c.l.b16 %v1550
        %v1563 = vunpack.c.l.b16 %v1551
        %v1564 = vunpack.c.l.b16 %v1552
        %v1565 = vunpack.c.l.b16 %v1553
        %v1566 = vpack.c.b16 %v1563, %v1562
        %v1567 = vpack.c.b16 %v1565, %v1564
        %v1571 = vsel %vm1220, %v1549, 0
        %1573 = vmatpush.bf16.msra.mxu0 0
        %1574 = vmatpush.bf16.msra.mxu0 0
        %1575 = vmatpush.bf16.msra.mxu0 0
        %1576 = vmatpush.bf16.msra.mxu0 0
        %1577 = vmatpush.bf16.msra.mxu0 0
        %1578 = vmatpush.bf16.msra.mxu0 0
        %1579 = vmatpush.bf16.msra.mxu0 %v1567
        %1580 = vmatpush.bf16.msra.mxu0 %v1566
        %1581 = vmatmul.bf16.gmra.mxu0 %v1571
        %v1582 = vpop.f32.mrf.mxu0
        %v1583 = vadd.f32 %v1556, %v1582
        %v1584 = vpop.f32.mrf.mxu0
        %1585 = vdwg.mxu0
        %v1586 = vmul.f32 %v1583, 0.5
        %v1587 = vmul.f32 %v1583, 0.70710677
        %v1588 = vand.u32 2147483647, %v1587
        %v1589 = vmul.f32 %v1588, 0.3275911
        %v1590 = vadd.f32 %v1589, 1.0
        %v1591 = vrcp.pop %v1590
        %v1592 = vmul.f32 %v1590, %v1591
        %v1593 = vsub.f32 1.0, %v1592
        %v1594 = vmul.f32 %v1591, %v1593
        %v1595 = vadd.f32 %v1591, %v1594
        %vm1596 = vweird.f32 %v1590
        %vm1597 = vweird.f32 %v1591
        %vm1598 = vmor %vm1596, %vm1597
        %v1599 = vsel %vm1598, %v1591, %v1595
        %v1600 = vand.u32 2147483647, %v1590
        %vm1601 = vcmp.eq.f32.partialorder %v1600, 8.507059e+37
        %v1602 = vand.u32 %v1590, 2147483648
        %v1603 = vor.u32 1.1754944e-38, %v1602
        %v1604 = vsel %vm1601, %v1603, %v1599
        %v1605 = vmul.f32 1.0, %v1604
        %v1606 = vmul.f32 %v1605, 1.0614054
        %v1607 = vadd.f32 %v1606, -1.4531521
        %v1608 = vmul.f32 %v1607, %v1605
        %v1609 = vadd.f32 %v1608, 1.4214138
        %v1610 = vmul.f32 %v1609, %v1605
        %v1611 = vadd.f32 %v1610, -0.28449672
        %v1612 = vmul.f32 %v1611, %v1605
        %v1613 = vadd.f32 %v1612, 0.2548296
        %v1614 = vmul.f32 %v1613, %v1605
        %v1615 = vsub.f32 0.0, %v1588
        %v1616 = vmul.f32 %v1615, %v1588
        %v1617 = vmul.f32 %v1616, 1.442695
        %v1618 = vpow.pop %v1617
        %v1619 = vmul.f32 %v1614, %v1618
        %v1620 = vsub.f32 1.0, %v1619
        %vm1621 = vcmp.ge.f32.partialorder %v1587, 0.0
        %v1622 = vsub.f32 0.0, %v1620
        %v1623 = vsel %vm1621, %v1620, %v1622
        %v1624 = vadd.f32 %v1623, 1.0
        %v1625 = vmul.f32 %v1586, %v1624
        %v1626 = vpack.c.bf16 %v1625, %v1625
        %v1627 = vld [vmem:[%s14] sm:$0xf]
        %v1628 = vld [vmem:[%s14 + $0x4] sm:$0xf]
        %v1629 = vld [vmem:[%s14 + $0x8] sm:$0xf]
        %v1630 = vld [vmem:[%s14 + $0xc] sm:$0xf]
        %v1631 = vld [vmem:[%s14 + $0x10] sm:$0xf]
        %v1632 = vld [vmem:[%s14 + $0x14] sm:$0xf]
        %v1633 = vld [vmem:[%s14 + $0x18] sm:$0xf]
        %v1634 = vld [vmem:[%s14 + $0x1c] sm:$0xf]
        %v1635 = vld [vmem:[%s14 + $0x20] sm:$0xf]
        %v1636 = vld [vmem:[%s14 + $0x24] sm:$0xf]
        %v1637 = vld [vmem:[%s14 + $0x28] sm:$0xf]
        %v1638 = vld [vmem:[%s14 + $0x2c] sm:$0xf]
        %v1639 = vld [vmem:[%s14 + $0x30] sm:$0xf]
        %v1640 = vld [vmem:[%s14 + $0x34] sm:$0xf]
        %v1641 = vld [vmem:[%s14 + $0x38] sm:$0xf]
        %v1642 = vld [vmem:[%s14 + $0x3c] sm:$0xf]
        %v1659 = vunpack.c.l.b16 %v1627
        %v1660 = vunpack.c.l.b16 %v1628
        %v1661 = vunpack.c.l.b16 %v1629
        %v1662 = vunpack.c.l.b16 %v1630
        %v1663 = vunpack.c.l.b16 %v1631
        %v1664 = vunpack.c.l.b16 %v1632
        %v1665 = vunpack.c.l.b16 %v1633
        %v1666 = vunpack.c.l.b16 %v1634
        %v1667 = vunpack.c.l.b16 %v1635
        %v1668 = vunpack.c.l.b16 %v1636
        %v1669 = vunpack.c.l.b16 %v1637
        %v1670 = vunpack.c.l.b16 %v1638
        %v1671 = vunpack.c.l.b16 %v1639
        %v1672 = vunpack.c.l.b16 %v1640
        %v1673 = vunpack.c.l.b16 %v1641
        %v1674 = vunpack.c.l.b16 %v1642
        %v1675 = vpack.c.b16 %v1660, %v1659
        %v1676 = vpack.c.b16 %v1662, %v1661
        %v1677 = vpack.c.b16 %v1664, %v1663
        %v1678 = vpack.c.b16 %v1666, %v1665
        %v1679 = vpack.c.b16 %v1668, %v1667
        %v1680 = vpack.c.b16 %v1670, %v1669
        %v1681 = vpack.c.b16 %v1672, %v1671
        %v1682 = vpack.c.b16 %v1674, %v1673
        %1691 = vmatpush.bf16.msra.mxu0 %v1682
        %1692 = vmatpush.bf16.msra.mxu0 %v1681
        %1693 = vmatpush.bf16.msra.mxu0 %v1680
        %1694 = vmatpush.bf16.msra.mxu0 %v1679
        %1695 = vmatpush.bf16.msra.mxu0 %v1678
        %1696 = vmatpush.bf16.msra.mxu0 %v1677
        %1697 = vmatpush.bf16.msra.mxu0 %v1676
        %1698 = vmatpush.bf16.msra.mxu0 %v1675
        %1699 = vmatmul.bf16.gmra.mxu0 %v1626
        %v1700 = vpop.f32.mrf.mxu0
        %v1701 = vadd.f32 0.0, %v1700
        %v1702 = vpop.f32.mrf.mxu0
        %1703 = vdwg.mxu0
        %v1704 = vadd.f32 %v1516, %v1701
        %v1705 = vld [vmem:[%s15] sm:$0x1]
        %v1707 = vperm.slane %v1705, 0
        %v1709 = vadd.f32 %v1704, %v1707
        %s1710 = scalar_lea.vmem %s4, 1
        %v1711 = vld [vmem:[%s1710] sm:$0x1]
        %s1712 = scalar_lea.vmem %s5, 1
        %v1713 = vld [vmem:[%s1712] sm:$0x1]
        %v1714 = vsel %vm1220, %v1709, 0.0
        %1715 = vadd.xlane.f32.xlu0 %v1714
        %v1716 = vpop.xlane.xlu0 %1715
        %v1717 = vmul.f32 %v1716, %v1230
        %v1718 = vsub.f32 %v1709, %v1717
        %v1719 = vmul.f32 %v1718, %v1718
        %v1720 = vsel %vm1220, %v1719, 0.0
        %1721 = vadd.xlane.f32.xlu0 %v1720
        %v1722 = vpop.xlane.xlu0 %1721
        %v1723 = vmul.f32 %v1722, %v1230
        %v1724 = vadd.f32 %v1723, 1e-06
        %v1725 = vrsqrt.pop %v1724
        %v1726 = vmul.f32 %v1725, %v1724
        %v1727 = vmul.f32 %v1726, %v1725
        %v1728 = vmul.f32 0.5, %v1727
        %v1729 = vsub.f32 1.5, %v1728
        %v1730 = vmul.f32 %v1725, %v1729
        %vm1731 = vweird.f32 %v1724
        %vm1732 = vweird.f32 %v1725
        %vm1733 = vmor %vm1731, %vm1732
        %v1734 = vsel %vm1733, %v1725, %v1730
        %v1735 = vmul.f32 %v1718, %v1734
        %v1737 = vperm.slane %v1711, 0
        %v1739 = vmul.f32 %v1735, %v1737
        %v1741 = vperm.slane %v1713, 0
        %v1743 = vadd.f32 %v1739, %v1741
        %v1744 = vpack.c.bf16 %v1743, %v1743
        %s1745 = scalar_lea.vmem %s6, 16
        %v1746 = vld [vmem:[%s1745] sm:$0xf]
        %v1747 = vld [vmem:[%s1745 + $0x4] sm:$0xf]
        %v1748 = vld [vmem:[%s1745 + $0x8] sm:$0xf]
        %v1749 = vld [vmem:[%s1745 + $0xc] sm:$0xf]
        %s1750 = scalar_lea.vmem %s7, 1
        %v1751 = vld [vmem:[%s1750] sm:$0x1]
        %v1753 = vperm.slane %v1751, 0
        %v1759 = vunpack.c.l.b16 %v1746
        %v1760 = vunpack.c.l.b16 %v1747
        %v1761 = vunpack.c.l.b16 %v1748
        %v1762 = vunpack.c.l.b16 %v1749
        %v1763 = vpack.c.b16 %v1760, %v1759
        %v1764 = vpack.c.b16 %v1762, %v1761
        %v1768 = vsel %vm1220, %v1744, 0
        %1770 = vmatpush.bf16.msra.mxu0 0
        %1771 = vmatpush.bf16.msra.mxu0 0
        %1772 = vmatpush.bf16.msra.mxu0 0
        %1773 = vmatpush.bf16.msra.mxu0 0
        %1774 = vmatpush.bf16.msra.mxu0 0
        %1775 = vmatpush.bf16.msra.mxu0 0
        %1776 = vmatpush.bf16.msra.mxu0 %v1764
        %1777 = vmatpush.bf16.msra.mxu0 %v1763
        %1778 = vmatmul.bf16.gmra.mxu0 %v1768
        %v1779 = vpop.f32.mrf.mxu0
        %v1780 = vadd.f32 %v1753, %v1779
        %v1781 = vpop.f32.mrf.mxu0
        %1782 = vdwg.mxu0
        %v1783 = vpack.c.bf16 %v1780, %v1780
        %v1784 = vmul.f32 %v1780, %v1210
        %v1785 = vmul.f32 %v1780, %v1211
        %v1786 = vmul.f32 %v1780, %v1212
        %v1787 = vmul.f32 %v1780, %v1213
        %v1788 = vpack.c.bf16 %v1785, %v1784
        %v1789 = vpack.c.bf16 %v1787, %v1786
        %1791 = vrot.lane.b32.xlu0 %v1783, 96
        %v1792 = vpop.permute.xlu0 %1791
        %v1794 = vsel %vm1220, %v1788, 0
        %v1797 = vsel %vm1220, %v1789, 0
        %v1800 = vsel %vm1220, %v1792, 0
        %1802 = vmatpush.bf16.xpose.msra.mxu0 0
        %1803 = vmatpush.bf16.xpose.msra.mxu0 0
        %1804 = vmatpush.bf16.xpose.msra.mxu0 0
        %1805 = vmatpush.bf16.xpose.msra.mxu0 0
        %1806 = vmatpush.bf16.xpose.msra.mxu0 0
        %1807 = vmatpush.bf16.xpose.msra.mxu0 0
        %1808 = vmatpush.bf16.xpose.msra.mxu0 0
        %1809 = vmatpush.bf16.xpose.msra.mxu0 %v1800
        %1810 = vmatmul.bf16.gmra.mxu0 %v1794
        %v1811 = vpop.f32.mrf.mxu0
        %v1812 = vadd.f32 0.0, %v1811
        %v1813 = vpop.f32.mrf.mxu0
        %v1814 = vadd.f32 0.0, %v1813
        %1815 = vmatmul.bf16.gmra.mxu0 %v1797
        %v1816 = vpop.f32.mrf.mxu0
        %v1817 = vadd.f32 0.0, %v1816
        %v1818 = vpop.f32.mrf.mxu0
        %v1819 = vadd.f32 0.0, %v1818
        %1820 = vdwg.mxu0
        %v1821 = vmul.f32 %v1812, 0.35355338
        %v1822 = vmul.f32 %v1814, 0.35355338
        %v1823 = vmul.f32 %v1817, 0.35355338
        %v1824 = vmul.f32 %v1819, 0.35355338
        %v1825 = vadd.f32 %v1821, %v1217
        %v1826 = vadd.f32 %v1822, %v1217
        %v1827 = vadd.f32 %v1823, %v1217
        %v1828 = vadd.f32 %v1824, %v1217
        %v1829 = vsel %vm1341, %v1825, -inf
        %1830 = vmax.xlane.f32.xlu0 %v1829
        %v1831 = vpop.xlane.xlu0 %1830
        %v1832 = vsel %vm1341, %v1826, -inf
        %1833 = vmax.xlane.f32.xlu0 %v1832
        %v1834 = vpop.xlane.xlu0 %1833
        %v1835 = vsel %vm1341, %v1827, -inf
        %1836 = vmax.xlane.f32.xlu0 %v1835
        %v1837 = vpop.xlane.xlu0 %1836
        %v1838 = vsel %vm1341, %v1828, -inf
        %1839 = vmax.xlane.f32.xlu0 %v1838
        %v1840 = vpop.xlane.xlu0 %1839
        %v1841 = vsub.f32 %v1825, %v1831
        %v1842 = vsub.f32 %v1826, %v1834
        %v1843 = vsub.f32 %v1827, %v1837
        %v1844 = vsub.f32 %v1828, %v1840
        %v1845 = vmul.f32 %v1841, 1.442695
        %v1846 = vpow.pop %v1845
        %v1847 = vmul.f32 %v1842, 1.442695
        %v1848 = vpow.pop %v1847
        %v1849 = vmul.f32 %v1843, 1.442695
        %v1850 = vpow.pop %v1849
        %v1851 = vmul.f32 %v1844, 1.442695
        %v1852 = vpow.pop %v1851
        %v1853 = vsel %vm1341, %v1846, 0.0
        %1854 = vadd.xlane.f32.xlu0 %v1853
        %v1855 = vpop.xlane.xlu0 %1854
        %v1856 = vsel %vm1341, %v1848, 0.0
        %1857 = vadd.xlane.f32.xlu0 %v1856
        %v1858 = vpop.xlane.xlu0 %1857
        %v1859 = vsel %vm1341, %v1850, 0.0
        %1860 = vadd.xlane.f32.xlu0 %v1859
        %v1861 = vpop.xlane.xlu0 %1860
        %v1862 = vsel %vm1341, %v1852, 0.0
        %1863 = vadd.xlane.f32.xlu0 %v1862
        %v1864 = vpop.xlane.xlu0 %1863
        %v1865 = vrcp.pop %v1855
        %v1866 = vmul.f32 %v1855, %v1865
        %v1867 = vsub.f32 1.0, %v1866
        %v1868 = vmul.f32 %v1865, %v1867
        %v1869 = vadd.f32 %v1865, %v1868
        %vm1870 = vweird.f32 %v1855
        %vm1871 = vweird.f32 %v1865
        %vm1872 = vmor %vm1870, %vm1871
        %v1873 = vsel %vm1872, %v1865, %v1869
        %v1874 = vand.u32 2147483647, %v1855
        %vm1875 = vcmp.eq.f32.partialorder %v1874, 8.507059e+37
        %v1876 = vand.u32 %v1855, 2147483648
        %v1877 = vor.u32 1.1754944e-38, %v1876
        %v1878 = vsel %vm1875, %v1877, %v1873
        %v1879 = vmul.f32 %v1846, %v1878
        %v1880 = vrcp.pop %v1858
        %v1881 = vmul.f32 %v1858, %v1880
        %v1882 = vsub.f32 1.0, %v1881
        %v1883 = vmul.f32 %v1880, %v1882
        %v1884 = vadd.f32 %v1880, %v1883
        %vm1885 = vweird.f32 %v1858
        %vm1886 = vweird.f32 %v1880
        %vm1887 = vmor %vm1885, %vm1886
        %v1888 = vsel %vm1887, %v1880, %v1884
        %v1889 = vand.u32 2147483647, %v1858
        %vm1890 = vcmp.eq.f32.partialorder %v1889, 8.507059e+37
        %v1891 = vand.u32 %v1858, 2147483648
        %v1892 = vor.u32 1.1754944e-38, %v1891
        %v1893 = vsel %vm1890, %v1892, %v1888
        %v1894 = vmul.f32 %v1848, %v1893
        %v1895 = vrcp.pop %v1861
        %v1896 = vmul.f32 %v1861, %v1895
        %v1897 = vsub.f32 1.0, %v1896
        %v1898 = vmul.f32 %v1895, %v1897
        %v1899 = vadd.f32 %v1895, %v1898
        %vm1900 = vweird.f32 %v1861
        %vm1901 = vweird.f32 %v1895
        %vm1902 = vmor %vm1900, %vm1901
        %v1903 = vsel %vm1902, %v1895, %v1899
        %v1904 = vand.u32 2147483647, %v1861
        %vm1905 = vcmp.eq.f32.partialorder %v1904, 8.507059e+37
        %v1906 = vand.u32 %v1861, 2147483648
        %v1907 = vor.u32 1.1754944e-38, %v1906
        %v1908 = vsel %vm1905, %v1907, %v1903
        %v1909 = vmul.f32 %v1850, %v1908
        %v1910 = vrcp.pop %v1864
        %v1911 = vmul.f32 %v1864, %v1910
        %v1912 = vsub.f32 1.0, %v1911
        %v1913 = vmul.f32 %v1910, %v1912
        %v1914 = vadd.f32 %v1910, %v1913
        %vm1915 = vweird.f32 %v1864
        %vm1916 = vweird.f32 %v1910
        %vm1917 = vmor %vm1915, %vm1916
        %v1918 = vsel %vm1917, %v1910, %v1914
        %v1919 = vand.u32 2147483647, %v1864
        %vm1920 = vcmp.eq.f32.partialorder %v1919, 8.507059e+37
        %v1921 = vand.u32 %v1864, 2147483648
        %v1922 = vor.u32 1.1754944e-38, %v1921
        %v1923 = vsel %vm1920, %v1922, %v1918
        %v1924 = vmul.f32 %v1852, %v1923
        %v1925 = vpack.c.bf16 %v1894, %v1879
        %v1926 = vpack.c.bf16 %v1924, %v1909
        %1927 = vrot.lane.b32.xlu0 %v1783, 64
        %v1928 = vpop.permute.xlu0 %1927
        %v1930 = vsel %vm1341, %v1925, 0
        %v1933 = vsel %vm1341, %v1926, 0
        %v1936 = vsel %vm1448, %v1928, 0
        %1938 = vmatpush.bf16.msra.mxu0 0
        %1939 = vmatpush.bf16.msra.mxu0 0
        %1940 = vmatpush.bf16.msra.mxu0 0
        %1941 = vmatpush.bf16.msra.mxu0 0
        %1942 = vmatpush.bf16.msra.mxu0 0
        %1943 = vmatpush.bf16.msra.mxu0 0
        %1944 = vmatpush.bf16.msra.mxu0 0
        %1945 = vmatpush.bf16.msra.mxu0 %v1936
        %1946 = vmatmul.bf16.gmra.mxu0 %v1930
        %v1947 = vpop.f32.mrf.mxu0
        %v1948 = vadd.f32 0.0, %v1947
        %v1949 = vpop.f32.mrf.mxu0
        %v1950 = vadd.f32 0.0, %v1949
        %1951 = vmatmul.bf16.gmra.mxu0 %v1933
        %v1952 = vpop.f32.mrf.mxu0
        %v1953 = vadd.f32 0.0, %v1952
        %v1954 = vpop.f32.mrf.mxu0
        %v1955 = vadd.f32 0.0, %v1954
        %1956 = vdwg.mxu0
        %v1957 = vmul.f32 %v1948, %v1210
        %v1958 = vmul.f32 %v1950, %v1211
        %v1959 = vmul.f32 %v1953, %v1212
        %v1960 = vmul.f32 %v1955, %v1213
        %v1961 = vadd.f32 %v1957, %v1958
        %v1962 = vadd.f32 %v1961, %v1959
        %v1963 = vadd.f32 %v1962, %v1960
        %v1964 = vpack.c.bf16 %v1963, %v1963
        %s1965 = scalar_lea.vmem %s8, 16
        %v1966 = vld [vmem:[%s1965] sm:$0xf]
        %v1967 = vld [vmem:[%s1965 + $0x4] sm:$0xf]
        %v1968 = vld [vmem:[%s1965 + $0x8] sm:$0xf]
        %v1969 = vld [vmem:[%s1965 + $0xc] sm:$0xf]
        %v1974 = vunpack.c.l.b16 %v1966
        %v1975 = vunpack.c.l.b16 %v1967
        %v1976 = vunpack.c.l.b16 %v1968
        %v1977 = vunpack.c.l.b16 %v1969
        %v1978 = vpack.c.b16 %v1975, %v1974
        %v1979 = vpack.c.b16 %v1977, %v1976
        %v1983 = vsel %vm1220, %v1964, 0
        %1985 = vmatpush.bf16.msra.mxu0 0
        %1986 = vmatpush.bf16.msra.mxu0 0
        %1987 = vmatpush.bf16.msra.mxu0 0
        %1988 = vmatpush.bf16.msra.mxu0 0
        %1989 = vmatpush.bf16.msra.mxu0 0
        %1990 = vmatpush.bf16.msra.mxu0 0
        %1991 = vmatpush.bf16.msra.mxu0 %v1979
        %1992 = vmatpush.bf16.msra.mxu0 %v1978
        %1993 = vmatmul.bf16.gmra.mxu0 %v1983
        %v1994 = vpop.f32.mrf.mxu0
        %v1995 = vadd.f32 0.0, %v1994
        %v1996 = vpop.f32.mrf.mxu0
        %1997 = vdwg.mxu0
        %v1998 = vadd.f32 %v1709, %v1995
        %s1999 = scalar_lea.vmem %s9, 1
        %v2000 = vld [vmem:[%s1999] sm:$0x1]
        %v2002 = vperm.slane %v2000, 0
        %v2004 = vadd.f32 %v1998, %v2002
        %s2005 = scalar_lea.vmem %s10, 1
        %v2006 = vld [vmem:[%s2005] sm:$0x1]
        %s2007 = scalar_lea.vmem %s11, 1
        %v2008 = vld [vmem:[%s2007] sm:$0x1]
        %v2009 = vsel %vm1220, %v2004, 0.0
        %2010 = vadd.xlane.f32.xlu0 %v2009
        %v2011 = vpop.xlane.xlu0 %2010
        %v2012 = vmul.f32 %v2011, %v1230
        %v2013 = vsub.f32 %v2004, %v2012
        %v2014 = vmul.f32 %v2013, %v2013
        %v2015 = vsel %vm1220, %v2014, 0.0
        %2016 = vadd.xlane.f32.xlu0 %v2015
        %v2017 = vpop.xlane.xlu0 %2016
        %v2018 = vmul.f32 %v2017, %v1230
        %v2019 = vadd.f32 %v2018, 1e-06
        %v2020 = vrsqrt.pop %v2019
        %v2021 = vmul.f32 %v2020, %v2019
        %v2022 = vmul.f32 %v2021, %v2020
        %v2023 = vmul.f32 0.5, %v2022
        %v2024 = vsub.f32 1.5, %v2023
        %v2025 = vmul.f32 %v2020, %v2024
        %vm2026 = vweird.f32 %v2019
        %vm2027 = vweird.f32 %v2020
        %vm2028 = vmor %vm2026, %vm2027
        %v2029 = vsel %vm2028, %v2020, %v2025
        %v2030 = vmul.f32 %v2013, %v2029
        %v2032 = vperm.slane %v2006, 0
        %v2034 = vmul.f32 %v2030, %v2032
        %v2036 = vperm.slane %v2008, 0
        %v2038 = vadd.f32 %v2034, %v2036
        %v2039 = vpack.c.bf16 %v2038, %v2038
        %s2040 = scalar_lea.vmem %s12, 16
        %v2041 = vld [vmem:[%s2040] sm:$0xf]
        %v2042 = vld [vmem:[%s2040 + $0x4] sm:$0xf]
        %v2043 = vld [vmem:[%s2040 + $0x8] sm:$0xf]
        %v2044 = vld [vmem:[%s2040 + $0xc] sm:$0xf]
        %s2045 = scalar_lea.vmem %s13, 1
        %v2046 = vld [vmem:[%s2045] sm:$0x1]
        %v2048 = vperm.slane %v2046, 0
        %v2054 = vunpack.c.l.b16 %v2041
        %v2055 = vunpack.c.l.b16 %v2042
        %v2056 = vunpack.c.l.b16 %v2043
        %v2057 = vunpack.c.l.b16 %v2044
        %v2058 = vpack.c.b16 %v2055, %v2054
        %v2059 = vpack.c.b16 %v2057, %v2056
        %v2063 = vsel %vm1220, %v2039, 0
        %2065 = vmatpush.bf16.msra.mxu0 0
        %2066 = vmatpush.bf16.msra.mxu0 0
        %2067 = vmatpush.bf16.msra.mxu0 0
        %2068 = vmatpush.bf16.msra.mxu0 0
        %2069 = vmatpush.bf16.msra.mxu0 0
        %2070 = vmatpush.bf16.msra.mxu0 0
        %2071 = vmatpush.bf16.msra.mxu0 %v2059
        %2072 = vmatpush.bf16.msra.mxu0 %v2058
        %2073 = vmatmul.bf16.gmra.mxu0 %v2063
        %v2074 = vpop.f32.mrf.mxu0
        %v2075 = vadd.f32 %v2048, %v2074
        %v2076 = vpop.f32.mrf.mxu0
        %2077 = vdwg.mxu0
        %v2078 = vmul.f32 %v2075, 0.5
        %v2079 = vmul.f32 %v2075, 0.70710677
        %v2080 = vand.u32 2147483647, %v2079
        %v2081 = vmul.f32 %v2080, 0.3275911
        %v2082 = vadd.f32 %v2081, 1.0
        %v2083 = vrcp.pop %v2082
        %v2084 = vmul.f32 %v2082, %v2083
        %v2085 = vsub.f32 1.0, %v2084
        %v2086 = vmul.f32 %v2083, %v2085
        %v2087 = vadd.f32 %v2083, %v2086
        %vm2088 = vweird.f32 %v2082
        %vm2089 = vweird.f32 %v2083
        %vm2090 = vmor %vm2088, %vm2089
        %v2091 = vsel %vm2090, %v2083, %v2087
        %v2092 = vand.u32 2147483647, %v2082
        %vm2093 = vcmp.eq.f32.partialorder %v2092, 8.507059e+37
        %v2094 = vand.u32 %v2082, 2147483648
        %v2095 = vor.u32 1.1754944e-38, %v2094
        %v2096 = vsel %vm2093, %v2095, %v2091
        %v2097 = vmul.f32 1.0, %v2096
        %v2098 = vmul.f32 %v2097, 1.0614054
        %v2099 = vadd.f32 %v2098, -1.4531521
        %v2100 = vmul.f32 %v2099, %v2097
        %v2101 = vadd.f32 %v2100, 1.4214138
        %v2102 = vmul.f32 %v2101, %v2097
        %v2103 = vadd.f32 %v2102, -0.28449672
        %v2104 = vmul.f32 %v2103, %v2097
        %v2105 = vadd.f32 %v2104, 0.2548296
        %v2106 = vmul.f32 %v2105, %v2097
        %v2107 = vsub.f32 0.0, %v2080
        %v2108 = vmul.f32 %v2107, %v2080
        %v2109 = vmul.f32 %v2108, 1.442695
        %v2110 = vpow.pop %v2109
        %v2111 = vmul.f32 %v2106, %v2110
        %v2112 = vsub.f32 1.0, %v2111
        %vm2113 = vcmp.ge.f32.partialorder %v2079, 0.0
        %v2114 = vsub.f32 0.0, %v2112
        %v2115 = vsel %vm2113, %v2112, %v2114
        %v2116 = vadd.f32 %v2115, 1.0
        %v2117 = vmul.f32 %v2078, %v2116
        %v2118 = vpack.c.bf16 %v2117, %v2117
        %s2119 = scalar_lea.vmem %s14, 64
        %v2120 = vld [vmem:[%s2119] sm:$0xf]
        %v2121 = vld [vmem:[%s2119 + $0x4] sm:$0xf]
        %v2122 = vld [vmem:[%s2119 + $0x8] sm:$0xf]
        %v2123 = vld [vmem:[%s2119 + $0xc] sm:$0xf]
        %v2124 = vld [vmem:[%s2119 + $0x10] sm:$0xf]
        %v2125 = vld [vmem:[%s2119 + $0x14] sm:$0xf]
        %v2126 = vld [vmem:[%s2119 + $0x18] sm:$0xf]
        %v2127 = vld [vmem:[%s2119 + $0x1c] sm:$0xf]
        %v2128 = vld [vmem:[%s2119 + $0x20] sm:$0xf]
        %v2129 = vld [vmem:[%s2119 + $0x24] sm:$0xf]
        %v2130 = vld [vmem:[%s2119 + $0x28] sm:$0xf]
        %v2131 = vld [vmem:[%s2119 + $0x2c] sm:$0xf]
        %v2132 = vld [vmem:[%s2119 + $0x30] sm:$0xf]
        %v2133 = vld [vmem:[%s2119 + $0x34] sm:$0xf]
        %v2134 = vld [vmem:[%s2119 + $0x38] sm:$0xf]
        %v2135 = vld [vmem:[%s2119 + $0x3c] sm:$0xf]
        %v2152 = vunpack.c.l.b16 %v2120
        %v2153 = vunpack.c.l.b16 %v2121
        %v2154 = vunpack.c.l.b16 %v2122
        %v2155 = vunpack.c.l.b16 %v2123
        %v2156 = vunpack.c.l.b16 %v2124
        %v2157 = vunpack.c.l.b16 %v2125
        %v2158 = vunpack.c.l.b16 %v2126
        %v2159 = vunpack.c.l.b16 %v2127
        %v2160 = vunpack.c.l.b16 %v2128
        %v2161 = vunpack.c.l.b16 %v2129
        %v2162 = vunpack.c.l.b16 %v2130
        %v2163 = vunpack.c.l.b16 %v2131
        %v2164 = vunpack.c.l.b16 %v2132
        %v2165 = vunpack.c.l.b16 %v2133
        %v2166 = vunpack.c.l.b16 %v2134
        %v2167 = vunpack.c.l.b16 %v2135
        %v2168 = vpack.c.b16 %v2153, %v2152
        %v2169 = vpack.c.b16 %v2155, %v2154
        %v2170 = vpack.c.b16 %v2157, %v2156
        %v2171 = vpack.c.b16 %v2159, %v2158
        %v2172 = vpack.c.b16 %v2161, %v2160
        %v2173 = vpack.c.b16 %v2163, %v2162
        %v2174 = vpack.c.b16 %v2165, %v2164
        %v2175 = vpack.c.b16 %v2167, %v2166
        %2184 = vmatpush.bf16.msra.mxu0 %v2175
        %2185 = vmatpush.bf16.msra.mxu0 %v2174
        %2186 = vmatpush.bf16.msra.mxu0 %v2173
        %2187 = vmatpush.bf16.msra.mxu0 %v2172
        %2188 = vmatpush.bf16.msra.mxu0 %v2171
        %2189 = vmatpush.bf16.msra.mxu0 %v2170
        %2190 = vmatpush.bf16.msra.mxu0 %v2169
        %2191 = vmatpush.bf16.msra.mxu0 %v2168
        %2192 = vmatmul.bf16.gmra.mxu0 %v2118
        %v2193 = vpop.f32.mrf.mxu0
        %v2194 = vadd.f32 0.0, %v2193
        %v2195 = vpop.f32.mrf.mxu0
        %2196 = vdwg.mxu0
        %v2197 = vadd.f32 %v2004, %v2194
        %s2198 = scalar_lea.vmem %s15, 1
        %v2199 = vld [vmem:[%s2198] sm:$0x1]
        %v2201 = vperm.slane %v2199, 0
        %v2203 = vadd.f32 %v2197, %v2201
        %s2204 = scalar_lea.vmem %s4, 2
        %v2205 = vld [vmem:[%s2204] sm:$0x1]
        %s2206 = scalar_lea.vmem %s5, 2
        %v2207 = vld [vmem:[%s2206] sm:$0x1]
        %v2208 = vsel %vm1220, %v2203, 0.0
        %2209 = vadd.xlane.f32.xlu0 %v2208
        %v2210 = vpop.xlane.xlu0 %2209
        %v2211 = vmul.f32 %v2210, %v1230
        %v2212 = vsub.f32 %v2203, %v2211
        %v2213 = vmul.f32 %v2212, %v2212
        %v2214 = vsel %vm1220, %v2213, 0.0
        %2215 = vadd.xlane.f32.xlu0 %v2214
        %v2216 = vpop.xlane.xlu0 %2215
        %v2217 = vmul.f32 %v2216, %v1230
        %v2218 = vadd.f32 %v2217, 1e-06
        %v2219 = vrsqrt.pop %v2218
        %v2220 = vmul.f32 %v2219, %v2218
        %v2221 = vmul.f32 %v2220, %v2219
        %v2222 = vmul.f32 0.5, %v2221
        %v2223 = vsub.f32 1.5, %v2222
        %v2224 = vmul.f32 %v2219, %v2223
        %vm2225 = vweird.f32 %v2218
        %vm2226 = vweird.f32 %v2219
        %vm2227 = vmor %vm2225, %vm2226
        %v2228 = vsel %vm2227, %v2219, %v2224
        %v2229 = vmul.f32 %v2212, %v2228
        %v2231 = vperm.slane %v2205, 0
        %v2233 = vmul.f32 %v2229, %v2231
        %v2235 = vperm.slane %v2207, 0
        %v2237 = vadd.f32 %v2233, %v2235
        %v2238 = vpack.c.bf16 %v2237, %v2237
        %s2239 = scalar_lea.vmem %s6, 32
        %v2240 = vld [vmem:[%s2239] sm:$0xf]
        %v2241 = vld [vmem:[%s2239 + $0x4] sm:$0xf]
        %v2242 = vld [vmem:[%s2239 + $0x8] sm:$0xf]
        %v2243 = vld [vmem:[%s2239 + $0xc] sm:$0xf]
        %s2244 = scalar_lea.vmem %s7, 2
        %v2245 = vld [vmem:[%s2244] sm:$0x1]
        %v2247 = vperm.slane %v2245, 0
        %v2253 = vunpack.c.l.b16 %v2240
        %v2254 = vunpack.c.l.b16 %v2241
        %v2255 = vunpack.c.l.b16 %v2242
        %v2256 = vunpack.c.l.b16 %v2243
        %v2257 = vpack.c.b16 %v2254, %v2253
        %v2258 = vpack.c.b16 %v2256, %v2255
        %v2262 = vsel %vm1220, %v2238, 0
        %2264 = vmatpush.bf16.msra.mxu0 0
        %2265 = vmatpush.bf16.msra.mxu0 0
        %2266 = vmatpush.bf16.msra.mxu0 0
        %2267 = vmatpush.bf16.msra.mxu0 0
        %2268 = vmatpush.bf16.msra.mxu0 0
        %2269 = vmatpush.bf16.msra.mxu0 0
        %2270 = vmatpush.bf16.msra.mxu0 %v2258
        %2271 = vmatpush.bf16.msra.mxu0 %v2257
        %2272 = vmatmul.bf16.gmra.mxu0 %v2262
        %v2273 = vpop.f32.mrf.mxu0
        %v2274 = vadd.f32 %v2247, %v2273
        %v2275 = vpop.f32.mrf.mxu0
        %2276 = vdwg.mxu0
        %v2277 = vpack.c.bf16 %v2274, %v2274
        %v2278 = vmul.f32 %v2274, %v1210
        %v2279 = vmul.f32 %v2274, %v1211
        %v2280 = vmul.f32 %v2274, %v1212
        %v2281 = vmul.f32 %v2274, %v1213
        %v2282 = vpack.c.bf16 %v2279, %v2278
        %v2283 = vpack.c.bf16 %v2281, %v2280
        %2285 = vrot.lane.b32.xlu0 %v2277, 96
        %v2286 = vpop.permute.xlu0 %2285
        %v2288 = vsel %vm1220, %v2282, 0
        %v2291 = vsel %vm1220, %v2283, 0
        %v2294 = vsel %vm1220, %v2286, 0
        %2296 = vmatpush.bf16.xpose.msra.mxu0 0
        %2297 = vmatpush.bf16.xpose.msra.mxu0 0
        %2298 = vmatpush.bf16.xpose.msra.mxu0 0
        %2299 = vmatpush.bf16.xpose.msra.mxu0 0
        %2300 = vmatpush.bf16.xpose.msra.mxu0 0
        %2301 = vmatpush.bf16.xpose.msra.mxu0 0
        %2302 = vmatpush.bf16.xpose.msra.mxu0 0
        %2303 = vmatpush.bf16.xpose.msra.mxu0 %v2294
        %2304 = vmatmul.bf16.gmra.mxu0 %v2288
        %v2305 = vpop.f32.mrf.mxu0
        %v2306 = vadd.f32 0.0, %v2305
        %v2307 = vpop.f32.mrf.mxu0
        %v2308 = vadd.f32 0.0, %v2307
        %2309 = vmatmul.bf16.gmra.mxu0 %v2291
        %v2310 = vpop.f32.mrf.mxu0
        %v2311 = vadd.f32 0.0, %v2310
        %v2312 = vpop.f32.mrf.mxu0
        %v2313 = vadd.f32 0.0, %v2312
        %2314 = vdwg.mxu0
        %v2315 = vmul.f32 %v2306, 0.35355338
        %v2316 = vmul.f32 %v2308, 0.35355338
        %v2317 = vmul.f32 %v2311, 0.35355338
        %v2318 = vmul.f32 %v2313, 0.35355338
        %v2319 = vadd.f32 %v2315, %v1217
        %v2320 = vadd.f32 %v2316, %v1217
        %v2321 = vadd.f32 %v2317, %v1217
        %v2322 = vadd.f32 %v2318, %v1217
        %v2323 = vsel %vm1341, %v2319, -inf
        %2324 = vmax.xlane.f32.xlu0 %v2323
        %v2325 = vpop.xlane.xlu0 %2324
        %v2326 = vsel %vm1341, %v2320, -inf
        %2327 = vmax.xlane.f32.xlu0 %v2326
        %v2328 = vpop.xlane.xlu0 %2327
        %v2329 = vsel %vm1341, %v2321, -inf
        %2330 = vmax.xlane.f32.xlu0 %v2329
        %v2331 = vpop.xlane.xlu0 %2330
        %v2332 = vsel %vm1341, %v2322, -inf
        %2333 = vmax.xlane.f32.xlu0 %v2332
        %v2334 = vpop.xlane.xlu0 %2333
        %v2335 = vsub.f32 %v2319, %v2325
        %v2336 = vsub.f32 %v2320, %v2328
        %v2337 = vsub.f32 %v2321, %v2331
        %v2338 = vsub.f32 %v2322, %v2334
        %v2339 = vmul.f32 %v2335, 1.442695
        %v2340 = vpow.pop %v2339
        %v2341 = vmul.f32 %v2336, 1.442695
        %v2342 = vpow.pop %v2341
        %v2343 = vmul.f32 %v2337, 1.442695
        %v2344 = vpow.pop %v2343
        %v2345 = vmul.f32 %v2338, 1.442695
        %v2346 = vpow.pop %v2345
        %v2347 = vsel %vm1341, %v2340, 0.0
        %2348 = vadd.xlane.f32.xlu0 %v2347
        %v2349 = vpop.xlane.xlu0 %2348
        %v2350 = vsel %vm1341, %v2342, 0.0
        %2351 = vadd.xlane.f32.xlu0 %v2350
        %v2352 = vpop.xlane.xlu0 %2351
        %v2353 = vsel %vm1341, %v2344, 0.0
        %2354 = vadd.xlane.f32.xlu0 %v2353
        %v2355 = vpop.xlane.xlu0 %2354
        %v2356 = vsel %vm1341, %v2346, 0.0
        %2357 = vadd.xlane.f32.xlu0 %v2356
        %v2358 = vpop.xlane.xlu0 %2357
        %v2359 = vrcp.pop %v2349
        %v2360 = vmul.f32 %v2349, %v2359
        %v2361 = vsub.f32 1.0, %v2360
        %v2362 = vmul.f32 %v2359, %v2361
        %v2363 = vadd.f32 %v2359, %v2362
        %vm2364 = vweird.f32 %v2349
        %vm2365 = vweird.f32 %v2359
        %vm2366 = vmor %vm2364, %vm2365
        %v2367 = vsel %vm2366, %v2359, %v2363
        %v2368 = vand.u32 2147483647, %v2349
        %vm2369 = vcmp.eq.f32.partialorder %v2368, 8.507059e+37
        %v2370 = vand.u32 %v2349, 2147483648
        %v2371 = vor.u32 1.1754944e-38, %v2370
        %v2372 = vsel %vm2369, %v2371, %v2367
        %v2373 = vmul.f32 %v2340, %v2372
        %v2374 = vrcp.pop %v2352
        %v2375 = vmul.f32 %v2352, %v2374
        %v2376 = vsub.f32 1.0, %v2375
        %v2377 = vmul.f32 %v2374, %v2376
        %v2378 = vadd.f32 %v2374, %v2377
        %vm2379 = vweird.f32 %v2352
        %vm2380 = vweird.f32 %v2374
        %vm2381 = vmor %vm2379, %vm2380
        %v2382 = vsel %vm2381, %v2374, %v2378
        %v2383 = vand.u32 2147483647, %v2352
        %vm2384 = vcmp.eq.f32.partialorder %v2383, 8.507059e+37
        %v2385 = vand.u32 %v2352, 2147483648
        %v2386 = vor.u32 1.1754944e-38, %v2385
        %v2387 = vsel %vm2384, %v2386, %v2382
        %v2388 = vmul.f32 %v2342, %v2387
        %v2389 = vrcp.pop %v2355
        %v2390 = vmul.f32 %v2355, %v2389
        %v2391 = vsub.f32 1.0, %v2390
        %v2392 = vmul.f32 %v2389, %v2391
        %v2393 = vadd.f32 %v2389, %v2392
        %vm2394 = vweird.f32 %v2355
        %vm2395 = vweird.f32 %v2389
        %vm2396 = vmor %vm2394, %vm2395
        %v2397 = vsel %vm2396, %v2389, %v2393
        %v2398 = vand.u32 2147483647, %v2355
        %vm2399 = vcmp.eq.f32.partialorder %v2398, 8.507059e+37
        %v2400 = vand.u32 %v2355, 2147483648
        %v2401 = vor.u32 1.1754944e-38, %v2400
        %v2402 = vsel %vm2399, %v2401, %v2397
        %v2403 = vmul.f32 %v2344, %v2402
        %v2404 = vrcp.pop %v2358
        %v2405 = vmul.f32 %v2358, %v2404
        %v2406 = vsub.f32 1.0, %v2405
        %v2407 = vmul.f32 %v2404, %v2406
        %v2408 = vadd.f32 %v2404, %v2407
        %vm2409 = vweird.f32 %v2358
        %vm2410 = vweird.f32 %v2404
        %vm2411 = vmor %vm2409, %vm2410
        %v2412 = vsel %vm2411, %v2404, %v2408
        %v2413 = vand.u32 2147483647, %v2358
        %vm2414 = vcmp.eq.f32.partialorder %v2413, 8.507059e+37
        %v2415 = vand.u32 %v2358, 2147483648
        %v2416 = vor.u32 1.1754944e-38, %v2415
        %v2417 = vsel %vm2414, %v2416, %v2412
        %v2418 = vmul.f32 %v2346, %v2417
        %v2419 = vpack.c.bf16 %v2388, %v2373
        %v2420 = vpack.c.bf16 %v2418, %v2403
        %2421 = vrot.lane.b32.xlu0 %v2277, 64
        %v2422 = vpop.permute.xlu0 %2421
        %v2424 = vsel %vm1341, %v2419, 0
        %v2427 = vsel %vm1341, %v2420, 0
        %v2430 = vsel %vm1448, %v2422, 0
        %2432 = vmatpush.bf16.msra.mxu0 0
        %2433 = vmatpush.bf16.msra.mxu0 0
        %2434 = vmatpush.bf16.msra.mxu0 0
        %2435 = vmatpush.bf16.msra.mxu0 0
        %2436 = vmatpush.bf16.msra.mxu0 0
        %2437 = vmatpush.bf16.msra.mxu0 0
        %2438 = vmatpush.bf16.msra.mxu0 0
        %2439 = vmatpush.bf16.msra.mxu0 %v2430
        %2440 = vmatmul.bf16.gmra.mxu0 %v2424
        %v2441 = vpop.f32.mrf.mxu0
        %v2442 = vadd.f32 0.0, %v2441
        %v2443 = vpop.f32.mrf.mxu0
        %v2444 = vadd.f32 0.0, %v2443
        %2445 = vmatmul.bf16.gmra.mxu0 %v2427
        %v2446 = vpop.f32.mrf.mxu0
        %v2447 = vadd.f32 0.0, %v2446
        %v2448 = vpop.f32.mrf.mxu0
        %v2449 = vadd.f32 0.0, %v2448
        %2450 = vdwg.mxu0
        %v2451 = vmul.f32 %v2442, %v1210
        %v2452 = vmul.f32 %v2444, %v1211
        %v2453 = vmul.f32 %v2447, %v1212
        %v2454 = vmul.f32 %v2449, %v1213
        %v2455 = vadd.f32 %v2451, %v2452
        %v2456 = vadd.f32 %v2455, %v2453
        %v2457 = vadd.f32 %v2456, %v2454
        %v2458 = vpack.c.bf16 %v2457, %v2457
        %s2459 = scalar_lea.vmem %s8, 32
        %v2460 = vld [vmem:[%s2459] sm:$0xf]
        %v2461 = vld [vmem:[%s2459 + $0x4] sm:$0xf]
        %v2462 = vld [vmem:[%s2459 + $0x8] sm:$0xf]
        %v2463 = vld [vmem:[%s2459 + $0xc] sm:$0xf]
        %v2468 = vunpack.c.l.b16 %v2460
        %v2469 = vunpack.c.l.b16 %v2461
        %v2470 = vunpack.c.l.b16 %v2462
        %v2471 = vunpack.c.l.b16 %v2463
        %v2472 = vpack.c.b16 %v2469, %v2468
        %v2473 = vpack.c.b16 %v2471, %v2470
        %v2477 = vsel %vm1220, %v2458, 0
        %2479 = vmatpush.bf16.msra.mxu0 0
        %2480 = vmatpush.bf16.msra.mxu0 0
        %2481 = vmatpush.bf16.msra.mxu0 0
        %2482 = vmatpush.bf16.msra.mxu0 0
        %2483 = vmatpush.bf16.msra.mxu0 0
        %2484 = vmatpush.bf16.msra.mxu0 0
        %2485 = vmatpush.bf16.msra.mxu0 %v2473
        %2486 = vmatpush.bf16.msra.mxu0 %v2472
        %2487 = vmatmul.bf16.gmra.mxu0 %v2477
        %v2488 = vpop.f32.mrf.mxu0
        %v2489 = vadd.f32 0.0, %v2488
        %v2490 = vpop.f32.mrf.mxu0
        %2491 = vdwg.mxu0
        %v2492 = vadd.f32 %v2203, %v2489
        %s2493 = scalar_lea.vmem %s9, 2
        %v2494 = vld [vmem:[%s2493] sm:$0x1]
        %v2496 = vperm.slane %v2494, 0
        %v2498 = vadd.f32 %v2492, %v2496
        %s2499 = scalar_lea.vmem %s10, 2
        %v2500 = vld [vmem:[%s2499] sm:$0x1]
        %s2501 = scalar_lea.vmem %s11, 2
        %v2502 = vld [vmem:[%s2501] sm:$0x1]
        %v2503 = vsel %vm1220, %v2498, 0.0
        %2504 = vadd.xlane.f32.xlu0 %v2503
        %v2505 = vpop.xlane.xlu0 %2504
        %v2506 = vmul.f32 %v2505, %v1230
        %v2507 = vsub.f32 %v2498, %v2506
        %v2508 = vmul.f32 %v2507, %v2507
        %v2509 = vsel %vm1220, %v2508, 0.0
        %2510 = vadd.xlane.f32.xlu0 %v2509
        %v2511 = vpop.xlane.xlu0 %2510
        %v2512 = vmul.f32 %v2511, %v1230
        %v2513 = vadd.f32 %v2512, 1e-06
        %v2514 = vrsqrt.pop %v2513
        %v2515 = vmul.f32 %v2514, %v2513
        %v2516 = vmul.f32 %v2515, %v2514
        %v2517 = vmul.f32 0.5, %v2516
        %v2518 = vsub.f32 1.5, %v2517
        %v2519 = vmul.f32 %v2514, %v2518
        %vm2520 = vweird.f32 %v2513
        %vm2521 = vweird.f32 %v2514
        %vm2522 = vmor %vm2520, %vm2521
        %v2523 = vsel %vm2522, %v2514, %v2519
        %v2524 = vmul.f32 %v2507, %v2523
        %v2526 = vperm.slane %v2500, 0
        %v2528 = vmul.f32 %v2524, %v2526
        %v2530 = vperm.slane %v2502, 0
        %v2532 = vadd.f32 %v2528, %v2530
        %v2533 = vpack.c.bf16 %v2532, %v2532
        %s2534 = scalar_lea.vmem %s12, 32
        %v2535 = vld [vmem:[%s2534] sm:$0xf]
        %v2536 = vld [vmem:[%s2534 + $0x4] sm:$0xf]
        %v2537 = vld [vmem:[%s2534 + $0x8] sm:$0xf]
        %v2538 = vld [vmem:[%s2534 + $0xc] sm:$0xf]
        %s2539 = scalar_lea.vmem %s13, 2
        %v2540 = vld [vmem:[%s2539] sm:$0x1]
        %v2542 = vperm.slane %v2540, 0
        %v2548 = vunpack.c.l.b16 %v2535
        %v2549 = vunpack.c.l.b16 %v2536
        %v2550 = vunpack.c.l.b16 %v2537
        %v2551 = vunpack.c.l.b16 %v2538
        %v2552 = vpack.c.b16 %v2549, %v2548
        %v2553 = vpack.c.b16 %v2551, %v2550
        %v2557 = vsel %vm1220, %v2533, 0
        %2559 = vmatpush.bf16.msra.mxu0 0
        %2560 = vmatpush.bf16.msra.mxu0 0
        %2561 = vmatpush.bf16.msra.mxu0 0
        %2562 = vmatpush.bf16.msra.mxu0 0
        %2563 = vmatpush.bf16.msra.mxu0 0
        %2564 = vmatpush.bf16.msra.mxu0 0
        %2565 = vmatpush.bf16.msra.mxu0 %v2553
        %2566 = vmatpush.bf16.msra.mxu0 %v2552
        %2567 = vmatmul.bf16.gmra.mxu0 %v2557
        %v2568 = vpop.f32.mrf.mxu0
        %v2569 = vadd.f32 %v2542, %v2568
        %v2570 = vpop.f32.mrf.mxu0
        %2571 = vdwg.mxu0
        %v2572 = vmul.f32 %v2569, 0.5
        %v2573 = vmul.f32 %v2569, 0.70710677
        %v2574 = vand.u32 2147483647, %v2573
        %v2575 = vmul.f32 %v2574, 0.3275911
        %v2576 = vadd.f32 %v2575, 1.0
        %v2577 = vrcp.pop %v2576
        %v2578 = vmul.f32 %v2576, %v2577
        %v2579 = vsub.f32 1.0, %v2578
        %v2580 = vmul.f32 %v2577, %v2579
        %v2581 = vadd.f32 %v2577, %v2580
        %vm2582 = vweird.f32 %v2576
        %vm2583 = vweird.f32 %v2577
        %vm2584 = vmor %vm2582, %vm2583
        %v2585 = vsel %vm2584, %v2577, %v2581
        %v2586 = vand.u32 2147483647, %v2576
        %vm2587 = vcmp.eq.f32.partialorder %v2586, 8.507059e+37
        %v2588 = vand.u32 %v2576, 2147483648
        %v2589 = vor.u32 1.1754944e-38, %v2588
        %v2590 = vsel %vm2587, %v2589, %v2585
        %v2591 = vmul.f32 1.0, %v2590
        %v2592 = vmul.f32 %v2591, 1.0614054
        %v2593 = vadd.f32 %v2592, -1.4531521
        %v2594 = vmul.f32 %v2593, %v2591
        %v2595 = vadd.f32 %v2594, 1.4214138
        %v2596 = vmul.f32 %v2595, %v2591
        %v2597 = vadd.f32 %v2596, -0.28449672
        %v2598 = vmul.f32 %v2597, %v2591
        %v2599 = vadd.f32 %v2598, 0.2548296
        %v2600 = vmul.f32 %v2599, %v2591
        %v2601 = vsub.f32 0.0, %v2574
        %v2602 = vmul.f32 %v2601, %v2574
        %v2603 = vmul.f32 %v2602, 1.442695
        %v2604 = vpow.pop %v2603
        %v2605 = vmul.f32 %v2600, %v2604
        %v2606 = vsub.f32 1.0, %v2605
        %vm2607 = vcmp.ge.f32.partialorder %v2573, 0.0
        %v2608 = vsub.f32 0.0, %v2606
        %v2609 = vsel %vm2607, %v2606, %v2608
        %v2610 = vadd.f32 %v2609, 1.0
        %v2611 = vmul.f32 %v2572, %v2610
        %v2612 = vpack.c.bf16 %v2611, %v2611
        %s2613 = scalar_lea.vmem %s14, 128
        %v2614 = vld [vmem:[%s2613] sm:$0xf]
        %v2615 = vld [vmem:[%s2613 + $0x4] sm:$0xf]
        %v2616 = vld [vmem:[%s2613 + $0x8] sm:$0xf]
        %v2617 = vld [vmem:[%s2613 + $0xc] sm:$0xf]
        %v2618 = vld [vmem:[%s2613 + $0x10] sm:$0xf]
        %v2619 = vld [vmem:[%s2613 + $0x14] sm:$0xf]
        %v2620 = vld [vmem:[%s2613 + $0x18] sm:$0xf]
        %v2621 = vld [vmem:[%s2613 + $0x1c] sm:$0xf]
        %v2622 = vld [vmem:[%s2613 + $0x20] sm:$0xf]
        %v2623 = vld [vmem:[%s2613 + $0x24] sm:$0xf]
        %v2624 = vld [vmem:[%s2613 + $0x28] sm:$0xf]
        %v2625 = vld [vmem:[%s2613 + $0x2c] sm:$0xf]
        %v2626 = vld [vmem:[%s2613 + $0x30] sm:$0xf]
        %v2627 = vld [vmem:[%s2613 + $0x34] sm:$0xf]
        %v2628 = vld [vmem:[%s2613 + $0x38] sm:$0xf]
        %v2629 = vld [vmem:[%s2613 + $0x3c] sm:$0xf]
        %v2646 = vunpack.c.l.b16 %v2614
        %v2647 = vunpack.c.l.b16 %v2615
        %v2648 = vunpack.c.l.b16 %v2616
        %v2649 = vunpack.c.l.b16 %v2617
        %v2650 = vunpack.c.l.b16 %v2618
        %v2651 = vunpack.c.l.b16 %v2619
        %v2652 = vunpack.c.l.b16 %v2620
        %v2653 = vunpack.c.l.b16 %v2621
        %v2654 = vunpack.c.l.b16 %v2622
        %v2655 = vunpack.c.l.b16 %v2623
        %v2656 = vunpack.c.l.b16 %v2624
        %v2657 = vunpack.c.l.b16 %v2625
        %v2658 = vunpack.c.l.b16 %v2626
        %v2659 = vunpack.c.l.b16 %v2627
        %v2660 = vunpack.c.l.b16 %v2628
        %v2661 = vunpack.c.l.b16 %v2629
        %v2662 = vpack.c.b16 %v2647, %v2646
        %v2663 = vpack.c.b16 %v2649, %v2648
        %v2664 = vpack.c.b16 %v2651, %v2650
        %v2665 = vpack.c.b16 %v2653, %v2652
        %v2666 = vpack.c.b16 %v2655, %v2654
        %v2667 = vpack.c.b16 %v2657, %v2656
        %v2668 = vpack.c.b16 %v2659, %v2658
        %v2669 = vpack.c.b16 %v2661, %v2660
        %2678 = vmatpush.bf16.msra.mxu0 %v2669
        %2679 = vmatpush.bf16.msra.mxu0 %v2668
        %2680 = vmatpush.bf16.msra.mxu0 %v2667
        %2681 = vmatpush.bf16.msra.mxu0 %v2666
        %2682 = vmatpush.bf16.msra.mxu0 %v2665
        %2683 = vmatpush.bf16.msra.mxu0 %v2664
        %2684 = vmatpush.bf16.msra.mxu0 %v2663
        %2685 = vmatpush.bf16.msra.mxu0 %v2662
        %2686 = vmatmul.bf16.gmra.mxu0 %v2612
        %v2687 = vpop.f32.mrf.mxu0
        %v2688 = vadd.f32 0.0, %v2687
        %v2689 = vpop.f32.mrf.mxu0
        %2690 = vdwg.mxu0
        %v2691 = vadd.f32 %v2498, %v2688
        %s2692 = scalar_lea.vmem %s15, 2
        %v2693 = vld [vmem:[%s2692] sm:$0x1]
        %v2695 = vperm.slane %v2693, 0
        %v2697 = vadd.f32 %v2691, %v2695
        %v2698 = vld [vmem:[%s16] sm:$0x1]
        %v2699 = vld [vmem:[%s17] sm:$0x1]
        %v2700 = vsel %vm1220, %v2697, 0.0
        %2701 = vadd.xlane.f32.xlu0 %v2700
        %v2702 = vpop.xlane.xlu0 %2701
        %v2703 = vmul.f32 %v2702, %v1230
        %v2704 = vsub.f32 %v2697, %v2703
        %v2705 = vmul.f32 %v2704, %v2704
        %v2706 = vsel %vm1220, %v2705, 0.0
        %2707 = vadd.xlane.f32.xlu0 %v2706
        %v2708 = vpop.xlane.xlu0 %2707
        %v2709 = vmul.f32 %v2708, %v1230
        %v2710 = vadd.f32 %v2709, 1e-06
        %v2711 = vrsqrt.pop %v2710
        %v2712 = vmul.f32 %v2711, %v2710
        %v2713 = vmul.f32 %v2712, %v2711
        %v2714 = vmul.f32 0.5, %v2713
        %v2715 = vsub.f32 1.5, %v2714
        %v2716 = vmul.f32 %v2711, %v2715
        %vm2717 = vweird.f32 %v2710
        %vm2718 = vweird.f32 %v2711
        %vm2719 = vmor %vm2717, %vm2718
        %v2720 = vsel %vm2719, %v2711, %v2716
        %v2721 = vmul.f32 %v2704, %v2720
        %v2723 = vperm.slane %v2698, 0
        %v2725 = vmul.f32 %v2721, %v2723
        %v2727 = vperm.slane %v2699, 0
        %v2729 = vadd.f32 %v2725, %v2727
        %s2730 = scalar_lea.vmem %s4, 3
        %v2731 = vld [vmem:[%s2730] sm:$0x1]
        %s2732 = scalar_lea.vmem %s5, 3
        %v2733 = vld [vmem:[%s2732] sm:$0x1]
        %v2735 = vperm.slane %v2731, 0
        %v2737 = vmul.f32 %v2721, %v2735
        %v2739 = vperm.slane %v2733, 0
        %v2741 = vadd.f32 %v2737, %v2739
        %v2742 = vpack.c.bf16 %v2741, %v2741
        %s2743 = scalar_lea.vmem %s6, 48
        %v2744 = vld [vmem:[%s2743] sm:$0xf]
        %v2745 = vld [vmem:[%s2743 + $0x4] sm:$0xf]
        %v2746 = vld [vmem:[%s2743 + $0x8] sm:$0xf]
        %v2747 = vld [vmem:[%s2743 + $0xc] sm:$0xf]
        %s2748 = scalar_lea.vmem %s7, 3
        %v2749 = vld [vmem:[%s2748] sm:$0x1]
        %v2751 = vperm.slane %v2749, 0
        %v2757 = vunpack.c.l.b16 %v2744
        %v2758 = vunpack.c.l.b16 %v2745
        %v2759 = vunpack.c.l.b16 %v2746
        %v2760 = vunpack.c.l.b16 %v2747
        %v2761 = vpack.c.b16 %v2758, %v2757
        %v2762 = vpack.c.b16 %v2760, %v2759
        %v2766 = vsel %vm1220, %v2742, 0
        %2768 = vmatpush.bf16.msra.mxu0 0
        %2769 = vmatpush.bf16.msra.mxu0 0
        %2770 = vmatpush.bf16.msra.mxu0 0
        %2771 = vmatpush.bf16.msra.mxu0 0
        %2772 = vmatpush.bf16.msra.mxu0 0
        %2773 = vmatpush.bf16.msra.mxu0 0
        %2774 = vmatpush.bf16.msra.mxu0 %v2762
        %2775 = vmatpush.bf16.msra.mxu0 %v2761
        %2776 = vmatmul.bf16.gmra.mxu0 %v2766
        %v2777 = vpop.f32.mrf.mxu0
        %v2778 = vadd.f32 %v2751, %v2777
        %v2779 = vpop.f32.mrf.mxu0
        %2780 = vdwg.mxu0
        %v2781 = vpack.c.bf16 %v2778, %v2778
        %v2782 = vmul.f32 %v2778, %v1210
        %v2783 = vmul.f32 %v2778, %v1211
        %v2784 = vmul.f32 %v2778, %v1212
        %v2785 = vmul.f32 %v2778, %v1213
        %v2786 = vpack.c.bf16 %v2783, %v2782
        %v2787 = vpack.c.bf16 %v2785, %v2784
        %2789 = vrot.lane.b32.xlu0 %v2781, 96
        %v2790 = vpop.permute.xlu0 %2789
        %v2792 = vsel %vm1220, %v2786, 0
        %v2795 = vsel %vm1220, %v2787, 0
        %v2798 = vsel %vm1220, %v2790, 0
        %2800 = vmatpush.bf16.xpose.msra.mxu0 0
        %2801 = vmatpush.bf16.xpose.msra.mxu0 0
        %2802 = vmatpush.bf16.xpose.msra.mxu0 0
        %2803 = vmatpush.bf16.xpose.msra.mxu0 0
        %2804 = vmatpush.bf16.xpose.msra.mxu0 0
        %2805 = vmatpush.bf16.xpose.msra.mxu0 0
        %2806 = vmatpush.bf16.xpose.msra.mxu0 0
        %2807 = vmatpush.bf16.xpose.msra.mxu0 %v2798
        %2808 = vmatmul.bf16.gmra.mxu0 %v2792
        %v2809 = vpop.f32.mrf.mxu0
        %v2810 = vadd.f32 0.0, %v2809
        %v2811 = vpop.f32.mrf.mxu0
        %v2812 = vadd.f32 0.0, %v2811
        %2813 = vmatmul.bf16.gmra.mxu0 %v2795
        %v2814 = vpop.f32.mrf.mxu0
        %v2815 = vadd.f32 0.0, %v2814
        %v2816 = vpop.f32.mrf.mxu0
        %v2817 = vadd.f32 0.0, %v2816
        %2818 = vdwg.mxu0
        %v2819 = vmul.f32 %v2810, 0.35355338
        %v2820 = vmul.f32 %v2812, 0.35355338
        %v2821 = vmul.f32 %v2815, 0.35355338
        %v2822 = vmul.f32 %v2817, 0.35355338
        %v2823 = vadd.f32 %v2819, %v1217
        %v2824 = vadd.f32 %v2820, %v1217
        %v2825 = vadd.f32 %v2821, %v1217
        %v2826 = vadd.f32 %v2822, %v1217
        %v2827 = vsel %vm1341, %v2823, -inf
        %2828 = vmax.xlane.f32.xlu0 %v2827
        %v2829 = vpop.xlane.xlu0 %2828
        %v2830 = vsel %vm1341, %v2824, -inf
        %2831 = vmax.xlane.f32.xlu0 %v2830
        %v2832 = vpop.xlane.xlu0 %2831
        %v2833 = vsel %vm1341, %v2825, -inf
        %2834 = vmax.xlane.f32.xlu0 %v2833
        %v2835 = vpop.xlane.xlu0 %2834
        %v2836 = vsel %vm1341, %v2826, -inf
        %2837 = vmax.xlane.f32.xlu0 %v2836
        %v2838 = vpop.xlane.xlu0 %2837
        %v2839 = vsub.f32 %v2823, %v2829
        %v2840 = vsub.f32 %v2824, %v2832
        %v2841 = vsub.f32 %v2825, %v2835
        %v2842 = vsub.f32 %v2826, %v2838
        %v2843 = vmul.f32 %v2839, 1.442695
        %v2844 = vpow.pop %v2843
        %v2845 = vmul.f32 %v2840, 1.442695
        %v2846 = vpow.pop %v2845
        %v2847 = vmul.f32 %v2841, 1.442695
        %v2848 = vpow.pop %v2847
        %v2849 = vmul.f32 %v2842, 1.442695
        %v2850 = vpow.pop %v2849
        %v2851 = vsel %vm1341, %v2844, 0.0
        %2852 = vadd.xlane.f32.xlu0 %v2851
        %v2853 = vpop.xlane.xlu0 %2852
        %v2854 = vsel %vm1341, %v2846, 0.0
        %2855 = vadd.xlane.f32.xlu0 %v2854
        %v2856 = vpop.xlane.xlu0 %2855
        %v2857 = vsel %vm1341, %v2848, 0.0
        %2858 = vadd.xlane.f32.xlu0 %v2857
        %v2859 = vpop.xlane.xlu0 %2858
        %v2860 = vsel %vm1341, %v2850, 0.0
        %2861 = vadd.xlane.f32.xlu0 %v2860
        %v2862 = vpop.xlane.xlu0 %2861
        %v2863 = vrcp.pop %v2853
        %v2864 = vmul.f32 %v2853, %v2863
        %v2865 = vsub.f32 1.0, %v2864
        %v2866 = vmul.f32 %v2863, %v2865
        %v2867 = vadd.f32 %v2863, %v2866
        %vm2868 = vweird.f32 %v2853
        %vm2869 = vweird.f32 %v2863
        %vm2870 = vmor %vm2868, %vm2869
        %v2871 = vsel %vm2870, %v2863, %v2867
        %v2872 = vand.u32 2147483647, %v2853
        %vm2873 = vcmp.eq.f32.partialorder %v2872, 8.507059e+37
        %v2874 = vand.u32 %v2853, 2147483648
        %v2875 = vor.u32 1.1754944e-38, %v2874
        %v2876 = vsel %vm2873, %v2875, %v2871
        %v2877 = vmul.f32 %v2844, %v2876
        %v2878 = vrcp.pop %v2856
        %v2879 = vmul.f32 %v2856, %v2878
        %v2880 = vsub.f32 1.0, %v2879
        %v2881 = vmul.f32 %v2878, %v2880
        %v2882 = vadd.f32 %v2878, %v2881
        %vm2883 = vweird.f32 %v2856
        %vm2884 = vweird.f32 %v2878
        %vm2885 = vmor %vm2883, %vm2884
        %v2886 = vsel %vm2885, %v2878, %v2882
        %v2887 = vand.u32 2147483647, %v2856
        %vm2888 = vcmp.eq.f32.partialorder %v2887, 8.507059e+37
        %v2889 = vand.u32 %v2856, 2147483648
        %v2890 = vor.u32 1.1754944e-38, %v2889
        %v2891 = vsel %vm2888, %v2890, %v2886
        %v2892 = vmul.f32 %v2846, %v2891
        %v2893 = vrcp.pop %v2859
        %v2894 = vmul.f32 %v2859, %v2893
        %v2895 = vsub.f32 1.0, %v2894
        %v2896 = vmul.f32 %v2893, %v2895
        %v2897 = vadd.f32 %v2893, %v2896
        %vm2898 = vweird.f32 %v2859
        %vm2899 = vweird.f32 %v2893
        %vm2900 = vmor %vm2898, %vm2899
        %v2901 = vsel %vm2900, %v2893, %v2897
        %v2902 = vand.u32 2147483647, %v2859
        %vm2903 = vcmp.eq.f32.partialorder %v2902, 8.507059e+37
        %v2904 = vand.u32 %v2859, 2147483648
        %v2905 = vor.u32 1.1754944e-38, %v2904
        %v2906 = vsel %vm2903, %v2905, %v2901
        %v2907 = vmul.f32 %v2848, %v2906
        %v2908 = vrcp.pop %v2862
        %v2909 = vmul.f32 %v2862, %v2908
        %v2910 = vsub.f32 1.0, %v2909
        %v2911 = vmul.f32 %v2908, %v2910
        %v2912 = vadd.f32 %v2908, %v2911
        %vm2913 = vweird.f32 %v2862
        %vm2914 = vweird.f32 %v2908
        %vm2915 = vmor %vm2913, %vm2914
        %v2916 = vsel %vm2915, %v2908, %v2912
        %v2917 = vand.u32 2147483647, %v2862
        %vm2918 = vcmp.eq.f32.partialorder %v2917, 8.507059e+37
        %v2919 = vand.u32 %v2862, 2147483648
        %v2920 = vor.u32 1.1754944e-38, %v2919
        %v2921 = vsel %vm2918, %v2920, %v2916
        %v2922 = vmul.f32 %v2850, %v2921
        %v2923 = vpack.c.bf16 %v2892, %v2877
        %v2924 = vpack.c.bf16 %v2922, %v2907
        %2925 = vrot.lane.b32.xlu0 %v2781, 64
        %v2926 = vpop.permute.xlu0 %2925
        %v2928 = vsel %vm1341, %v2923, 0
        %v2931 = vsel %vm1341, %v2924, 0
        %v2934 = vsel %vm1448, %v2926, 0
        %2936 = vmatpush.bf16.msra.mxu0 0
        %2937 = vmatpush.bf16.msra.mxu0 0
        %2938 = vmatpush.bf16.msra.mxu0 0
        %2939 = vmatpush.bf16.msra.mxu0 0
        %2940 = vmatpush.bf16.msra.mxu0 0
        %2941 = vmatpush.bf16.msra.mxu0 0
        %2942 = vmatpush.bf16.msra.mxu0 0
        %2943 = vmatpush.bf16.msra.mxu0 %v2934
        %2944 = vmatmul.bf16.gmra.mxu0 %v2928
        %v2945 = vpop.f32.mrf.mxu0
        %v2946 = vadd.f32 0.0, %v2945
        %v2947 = vpop.f32.mrf.mxu0
        %v2948 = vadd.f32 0.0, %v2947
        %2949 = vmatmul.bf16.gmra.mxu0 %v2931
        %v2950 = vpop.f32.mrf.mxu0
        %v2951 = vadd.f32 0.0, %v2950
        %v2952 = vpop.f32.mrf.mxu0
        %v2953 = vadd.f32 0.0, %v2952
        %2954 = vdwg.mxu0
        %v2955 = vmul.f32 %v2946, %v1210
        %v2956 = vmul.f32 %v2948, %v1211
        %v2957 = vmul.f32 %v2951, %v1212
        %v2958 = vmul.f32 %v2953, %v1213
        %v2959 = vadd.f32 %v2955, %v2956
        %v2960 = vadd.f32 %v2959, %v2957
        %v2961 = vadd.f32 %v2960, %v2958
        %v2962 = vpack.c.bf16 %v2961, %v2961
        %s2963 = scalar_lea.vmem %s8, 48
        %v2964 = vld [vmem:[%s2963] sm:$0xf]
        %v2965 = vld [vmem:[%s2963 + $0x4] sm:$0xf]
        %v2966 = vld [vmem:[%s2963 + $0x8] sm:$0xf]
        %v2967 = vld [vmem:[%s2963 + $0xc] sm:$0xf]
        %v2972 = vunpack.c.l.b16 %v2964
        %v2973 = vunpack.c.l.b16 %v2965
        %v2974 = vunpack.c.l.b16 %v2966
        %v2975 = vunpack.c.l.b16 %v2967
        %v2976 = vpack.c.b16 %v2973, %v2972
        %v2977 = vpack.c.b16 %v2975, %v2974
        %v2981 = vsel %vm1220, %v2962, 0
        %2983 = vmatpush.bf16.msra.mxu0 0
        %2984 = vmatpush.bf16.msra.mxu0 0
        %2985 = vmatpush.bf16.msra.mxu0 0
        %2986 = vmatpush.bf16.msra.mxu0 0
        %2987 = vmatpush.bf16.msra.mxu0 0
        %2988 = vmatpush.bf16.msra.mxu0 0
        %2989 = vmatpush.bf16.msra.mxu0 %v2977
        %2990 = vmatpush.bf16.msra.mxu0 %v2976
        %2991 = vmatmul.bf16.gmra.mxu0 %v2981
        %v2992 = vpop.f32.mrf.mxu0
        %v2993 = vadd.f32 0.0, %v2992
        %v2994 = vpop.f32.mrf.mxu0
        %2995 = vdwg.mxu0
        %v2996 = vadd.f32 %v2697, %v2993
        %s2997 = scalar_lea.vmem %s9, 3
        %v2998 = vld [vmem:[%s2997] sm:$0x1]
        %v3000 = vperm.slane %v2998, 0
        %v3002 = vadd.f32 %v2996, %v3000
        %s3003 = scalar_lea.vmem %s10, 3
        %v3004 = vld [vmem:[%s3003] sm:$0x1]
        %s3005 = scalar_lea.vmem %s11, 3
        %v3006 = vld [vmem:[%s3005] sm:$0x1]
        %v3007 = vsel %vm1220, %v3002, 0.0
        %3008 = vadd.xlane.f32.xlu0 %v3007
        %v3009 = vpop.xlane.xlu0 %3008
        %v3010 = vmul.f32 %v3009, %v1230
        %v3011 = vsub.f32 %v3002, %v3010
        %v3012 = vmul.f32 %v3011, %v3011
        %v3013 = vsel %vm1220, %v3012, 0.0
        %3014 = vadd.xlane.f32.xlu0 %v3013
        %v3015 = vpop.xlane.xlu0 %3014
        %v3016 = vmul.f32 %v3015, %v1230
        %v3017 = vadd.f32 %v3016, 1e-06
        %v3018 = vrsqrt.pop %v3017
        %v3019 = vmul.f32 %v3018, %v3017
        %v3020 = vmul.f32 %v3019, %v3018
        %v3021 = vmul.f32 0.5, %v3020
        %v3022 = vsub.f32 1.5, %v3021
        %v3023 = vmul.f32 %v3018, %v3022
        %vm3024 = vweird.f32 %v3017
        %vm3025 = vweird.f32 %v3018
        %vm3026 = vmor %vm3024, %vm3025
        %v3027 = vsel %vm3026, %v3018, %v3023
        %v3028 = vmul.f32 %v3011, %v3027
        %v3030 = vperm.slane %v3004, 0
        %v3032 = vmul.f32 %v3028, %v3030
        %v3034 = vperm.slane %v3006, 0
        %v3036 = vadd.f32 %v3032, %v3034
        %v3037 = vpack.c.bf16 %v3036, %v3036
        %s3038 = scalar_lea.vmem %s12, 48
        %v3039 = vld [vmem:[%s3038] sm:$0xf]
        %v3040 = vld [vmem:[%s3038 + $0x4] sm:$0xf]
        %v3041 = vld [vmem:[%s3038 + $0x8] sm:$0xf]
        %v3042 = vld [vmem:[%s3038 + $0xc] sm:$0xf]
        %s3043 = scalar_lea.vmem %s13, 3
        %v3044 = vld [vmem:[%s3043] sm:$0x1]
        %v3046 = vperm.slane %v3044, 0
        %v3052 = vunpack.c.l.b16 %v3039
        %v3053 = vunpack.c.l.b16 %v3040
        %v3054 = vunpack.c.l.b16 %v3041
        %v3055 = vunpack.c.l.b16 %v3042
        %v3056 = vpack.c.b16 %v3053, %v3052
        %v3057 = vpack.c.b16 %v3055, %v3054
        %v3061 = vsel %vm1220, %v3037, 0
        %3063 = vmatpush.bf16.msra.mxu0 0
        %3064 = vmatpush.bf16.msra.mxu0 0
        %3065 = vmatpush.bf16.msra.mxu0 0
        %3066 = vmatpush.bf16.msra.mxu0 0
        %3067 = vmatpush.bf16.msra.mxu0 0
        %3068 = vmatpush.bf16.msra.mxu0 0
        %3069 = vmatpush.bf16.msra.mxu0 %v3057
        %3070 = vmatpush.bf16.msra.mxu0 %v3056
        %3071 = vmatmul.bf16.gmra.mxu0 %v3061
        %v3072 = vpop.f32.mrf.mxu0
        %v3073 = vadd.f32 %v3046, %v3072
        %v3074 = vpop.f32.mrf.mxu0
        %3075 = vdwg.mxu0
        %v3076 = vmul.f32 %v3073, 0.5
        %v3077 = vmul.f32 %v3073, 0.70710677
        %v3078 = vand.u32 2147483647, %v3077
        %v3079 = vmul.f32 %v3078, 0.3275911
        %v3080 = vadd.f32 %v3079, 1.0
        %v3081 = vrcp.pop %v3080
        %v3082 = vmul.f32 %v3080, %v3081
        %v3083 = vsub.f32 1.0, %v3082
        %v3084 = vmul.f32 %v3081, %v3083
        %v3085 = vadd.f32 %v3081, %v3084
        %vm3086 = vweird.f32 %v3080
        %vm3087 = vweird.f32 %v3081
        %vm3088 = vmor %vm3086, %vm3087
        %v3089 = vsel %vm3088, %v3081, %v3085
        %v3090 = vand.u32 2147483647, %v3080
        %vm3091 = vcmp.eq.f32.partialorder %v3090, 8.507059e+37
        %v3092 = vand.u32 %v3080, 2147483648
        %v3093 = vor.u32 1.1754944e-38, %v3092
        %v3094 = vsel %vm3091, %v3093, %v3089
        %v3095 = vmul.f32 1.0, %v3094
        %v3096 = vmul.f32 %v3095, 1.0614054
        %v3097 = vadd.f32 %v3096, -1.4531521
        %v3098 = vmul.f32 %v3097, %v3095
        %v3099 = vadd.f32 %v3098, 1.4214138
        %v3100 = vmul.f32 %v3099, %v3095
        %v3101 = vadd.f32 %v3100, -0.28449672
        %v3102 = vmul.f32 %v3101, %v3095
        %v3103 = vadd.f32 %v3102, 0.2548296
        %v3104 = vmul.f32 %v3103, %v3095
        %v3105 = vsub.f32 0.0, %v3078
        %v3106 = vmul.f32 %v3105, %v3078
        %v3107 = vmul.f32 %v3106, 1.442695
        %v3108 = vpow.pop %v3107
        %v3109 = vmul.f32 %v3104, %v3108
        %v3110 = vsub.f32 1.0, %v3109
        %vm3111 = vcmp.ge.f32.partialorder %v3077, 0.0
        %v3112 = vsub.f32 0.0, %v3110
        %v3113 = vsel %vm3111, %v3110, %v3112
        %v3114 = vadd.f32 %v3113, 1.0
        %v3115 = vmul.f32 %v3076, %v3114
        %v3116 = vpack.c.bf16 %v3115, %v3115
        %s3117 = scalar_lea.vmem %s14, 192
        %v3118 = vld [vmem:[%s3117] sm:$0xf]
        %v3119 = vld [vmem:[%s3117 + $0x4] sm:$0xf]
        %v3120 = vld [vmem:[%s3117 + $0x8] sm:$0xf]
        %v3121 = vld [vmem:[%s3117 + $0xc] sm:$0xf]
        %v3122 = vld [vmem:[%s3117 + $0x10] sm:$0xf]
        %v3123 = vld [vmem:[%s3117 + $0x14] sm:$0xf]
        %v3124 = vld [vmem:[%s3117 + $0x18] sm:$0xf]
        %v3125 = vld [vmem:[%s3117 + $0x1c] sm:$0xf]
        %v3126 = vld [vmem:[%s3117 + $0x20] sm:$0xf]
        %v3127 = vld [vmem:[%s3117 + $0x24] sm:$0xf]
        %v3128 = vld [vmem:[%s3117 + $0x28] sm:$0xf]
        %v3129 = vld [vmem:[%s3117 + $0x2c] sm:$0xf]
        %v3130 = vld [vmem:[%s3117 + $0x30] sm:$0xf]
        %v3131 = vld [vmem:[%s3117 + $0x34] sm:$0xf]
        %v3132 = vld [vmem:[%s3117 + $0x38] sm:$0xf]
        %v3133 = vld [vmem:[%s3117 + $0x3c] sm:$0xf]
        %v3150 = vunpack.c.l.b16 %v3118
        %v3151 = vunpack.c.l.b16 %v3119
        %v3152 = vunpack.c.l.b16 %v3120
        %v3153 = vunpack.c.l.b16 %v3121
        %v3154 = vunpack.c.l.b16 %v3122
        %v3155 = vunpack.c.l.b16 %v3123
        %v3156 = vunpack.c.l.b16 %v3124
        %v3157 = vunpack.c.l.b16 %v3125
        %v3158 = vunpack.c.l.b16 %v3126
        %v3159 = vunpack.c.l.b16 %v3127
        %v3160 = vunpack.c.l.b16 %v3128
        %v3161 = vunpack.c.l.b16 %v3129
        %v3162 = vunpack.c.l.b16 %v3130
        %v3163 = vunpack.c.l.b16 %v3131
        %v3164 = vunpack.c.l.b16 %v3132
        %v3165 = vunpack.c.l.b16 %v3133
        %v3166 = vpack.c.b16 %v3151, %v3150
        %v3167 = vpack.c.b16 %v3153, %v3152
        %v3168 = vpack.c.b16 %v3155, %v3154
        %v3169 = vpack.c.b16 %v3157, %v3156
        %v3170 = vpack.c.b16 %v3159, %v3158
        %v3171 = vpack.c.b16 %v3161, %v3160
        %v3172 = vpack.c.b16 %v3163, %v3162
        %v3173 = vpack.c.b16 %v3165, %v3164
        %3182 = vmatpush.bf16.msra.mxu0 %v3173
        %3183 = vmatpush.bf16.msra.mxu0 %v3172
        %3184 = vmatpush.bf16.msra.mxu0 %v3171
        %3185 = vmatpush.bf16.msra.mxu0 %v3170
        %3186 = vmatpush.bf16.msra.mxu0 %v3169
        %3187 = vmatpush.bf16.msra.mxu0 %v3168
        %3188 = vmatpush.bf16.msra.mxu0 %v3167
        %3189 = vmatpush.bf16.msra.mxu0 %v3166
        %3190 = vmatmul.bf16.gmra.mxu0 %v3116
        %v3191 = vpop.f32.mrf.mxu0
        %v3192 = vadd.f32 0.0, %v3191
        %v3193 = vpop.f32.mrf.mxu0
        %3194 = vdwg.mxu0
        %v3195 = vadd.f32 %v3002, %v3192
        %s3196 = scalar_lea.vmem %s15, 3
        %v3197 = vld [vmem:[%s3196] sm:$0x1]
        %v3199 = vperm.slane %v3197, 0
        %v3201 = vadd.f32 %v3195, %v3199
        %v3202 = vsel %vm1220, %v3201, 0.0
        %3203 = vadd.xlane.f32.xlu0 %v3202
        %v3204 = vpop.xlane.xlu0 %3203
        %v3205 = vmul.f32 %v3204, %v1230
        %v3206 = vsub.f32 %v3201, %v3205
        %v3207 = vmul.f32 %v3206, %v3206
        %v3208 = vsel %vm1220, %v3207, 0.0
        %3209 = vadd.xlane.f32.xlu0 %v3208
        %v3210 = vpop.xlane.xlu0 %3209
        %v3211 = vmul.f32 %v3210, %v1230
        %v3212 = vadd.f32 %v3211, 1e-06
        %v3213 = vrsqrt.pop %v3212
        %v3214 = vmul.f32 %v3213, %v3212
        %v3215 = vmul.f32 %v3214, %v3213
        %v3216 = vmul.f32 0.5, %v3215
        %v3217 = vsub.f32 1.5, %v3216
        %v3218 = vmul.f32 %v3213, %v3217
        %vm3219 = vweird.f32 %v3212
        %vm3220 = vweird.f32 %v3213
        %vm3221 = vmor %vm3219, %vm3220
        %v3222 = vsel %vm3221, %v3213, %v3218
        %v3223 = vmul.f32 %v3206, %v3222
        %v3224 = vmul.f32 %v3223, %v2723
        %v3225 = vadd.f32 %v3224, %v2727
        %3227 = vrot.lane.b32.xlu0 %v3225, 32
        %v3228 = vpop.permute.xlu0 %3227
        %v3230 = vsel %vm1220, %v2729, %v3228
        %v3231 = vld [vmem:[%s18] sm:$0xff]
        %v3232 = vld [vmem:[%s18 + $0x8] sm:$0xff]
        %v3234 = vrot.slane %v3230, 1
        %vm3235 = vcmask 31744
        %v3237 = vsel %vm3235, %v3231, 0
        %v3240 = vsel %vm3235, %v3232, 0
        %v3242 = vsel %vm1448, %v3234, 0
        %3244 = vmatpush.msra.mxu0 0.0
        %3245 = vmatpush.msra.mxu0 0.0
        %3246 = vmatpush.msra.mxu0 0.0
        %3247 = vmatpush.msra.mxu0 0.0
        %3248 = vmatpush.msra.mxu0 0.0
        %3249 = vmatpush.msra.mxu0 0.0
        %3250 = vmatpush.msra.mxu0 0.0
        %3251 = vmatpush.msra.mxu0 0.0
        %3252 = vmatpush.msra.mxu0 0.0
        %3253 = vmatpush.msra.mxu0 0.0
        %3254 = vmatpush.msra.mxu0 0.0
        %3255 = vmatpush.msra.mxu0 0.0
        %3256 = vmatpush.msra.mxu0 0.0
        %3257 = vmatpush.msra.mxu0 0.0
        %3258 = vmatpush.msra.mxu0 0.0
        %3259 = vmatpush.msra.mxu0 %v3242
        %3260 = vmatmul.f32.gmra.mxu0 %v3237
        %v3261 = vpop.f32.mrf.mxu0
        %v3262 = vadd.f32 0.0, %v3261
        %3263 = vmatmul.f32.gmra.mxu0 %v3240
        %v3264 = vpop.f32.mrf.mxu0
        %v3265 = vadd.f32 0.0, %v3264
        %3266 = vdwg.mxu0
        %vm3267 = vcmask 523264
        %3268 = vst.msk [vmem:[%s788] sm:$0xff] %vm3267, %v3262
        %3269 = vst.msk [vmem:[%s788 + $0x8] sm:$0xff] %vm3267, %v3265
        %v3270 = vpack.c.bf16 %v3265, %v3262
        %v3271 = vld [vmem:[%s19] sm:$0xf]
        %v3272 = vld [vmem:[%s19 + $0x4] sm:$0xf]
        %v3273 = vld [vmem:[%s19 + $0x8] sm:$0xf]
        %v3274 = vld [vmem:[%s19 + $0xc] sm:$0xf]
        %v3275 = vld [vmem:[%s19 + $0x10] sm:$0xf]
        %v3276 = vld [vmem:[%s19 + $0x14] sm:$0xf]
        %v3277 = vld [vmem:[%s19 + $0x18] sm:$0xf]
        %v3278 = vld [vmem:[%s19 + $0x1c] sm:$0xf]
        %v3279 = vld [vmem:[%s20] sm:$0x1]
        %v3281 = vperm.slane %v3279, 0
        %v3291 = vunpack.c.l.b16 %v3271
        %v3292 = vunpack.c.l.b16 %v3272
        %v3293 = vunpack.c.l.b16 %v3273
        %v3294 = vunpack.c.l.b16 %v3274
        %v3295 = vunpack.c.l.b16 %v3275
        %v3296 = vunpack.c.l.b16 %v3276
        %v3297 = vunpack.c.l.b16 %v3277
        %v3298 = vunpack.c.l.b16 %v3278
        %v3299 = vpack.c.b16 %v3292, %v3291
        %v3300 = vpack.c.b16 %v3294, %v3293
        %v3301 = vpack.c.b16 %v3296, %v3295
        %v3302 = vpack.c.b16 %v3298, %v3297
        %v3308 = vsel %vm3267, %v3270, 0
        %3310 = vmatpush.bf16.msra.mxu0 0
        %3311 = vmatpush.bf16.msra.mxu0 0
        %3312 = vmatpush.bf16.msra.mxu0 0
        %3313 = vmatpush.bf16.msra.mxu0 0
        %3314 = vmatpush.bf16.msra.mxu0 %v3302
        %3315 = vmatpush.bf16.msra.mxu0 %v3301
        %3316 = vmatpush.bf16.msra.mxu0 %v3300
        %3317 = vmatpush.bf16.msra.mxu0 %v3299
        %3318 = vmatmul.bf16.gmra.mxu0 %v3308
        %v3319 = vpop.f32.mrf.mxu0
        %v3320 = vadd.f32 %v3281, %v3319
        %v3321 = vpop.f32.mrf.mxu0
        %v3322 = vadd.f32 %v3281, %v3321
        %3323 = vdwg.mxu0
        %v3324 = vmul.f32 %v3320, 0.5
        %v3325 = vmul.f32 %v3322, 0.5
        %v3326 = vmul.f32 %v3320, 0.70710677
        %v3327 = vmul.f32 %v3322, 0.70710677
        %v3328 = vand.u32 2147483647, %v3326
        %v3329 = vand.u32 2147483647, %v3327
        %v3330 = vmul.f32 %v3328, 0.3275911
        %v3331 = vmul.f32 %v3329, 0.3275911
        %v3332 = vadd.f32 %v3330, 1.0
        %v3333 = vadd.f32 %v3331, 1.0
        %v3334 = vrcp.pop %v3332
        %v3335 = vmul.f32 %v3332, %v3334
        %v3336 = vsub.f32 1.0, %v3335
        %v3337 = vmul.f32 %v3334, %v3336
        %v3338 = vadd.f32 %v3334, %v3337
        %vm3339 = vweird.f32 %v3332
        %vm3340 = vweird.f32 %v3334
        %vm3341 = vmor %vm3339, %vm3340
        %v3342 = vsel %vm3341, %v3334, %v3338
        %v3343 = vand.u32 2147483647, %v3332
        %vm3344 = vcmp.eq.f32.partialorder %v3343, 8.507059e+37
        %v3345 = vand.u32 %v3332, 2147483648
        %v3346 = vor.u32 1.1754944e-38, %v3345
        %v3347 = vsel %vm3344, %v3346, %v3342
        %v3348 = vmul.f32 1.0, %v3347
        %v3349 = vrcp.pop %v3333
        %v3350 = vmul.f32 %v3333, %v3349
        %v3351 = vsub.f32 1.0, %v3350
        %v3352 = vmul.f32 %v3349, %v3351
        %v3353 = vadd.f32 %v3349, %v3352
        %vm3354 = vweird.f32 %v3333
        %vm3355 = vweird.f32 %v3349
        %vm3356 = vmor %vm3354, %vm3355
        %v3357 = vsel %vm3356, %v3349, %v3353
        %v3358 = vand.u32 2147483647, %v3333
        %vm3359 = vcmp.eq.f32.partialorder %v3358, 8.507059e+37
        %v3360 = vand.u32 %v3333, 2147483648
        %v3361 = vor.u32 1.1754944e-38, %v3360
        %v3362 = vsel %vm3359, %v3361, %v3357
        %v3363 = vmul.f32 1.0, %v3362
        %v3364 = vmul.f32 %v3348, 1.0614054
        %v3365 = vmul.f32 %v3363, 1.0614054
        %v3366 = vadd.f32 %v3364, -1.4531521
        %v3367 = vadd.f32 %v3365, -1.4531521
        %v3368 = vmul.f32 %v3366, %v3348
        %v3369 = vmul.f32 %v3367, %v3363
        %v3370 = vadd.f32 %v3368, 1.4214138
        %v3371 = vadd.f32 %v3369, 1.4214138
        %v3372 = vmul.f32 %v3370, %v3348
        %v3373 = vmul.f32 %v3371, %v3363
        %v3374 = vadd.f32 %v3372, -0.28449672
        %v3375 = vadd.f32 %v3373, -0.28449672
        %v3376 = vmul.f32 %v3374, %v3348
        %v3377 = vmul.f32 %v3375, %v3363
        %v3378 = vadd.f32 %v3376, 0.2548296
        %v3379 = vadd.f32 %v3377, 0.2548296
        %v3380 = vmul.f32 %v3378, %v3348
        %v3381 = vmul.f32 %v3379, %v3363
        %v3382 = vsub.f32 0.0, %v3328
        %v3383 = vsub.f32 0.0, %v3329
        %v3384 = vmul.f32 %v3382, %v3328
        %v3385 = vmul.f32 %v3383, %v3329
        %v3386 = vmul.f32 %v3384, 1.442695
        %v3387 = vpow.pop %v3386
        %v3388 = vmul.f32 %v3385, 1.442695
        %v3389 = vpow.pop %v3388
        %v3390 = vmul.f32 %v3380, %v3387
        %v3391 = vmul.f32 %v3381, %v3389
        %v3392 = vsub.f32 1.0, %v3390
        %v3393 = vsub.f32 1.0, %v3391
        %vm3394 = vcmp.ge.f32.partialorder %v3326, 0.0
        %vm3395 = vcmp.ge.f32.partialorder %v3327, 0.0
        %v3396 = vsub.f32 0.0, %v3392
        %v3397 = vsub.f32 0.0, %v3393
        %v3398 = vsel %vm3394, %v3392, %v3396
        %v3399 = vsel %vm3395, %v3393, %v3397
        %v3400 = vadd.f32 %v3398, 1.0
        %v3401 = vadd.f32 %v3399, 1.0
        %v3402 = vmul.f32 %v3324, %v3400
        %v3403 = vmul.f32 %v3325, %v3401
        %v3404 = vpack.c.bf16 %v3403, %v3402
        %v3405 = vld [vmem:[%s21] sm:$0xf]
        %v3406 = vld [vmem:[%s21 + $0x4] sm:$0xf]
        %v3407 = vld [vmem:[%s21 + $0x8] sm:$0xf]
        %v3408 = vld [vmem:[%s21 + $0xc] sm:$0xf]
        %v3409 = vld [vmem:[%s21 + $0x10] sm:$0xf]
        %v3410 = vld [vmem:[%s21 + $0x14] sm:$0xf]
        %v3411 = vld [vmem:[%s21 + $0x18] sm:$0xf]
        %v3412 = vld [vmem:[%s21 + $0x1c] sm:$0xf]
        %v3413 = vld [vmem:[%s21 + $0x20] sm:$0xf]
        %v3414 = vld [vmem:[%s21 + $0x24] sm:$0xf]
        %v3415 = vld [vmem:[%s21 + $0x28] sm:$0xf]
        %v3416 = vld [vmem:[%s21 + $0x2c] sm:$0xf]
        %v3417 = vld [vmem:[%s21 + $0x30] sm:$0xf]
        %v3418 = vld [vmem:[%s21 + $0x34] sm:$0xf]
        %v3419 = vld [vmem:[%s21 + $0x38] sm:$0xf]
        %v3420 = vld [vmem:[%s21 + $0x3c] sm:$0xf]
        %v3421 = vld [vmem:[%s22] sm:$0x1]
        %v3423 = vperm.slane %v3421, 0
        %v3441 = vunpack.c.l.b16 %v3405
        %v3442 = vunpack.c.l.b16 %v3406
        %v3443 = vunpack.c.l.b16 %v3407
        %v3444 = vunpack.c.l.b16 %v3408
        %v3445 = vunpack.c.l.b16 %v3409
        %v3446 = vunpack.c.l.b16 %v3410
        %v3447 = vunpack.c.l.b16 %v3411
        %v3448 = vunpack.c.l.b16 %v3412
        %v3449 = vunpack.c.l.b16 %v3413
        %v3450 = vunpack.c.l.b16 %v3414
        %v3451 = vunpack.c.l.b16 %v3415
        %v3452 = vunpack.c.l.b16 %v3416
        %v3453 = vunpack.c.l.b16 %v3417
        %v3454 = vunpack.c.l.b16 %v3418
        %v3455 = vunpack.c.l.b16 %v3419
        %v3456 = vunpack.c.l.b16 %v3420
        %v3457 = vpack.c.b16 %v3442, %v3441
        %v3458 = vpack.c.b16 %v3444, %v3443
        %v3459 = vpack.c.b16 %v3446, %v3445
        %v3460 = vpack.c.b16 %v3448, %v3447
        %v3461 = vpack.c.b16 %v3450, %v3449
        %v3462 = vpack.c.b16 %v3452, %v3451
        %v3463 = vpack.c.b16 %v3454, %v3453
        %v3464 = vpack.c.b16 %v3456, %v3455
        %3473 = vmatpush.bf16.msra.mxu0 %v3464
        %3474 = vmatpush.bf16.msra.mxu0 %v3463
        %3475 = vmatpush.bf16.msra.mxu0 %v3462
        %3476 = vmatpush.bf16.msra.mxu0 %v3461
        %3477 = vmatpush.bf16.msra.mxu0 %v3460
        %3478 = vmatpush.bf16.msra.mxu0 %v3459
        %3479 = vmatpush.bf16.msra.mxu0 %v3458
        %3480 = vmatpush.bf16.msra.mxu0 %v3457
        %3481 = vmatmul.bf16.gmra.mxu0 %v3404
        %v3482 = vpop.f32.mrf.mxu0
        %v3483 = vadd.f32 %v3423, %v3482
        %v3484 = vpop.f32.mrf.mxu0
        %v3485 = vadd.f32 %v3423, %v3484
        %3486 = vdwg.mxu0
        %3487 = vst [vmem:[%s795] sm:$0xff] %v3483
        %3488 = vst [vmem:[%s795 + $0x8] sm:$0xff] %v3485
        %v3489 = vld [vmem:[%s23] sm:$0xff]
        %v3490 = vld [vmem:[%s23 + $0x8] sm:$0xff]
        %v3491 = vld [vmem:[%s23 + $0x10] sm:$0xff]
        %v3492 = vld [vmem:[%s23 + $0x18] sm:$0xff]
        %v3493 = vld [vmem:[%s23 + $0x20] sm:$0xff]
        %v3494 = vld [vmem:[%s23 + $0x28] sm:$0xff]
        %v3495 = vld [vmem:[%s23 + $0x30] sm:$0xff]
        %v3496 = vld [vmem:[%s23 + $0x38] sm:$0xff]
        %v3497 = vld [vmem:[%s23 + $0x40] sm:$0xff]
        %v3498 = vld [vmem:[%s23 + $0x48] sm:$0xff]
        %v3499 = vld [vmem:[%s23 + $0x50] sm:$0xff]
        %v3500 = vld [vmem:[%s23 + $0x58] sm:$0xff]
        %v3501 = vld [vmem:[%s23 + $0x60] sm:$0xff]
        %v3502 = vld [vmem:[%s23 + $0x68] sm:$0xff]
        %v3503 = vld [vmem:[%s23 + $0x70] sm:$0xff]
        %v3504 = vld [vmem:[%s23 + $0x78] sm:$0xff]
        %v3505 = vld [vmem:[%s23 + $0x80] sm:$0xff]
        %v3506 = vld [vmem:[%s23 + $0x88] sm:$0xff]
        %v3507 = vld [vmem:[%s23 + $0x90] sm:$0xff]
        %v3508 = vld [vmem:[%s23 + $0x98] sm:$0xff]
        %v3509 = vld [vmem:[%s23 + $0xa0] sm:$0xff]
        %v3510 = vld [vmem:[%s23 + $0xa8] sm:$0xff]
        %v3511 = vld [vmem:[%s23 + $0xb0] sm:$0xff]
        %v3512 = vld [vmem:[%s23 + $0xb8] sm:$0xff]
        %v3513 = vld [vmem:[%s23 + $0xc0] sm:$0xff]
        %v3514 = vld [vmem:[%s23 + $0xc8] sm:$0xff]
        %v3515 = vld [vmem:[%s23 + $0xd0] sm:$0xff]
        %v3516 = vld [vmem:[%s23 + $0xd8] sm:$0xff]
        %v3517 = vld [vmem:[%s23 + $0xe0] sm:$0xff]
        %v3518 = vld [vmem:[%s23 + $0xe8] sm:$0xff]
        %v3519 = vld [vmem:[%s23 + $0xf0] sm:$0xff]
        %v3520 = vld [vmem:[%s23 + $0xf8] sm:$0xff]
        %v3521 = vld [vmem:[%s23 + $0x100] sm:$0xff]
        %v3522 = vld [vmem:[%s23 + $0x108] sm:$0xff]
        %v3523 = vld [vmem:[%s23 + $0x110] sm:$0xff]
        %v3524 = vld [vmem:[%s23 + $0x118] sm:$0xff]
        %v3525 = vld [vmem:[%s23 + $0x120] sm:$0xff]
        %v3526 = vld [vmem:[%s23 + $0x128] sm:$0xff]
        %v3527 = vld [vmem:[%s23 + $0x130] sm:$0xff]
        %v3528 = vld [vmem:[%s23 + $0x138] sm:$0xff]
        %v3529 = vld [vmem:[%s23 + $0x140] sm:$0xff]
        %v3530 = vld [vmem:[%s23 + $0x148] sm:$0xff]
        %v3531 = vld [vmem:[%s23 + $0x150] sm:$0xff]
        %v3532 = vld [vmem:[%s23 + $0x158] sm:$0xff]
        %v3533 = vld [vmem:[%s23 + $0x160] sm:$0xff]
        %v3534 = vld [vmem:[%s23 + $0x168] sm:$0xff]
        %v3535 = vld [vmem:[%s23 + $0x170] sm:$0xff]
        %v3536 = vld [vmem:[%s23 + $0x178] sm:$0xff]
        %v3537 = vld [vmem:[%s23 + $0x180] sm:$0xff]
        %v3538 = vld [vmem:[%s23 + $0x188] sm:$0xff]
        %v3539 = vld [vmem:[%s23 + $0x190] sm:$0xff]
        %v3540 = vld [vmem:[%s23 + $0x198] sm:$0xff]
        %v3541 = vld [vmem:[%s23 + $0x1a0] sm:$0xff]
        %v3542 = vld [vmem:[%s23 + $0x1a8] sm:$0xff]
        %v3543 = vld [vmem:[%s23 + $0x1b0] sm:$0xff]
        %v3544 = vld [vmem:[%s23 + $0x1b8] sm:$0xff]
        %v3545 = vld [vmem:[%s23 + $0x1c0] sm:$0xff]
        %v3546 = vld [vmem:[%s23 + $0x1c8] sm:$0xff]
        %v3547 = vld [vmem:[%s23 + $0x1d0] sm:$0xff]
        %v3548 = vld [vmem:[%s23 + $0x1d8] sm:$0xff]
        %v3549 = vld [vmem:[%s23 + $0x1e0] sm:$0xff]
        %v3550 = vld [vmem:[%s23 + $0x1e8] sm:$0xff]
        %v3551 = vld [vmem:[%s23 + $0x1f0] sm:$0xff]
        %v3552 = vld [vmem:[%s23 + $0x1f8] sm:$0xff]
        %v3553 = vld [vmem:[%s23 + $0x200] sm:$0xff]
        %v3554 = vld [vmem:[%s23 + $0x208] sm:$0xff]
        %v3555 = vld [vmem:[%s23 + $0x210] sm:$0xff]
        %v3556 = vld [vmem:[%s23 + $0x218] sm:$0xff]
        %v3557 = vld [vmem:[%s23 + $0x220] sm:$0xff]
        %v3558 = vld [vmem:[%s23 + $0x228] sm:$0xff]
        %v3559 = vld [vmem:[%s23 + $0x230] sm:$0xff]
        %v3560 = vld [vmem:[%s23 + $0x238] sm:$0xff]
        %v3561 = vld [vmem:[%s23 + $0x240] sm:$0xff]
        %v3562 = vld [vmem:[%s23 + $0x248] sm:$0xff]
        %v3563 = vld [vmem:[%s23 + $0x250] sm:$0xff]
        %v3564 = vld [vmem:[%s23 + $0x258] sm:$0xff]
        %v3565 = vld [vmem:[%s23 + $0x260] sm:$0xff]
        %v3566 = vld [vmem:[%s23 + $0x268] sm:$0xff]
        %v3567 = vld [vmem:[%s23 + $0x270] sm:$0xff]
        %v3568 = vld [vmem:[%s23 + $0x278] sm:$0xff]
        %v3569 = vld [vmem:[%s23 + $0x280] sm:$0xff]
        %v3570 = vld [vmem:[%s23 + $0x288] sm:$0xff]
        %v3571 = vld [vmem:[%s23 + $0x290] sm:$0xff]
        %v3572 = vld [vmem:[%s23 + $0x298] sm:$0xff]
        %v3573 = vld [vmem:[%s23 + $0x2a0] sm:$0xff]
        %v3574 = vld [vmem:[%s23 + $0x2a8] sm:$0xff]
        %v3575 = vld [vmem:[%s23 + $0x2b0] sm:$0xff]
        %v3576 = vld [vmem:[%s23 + $0x2b8] sm:$0xff]
        %v3577 = vld [vmem:[%s23 + $0x2c0] sm:$0xff]
        %v3578 = vld [vmem:[%s23 + $0x2c8] sm:$0xff]
        %v3579 = vld [vmem:[%s23 + $0x2d0] sm:$0xff]
        %v3580 = vld [vmem:[%s23 + $0x2d8] sm:$0xff]
        %v3581 = vld [vmem:[%s23 + $0x2e0] sm:$0xff]
        %v3582 = vld [vmem:[%s23 + $0x2e8] sm:$0xff]
        %v3583 = vld [vmem:[%s23 + $0x2f0] sm:$0xff]
        %v3584 = vld [vmem:[%s23 + $0x2f8] sm:$0xff]
        %v3585 = vld [vmem:[%s23 + $0x300] sm:$0xff]
        %v3586 = vld [vmem:[%s23 + $0x308] sm:$0xff]
        %vm3587 = vcmask 130048
        %v3589 = vsel %vm3587, %v3489, 0
        %v3592 = vsel %vm3587, %v3490, 0
        %v3595 = vsel %vm3587, %v3491, 0
        %v3598 = vsel %vm3587, %v3492, 0
        %v3601 = vsel %vm3587, %v3493, 0
        %v3604 = vsel %vm3587, %v3494, 0
        %v3607 = vsel %vm3587, %v3495, 0
        %v3610 = vsel %vm3587, %v3496, 0
        %v3613 = vsel %vm3587, %v3497, 0
        %v3616 = vsel %vm3587, %v3498, 0
        %v3619 = vsel %vm3587, %v3499, 0
        %v3622 = vsel %vm3587, %v3500, 0
        %v3625 = vsel %vm3587, %v3501, 0
        %v3628 = vsel %vm3587, %v3502, 0
        %v3631 = vsel %vm3587, %v3503, 0
        %v3634 = vsel %vm3587, %v3504, 0
        %v3637 = vsel %vm3587, %v3505, 0
        %v3640 = vsel %vm3587, %v3506, 0
        %v3643 = vsel %vm3587, %v3507, 0
        %v3646 = vsel %vm3587, %v3508, 0
        %v3649 = vsel %vm3587, %v3509, 0
        %v3652 = vsel %vm3587, %v3510, 0
        %v3655 = vsel %vm3587, %v3511, 0
        %v3658 = vsel %vm3587, %v3512, 0
        %v3661 = vsel %vm3587, %v3513, 0
        %v3664 = vsel %vm3587, %v3514, 0
        %v3667 = vsel %vm3587, %v3515, 0
        %v3670 = vsel %vm3587, %v3516, 0
        %v3673 = vsel %vm3587, %v3517, 0
        %v3676 = vsel %vm3587, %v3518, 0
        %v3679 = vsel %vm3587, %v3519, 0
        %v3682 = vsel %vm3587, %v3520, 0
        %v3685 = vsel %vm3587, %v3521, 0
        %v3688 = vsel %vm3587, %v3522, 0
        %v3691 = vsel %vm3587, %v3523, 0
        %v3694 = vsel %vm3587, %v3524, 0
        %v3697 = vsel %vm3587, %v3525, 0
        %v3700 = vsel %vm3587, %v3526, 0
        %v3703 = vsel %vm3587, %v3527, 0
        %v3706 = vsel %vm3587, %v3528, 0
        %v3709 = vsel %vm3587, %v3529, 0
        %v3712 = vsel %vm3587, %v3530, 0
        %v3715 = vsel %vm3587, %v3531, 0
        %v3718 = vsel %vm3587, %v3532, 0
        %v3721 = vsel %vm3587, %v3533, 0
        %v3724 = vsel %vm3587, %v3534, 0
        %v3727 = vsel %vm3587, %v3535, 0
        %v3730 = vsel %vm3587, %v3536, 0
        %v3733 = vsel %vm3587, %v3537, 0
        %v3736 = vsel %vm3587, %v3538, 0
        %v3739 = vsel %vm3587, %v3539, 0
        %v3742 = vsel %vm3587, %v3540, 0
        %v3745 = vsel %vm3587, %v3541, 0
        %v3748 = vsel %vm3587, %v3542, 0
        %v3751 = vsel %vm3587, %v3543, 0
        %v3754 = vsel %vm3587, %v3544, 0
        %v3757 = vsel %vm3587, %v3545, 0
        %v3760 = vsel %vm3587, %v3546, 0
        %v3763 = vsel %vm3587, %v3547, 0
        %v3766 = vsel %vm3587, %v3548, 0
        %v3769 = vsel %vm3587, %v3549, 0
        %v3772 = vsel %vm3587, %v3550, 0
        %v3775 = vsel %vm3587, %v3551, 0
        %v3778 = vsel %vm3587, %v3552, 0
        %v3781 = vsel %vm3587, %v3553, 0
        %v3784 = vsel %vm3587, %v3554, 0
        %v3787 = vsel %vm3587, %v3555, 0
        %v3790 = vsel %vm3587, %v3556, 0
        %v3793 = vsel %vm3587, %v3557, 0
        %v3796 = vsel %vm3587, %v3558, 0
        %v3799 = vsel %vm3587, %v3559, 0
        %v3802 = vsel %vm3587, %v3560, 0
        %v3805 = vsel %vm3587, %v3561, 0
        %v3808 = vsel %vm3587, %v3562, 0
        %v3811 = vsel %vm3587, %v3563, 0
        %v3814 = vsel %vm3587, %v3564, 0
        %v3817 = vsel %vm3587, %v3565, 0
        %v3820 = vsel %vm3587, %v3566, 0
        %v3823 = vsel %vm3587, %v3567, 0
        %v3826 = vsel %vm3587, %v3568, 0
        %v3829 = vsel %vm3587, %v3569, 0
        %v3832 = vsel %vm3587, %v3570, 0
        %v3835 = vsel %vm3587, %v3571, 0
        %v3838 = vsel %vm3587, %v3572, 0
        %v3841 = vsel %vm3587, %v3573, 0
        %v3844 = vsel %vm3587, %v3574, 0
        %v3847 = vsel %vm3587, %v3575, 0
        %v3850 = vsel %vm3587, %v3576, 0
        %v3853 = vsel %vm3587, %v3577, 0
        %v3856 = vsel %vm3587, %v3578, 0
        %v3859 = vsel %vm3587, %v3579, 0
        %v3862 = vsel %vm3587, %v3580, 0
        %v3865 = vsel %vm3587, %v3581, 0
        %v3868 = vsel %vm3587, %v3582, 0
        %v3871 = vsel %vm3587, %v3583, 0
        %v3874 = vsel %vm3587, %v3584, 0
        %v3877 = vsel %vm3587, %v3585, 0
        %v3880 = vsel %vm3587, %v3586, 0
        %3882 = vmatpush.msra.mxu0 0.0
        %3883 = vmatpush.msra.mxu0 0.0
        %3884 = vmatpush.msra.mxu0 0.0
        %3885 = vmatpush.msra.mxu0 0.0
        %3886 = vmatpush.msra.mxu0 0.0
        %3887 = vmatpush.msra.mxu0 0.0
        %3888 = vmatpush.msra.mxu0 0.0
        %3889 = vmatpush.msra.mxu0 0.0
        %3890 = vmatpush.msra.mxu0 0.0
        %3891 = vmatpush.msra.mxu0 0.0
        %3892 = vmatpush.msra.mxu0 0.0
        %3893 = vmatpush.msra.mxu0 0.0
        %3894 = vmatpush.msra.mxu0 0.0
        %3895 = vmatpush.msra.mxu0 0.0
        %3896 = vmatpush.msra.mxu0 %v3485
        %3897 = vmatpush.msra.mxu0 %v3483
        %3898 = vmatmul.f32.gmra.mxu0 %v3589
        %v3899 = vpop.f32.mrf.mxu0
        %v3900 = vadd.f32 0.0, %v3899
        %3901 = vmatmul.f32.gmra.mxu0 %v3592
        %v3902 = vpop.f32.mrf.mxu0
        %v3903 = vadd.f32 0.0, %v3902
        %3904 = vmatmul.f32.gmra.mxu0 %v3595
        %v3905 = vpop.f32.mrf.mxu0
        %v3906 = vadd.f32 0.0, %v3905
        %3907 = vmatmul.f32.gmra.mxu0 %v3598
        %v3908 = vpop.f32.mrf.mxu0
        %v3909 = vadd.f32 0.0, %v3908
        %3910 = vmatmul.f32.gmra.mxu0 %v3601
        %v3911 = vpop.f32.mrf.mxu0
        %v3912 = vadd.f32 0.0, %v3911
        %3913 = vmatmul.f32.gmra.mxu0 %v3604
        %v3914 = vpop.f32.mrf.mxu0
        %v3915 = vadd.f32 0.0, %v3914
        %3916 = vmatmul.f32.gmra.mxu0 %v3607
        %v3917 = vpop.f32.mrf.mxu0
        %v3918 = vadd.f32 0.0, %v3917
        %3919 = vmatmul.f32.gmra.mxu0 %v3610
        %v3920 = vpop.f32.mrf.mxu0
        %v3921 = vadd.f32 0.0, %v3920
        %3922 = vmatmul.f32.gmra.mxu0 %v3613
        %v3923 = vpop.f32.mrf.mxu0
        %v3924 = vadd.f32 0.0, %v3923
        %3925 = vmatmul.f32.gmra.mxu0 %v3616
        %v3926 = vpop.f32.mrf.mxu0
        %v3927 = vadd.f32 0.0, %v3926
        %3928 = vmatmul.f32.gmra.mxu0 %v3619
        %v3929 = vpop.f32.mrf.mxu0
        %v3930 = vadd.f32 0.0, %v3929
        %3931 = vmatmul.f32.gmra.mxu0 %v3622
        %v3932 = vpop.f32.mrf.mxu0
        %v3933 = vadd.f32 0.0, %v3932
        %3934 = vmatmul.f32.gmra.mxu0 %v3625
        %v3935 = vpop.f32.mrf.mxu0
        %v3936 = vadd.f32 0.0, %v3935
        %3937 = vmatmul.f32.gmra.mxu0 %v3628
        %v3938 = vpop.f32.mrf.mxu0
        %v3939 = vadd.f32 0.0, %v3938
        %3940 = vmatmul.f32.gmra.mxu0 %v3631
        %v3941 = vpop.f32.mrf.mxu0
        %v3942 = vadd.f32 0.0, %v3941
        %3943 = vmatmul.f32.gmra.mxu0 %v3634
        %v3944 = vpop.f32.mrf.mxu0
        %v3945 = vadd.f32 0.0, %v3944
        %3946 = vmatmul.f32.gmra.mxu0 %v3637
        %v3947 = vpop.f32.mrf.mxu0
        %v3948 = vadd.f32 0.0, %v3947
        %3949 = vmatmul.f32.gmra.mxu0 %v3640
        %v3950 = vpop.f32.mrf.mxu0
        %v3951 = vadd.f32 0.0, %v3950
        %3952 = vmatmul.f32.gmra.mxu0 %v3643
        %v3953 = vpop.f32.mrf.mxu0
        %v3954 = vadd.f32 0.0, %v3953
        %3955 = vmatmul.f32.gmra.mxu0 %v3646
        %v3956 = vpop.f32.mrf.mxu0
        %v3957 = vadd.f32 0.0, %v3956
        %3958 = vmatmul.f32.gmra.mxu0 %v3649
        %v3959 = vpop.f32.mrf.mxu0
        %v3960 = vadd.f32 0.0, %v3959
        %3961 = vmatmul.f32.gmra.mxu0 %v3652
        %v3962 = vpop.f32.mrf.mxu0
        %v3963 = vadd.f32 0.0, %v3962
        %3964 = vmatmul.f32.gmra.mxu0 %v3655
        %v3965 = vpop.f32.mrf.mxu0
        %v3966 = vadd.f32 0.0, %v3965
        %3967 = vmatmul.f32.gmra.mxu0 %v3658
        %v3968 = vpop.f32.mrf.mxu0
        %v3969 = vadd.f32 0.0, %v3968
        %3970 = vmatmul.f32.gmra.mxu0 %v3661
        %v3971 = vpop.f32.mrf.mxu0
        %v3972 = vadd.f32 0.0, %v3971
        %3973 = vmatmul.f32.gmra.mxu0 %v3664
        %v3974 = vpop.f32.mrf.mxu0
        %v3975 = vadd.f32 0.0, %v3974
        %3976 = vmatmul.f32.gmra.mxu0 %v3667
        %v3977 = vpop.f32.mrf.mxu0
        %v3978 = vadd.f32 0.0, %v3977
        %3979 = vmatmul.f32.gmra.mxu0 %v3670
        %v3980 = vpop.f32.mrf.mxu0
        %v3981 = vadd.f32 0.0, %v3980
        %3982 = vmatmul.f32.gmra.mxu0 %v3673
        %v3983 = vpop.f32.mrf.mxu0
        %v3984 = vadd.f32 0.0, %v3983
        %3985 = vmatmul.f32.gmra.mxu0 %v3676
        %v3986 = vpop.f32.mrf.mxu0
        %v3987 = vadd.f32 0.0, %v3986
        %3988 = vmatmul.f32.gmra.mxu0 %v3679
        %v3989 = vpop.f32.mrf.mxu0
        %v3990 = vadd.f32 0.0, %v3989
        %3991 = vmatmul.f32.gmra.mxu0 %v3682
        %v3992 = vpop.f32.mrf.mxu0
        %v3993 = vadd.f32 0.0, %v3992
        %3994 = vmatmul.f32.gmra.mxu0 %v3685
        %v3995 = vpop.f32.mrf.mxu0
        %v3996 = vadd.f32 0.0, %v3995
        %3997 = vmatmul.f32.gmra.mxu0 %v3688
        %v3998 = vpop.f32.mrf.mxu0
        %v3999 = vadd.f32 0.0, %v3998
        %4000 = vmatmul.f32.gmra.mxu0 %v3691
        %v4001 = vpop.f32.mrf.mxu0
        %v4002 = vadd.f32 0.0, %v4001
        %4003 = vmatmul.f32.gmra.mxu0 %v3694
        %v4004 = vpop.f32.mrf.mxu0
        %v4005 = vadd.f32 0.0, %v4004
        %4006 = vmatmul.f32.gmra.mxu0 %v3697
        %v4007 = vpop.f32.mrf.mxu0
        %v4008 = vadd.f32 0.0, %v4007
        %4009 = vmatmul.f32.gmra.mxu0 %v3700
        %v4010 = vpop.f32.mrf.mxu0
        %v4011 = vadd.f32 0.0, %v4010
        %4012 = vmatmul.f32.gmra.mxu0 %v3703
        %v4013 = vpop.f32.mrf.mxu0
        %v4014 = vadd.f32 0.0, %v4013
        %4015 = vmatmul.f32.gmra.mxu0 %v3706
        %v4016 = vpop.f32.mrf.mxu0
        %v4017 = vadd.f32 0.0, %v4016
        %4018 = vmatmul.f32.gmra.mxu0 %v3709
        %v4019 = vpop.f32.mrf.mxu0
        %v4020 = vadd.f32 0.0, %v4019
        %4021 = vmatmul.f32.gmra.mxu0 %v3712
        %v4022 = vpop.f32.mrf.mxu0
        %v4023 = vadd.f32 0.0, %v4022
        %4024 = vmatmul.f32.gmra.mxu0 %v3715
        %v4025 = vpop.f32.mrf.mxu0
        %v4026 = vadd.f32 0.0, %v4025
        %4027 = vmatmul.f32.gmra.mxu0 %v3718
        %v4028 = vpop.f32.mrf.mxu0
        %v4029 = vadd.f32 0.0, %v4028
        %4030 = vmatmul.f32.gmra.mxu0 %v3721
        %v4031 = vpop.f32.mrf.mxu0
        %v4032 = vadd.f32 0.0, %v4031
        %4033 = vmatmul.f32.gmra.mxu0 %v3724
        %v4034 = vpop.f32.mrf.mxu0
        %v4035 = vadd.f32 0.0, %v4034
        %4036 = vmatmul.f32.gmra.mxu0 %v3727
        %v4037 = vpop.f32.mrf.mxu0
        %v4038 = vadd.f32 0.0, %v4037
        %4039 = vmatmul.f32.gmra.mxu0 %v3730
        %v4040 = vpop.f32.mrf.mxu0
        %v4041 = vadd.f32 0.0, %v4040
        %4042 = vmatmul.f32.gmra.mxu0 %v3733
        %v4043 = vpop.f32.mrf.mxu0
        %v4044 = vadd.f32 0.0, %v4043
        %4045 = vmatmul.f32.gmra.mxu0 %v3736
        %v4046 = vpop.f32.mrf.mxu0
        %v4047 = vadd.f32 0.0, %v4046
        %4048 = vmatmul.f32.gmra.mxu0 %v3739
        %v4049 = vpop.f32.mrf.mxu0
        %v4050 = vadd.f32 0.0, %v4049
        %4051 = vmatmul.f32.gmra.mxu0 %v3742
        %v4052 = vpop.f32.mrf.mxu0
        %v4053 = vadd.f32 0.0, %v4052
        %4054 = vmatmul.f32.gmra.mxu0 %v3745
        %v4055 = vpop.f32.mrf.mxu0
        %v4056 = vadd.f32 0.0, %v4055
        %4057 = vmatmul.f32.gmra.mxu0 %v3748
        %v4058 = vpop.f32.mrf.mxu0
        %v4059 = vadd.f32 0.0, %v4058
        %4060 = vmatmul.f32.gmra.mxu0 %v3751
        %v4061 = vpop.f32.mrf.mxu0
        %v4062 = vadd.f32 0.0, %v4061
        %4063 = vmatmul.f32.gmra.mxu0 %v3754
        %v4064 = vpop.f32.mrf.mxu0
        %v4065 = vadd.f32 0.0, %v4064
        %4066 = vmatmul.f32.gmra.mxu0 %v3757
        %v4067 = vpop.f32.mrf.mxu0
        %v4068 = vadd.f32 0.0, %v4067
        %4069 = vmatmul.f32.gmra.mxu0 %v3760
        %v4070 = vpop.f32.mrf.mxu0
        %v4071 = vadd.f32 0.0, %v4070
        %4072 = vmatmul.f32.gmra.mxu0 %v3763
        %v4073 = vpop.f32.mrf.mxu0
        %v4074 = vadd.f32 0.0, %v4073
        %4075 = vmatmul.f32.gmra.mxu0 %v3766
        %v4076 = vpop.f32.mrf.mxu0
        %v4077 = vadd.f32 0.0, %v4076
        %4078 = vmatmul.f32.gmra.mxu0 %v3769
        %v4079 = vpop.f32.mrf.mxu0
        %v4080 = vadd.f32 0.0, %v4079
        %4081 = vmatmul.f32.gmra.mxu0 %v3772
        %v4082 = vpop.f32.mrf.mxu0
        %v4083 = vadd.f32 0.0, %v4082
        %4084 = vmatmul.f32.gmra.mxu0 %v3775
        %v4085 = vpop.f32.mrf.mxu0
        %v4086 = vadd.f32 0.0, %v4085
        %4087 = vmatmul.f32.gmra.mxu0 %v3778
        %v4088 = vpop.f32.mrf.mxu0
        %v4089 = vadd.f32 0.0, %v4088
        %4090 = vmatmul.f32.gmra.mxu0 %v3781
        %v4091 = vpop.f32.mrf.mxu0
        %v4092 = vadd.f32 0.0, %v4091
        %4093 = vmatmul.f32.gmra.mxu0 %v3784
        %v4094 = vpop.f32.mrf.mxu0
        %v4095 = vadd.f32 0.0, %v4094
        %4096 = vmatmul.f32.gmra.mxu0 %v3787
        %v4097 = vpop.f32.mrf.mxu0
        %v4098 = vadd.f32 0.0, %v4097
        %4099 = vmatmul.f32.gmra.mxu0 %v3790
        %v4100 = vpop.f32.mrf.mxu0
        %v4101 = vadd.f32 0.0, %v4100
        %4102 = vmatmul.f32.gmra.mxu0 %v3793
        %v4103 = vpop.f32.mrf.mxu0
        %v4104 = vadd.f32 0.0, %v4103
        %4105 = vmatmul.f32.gmra.mxu0 %v3796
        %v4106 = vpop.f32.mrf.mxu0
        %v4107 = vadd.f32 0.0, %v4106
        %4108 = vmatmul.f32.gmra.mxu0 %v3799
        %v4109 = vpop.f32.mrf.mxu0
        %v4110 = vadd.f32 0.0, %v4109
        %4111 = vmatmul.f32.gmra.mxu0 %v3802
        %v4112 = vpop.f32.mrf.mxu0
        %v4113 = vadd.f32 0.0, %v4112
        %4114 = vmatmul.f32.gmra.mxu0 %v3805
        %v4115 = vpop.f32.mrf.mxu0
        %v4116 = vadd.f32 0.0, %v4115
        %4117 = vmatmul.f32.gmra.mxu0 %v3808
        %v4118 = vpop.f32.mrf.mxu0
        %v4119 = vadd.f32 0.0, %v4118
        %4120 = vmatmul.f32.gmra.mxu0 %v3811
        %v4121 = vpop.f32.mrf.mxu0
        %v4122 = vadd.f32 0.0, %v4121
        %4123 = vmatmul.f32.gmra.mxu0 %v3814
        %v4124 = vpop.f32.mrf.mxu0
        %v4125 = vadd.f32 0.0, %v4124
        %4126 = vmatmul.f32.gmra.mxu0 %v3817
        %v4127 = vpop.f32.mrf.mxu0
        %v4128 = vadd.f32 0.0, %v4127
        %4129 = vmatmul.f32.gmra.mxu0 %v3820
        %v4130 = vpop.f32.mrf.mxu0
        %v4131 = vadd.f32 0.0, %v4130
        %4132 = vmatmul.f32.gmra.mxu0 %v3823
        %v4133 = vpop.f32.mrf.mxu0
        %v4134 = vadd.f32 0.0, %v4133
        %4135 = vmatmul.f32.gmra.mxu0 %v3826
        %v4136 = vpop.f32.mrf.mxu0
        %v4137 = vadd.f32 0.0, %v4136
        %4138 = vmatmul.f32.gmra.mxu0 %v3829
        %v4139 = vpop.f32.mrf.mxu0
        %v4140 = vadd.f32 0.0, %v4139
        %4141 = vmatmul.f32.gmra.mxu0 %v3832
        %v4142 = vpop.f32.mrf.mxu0
        %v4143 = vadd.f32 0.0, %v4142
        %4144 = vmatmul.f32.gmra.mxu0 %v3835
        %v4145 = vpop.f32.mrf.mxu0
        %v4146 = vadd.f32 0.0, %v4145
        %4147 = vmatmul.f32.gmra.mxu0 %v3838
        %v4148 = vpop.f32.mrf.mxu0
        %v4149 = vadd.f32 0.0, %v4148
        %4150 = vmatmul.f32.gmra.mxu0 %v3841
        %v4151 = vpop.f32.mrf.mxu0
        %v4152 = vadd.f32 0.0, %v4151
        %4153 = vmatmul.f32.gmra.mxu0 %v3844
        %v4154 = vpop.f32.mrf.mxu0
        %v4155 = vadd.f32 0.0, %v4154
        %4156 = vmatmul.f32.gmra.mxu0 %v3847
        %v4157 = vpop.f32.mrf.mxu0
        %v4158 = vadd.f32 0.0, %v4157
        %4159 = vmatmul.f32.gmra.mxu0 %v3850
        %v4160 = vpop.f32.mrf.mxu0
        %v4161 = vadd.f32 0.0, %v4160
        %4162 = vmatmul.f32.gmra.mxu0 %v3853
        %v4163 = vpop.f32.mrf.mxu0
        %v4164 = vadd.f32 0.0, %v4163
        %4165 = vmatmul.f32.gmra.mxu0 %v3856
        %v4166 = vpop.f32.mrf.mxu0
        %v4167 = vadd.f32 0.0, %v4166
        %4168 = vmatmul.f32.gmra.mxu0 %v3859
        %v4169 = vpop.f32.mrf.mxu0
        %v4170 = vadd.f32 0.0, %v4169
        %4171 = vmatmul.f32.gmra.mxu0 %v3862
        %v4172 = vpop.f32.mrf.mxu0
        %v4173 = vadd.f32 0.0, %v4172
        %4174 = vmatmul.f32.gmra.mxu0 %v3865
        %v4175 = vpop.f32.mrf.mxu0
        %v4176 = vadd.f32 0.0, %v4175
        %4177 = vmatmul.f32.gmra.mxu0 %v3868
        %v4178 = vpop.f32.mrf.mxu0
        %v4179 = vadd.f32 0.0, %v4178
        %4180 = vmatmul.f32.gmra.mxu0 %v3871
        %v4181 = vpop.f32.mrf.mxu0
        %v4182 = vadd.f32 0.0, %v4181
        %4183 = vmatmul.f32.gmra.mxu0 %v3874
        %v4184 = vpop.f32.mrf.mxu0
        %v4185 = vadd.f32 0.0, %v4184
        %4186 = vmatmul.f32.gmra.mxu0 %v3877
        %v4187 = vpop.f32.mrf.mxu0
        %v4188 = vadd.f32 0.0, %v4187
        %4189 = vmatmul.f32.gmra.mxu0 %v3880
        %v4190 = vpop.f32.mrf.mxu0
        %v4191 = vadd.f32 0.0, %v4190
        %4192 = vdwg.mxu0
        %4193 = vst [vmem:[%s812] sm:$0xff] %v3900
        %4194 = vst [vmem:[%s812 + $0x8] sm:$0xff] %v3903
        %4195 = vst [vmem:[%s812 + $0x10] sm:$0xff] %v3906
        %4196 = vst [vmem:[%s812 + $0x18] sm:$0xff] %v3909
        %4197 = vst [vmem:[%s812 + $0x20] sm:$0xff] %v3912
        %4198 = vst [vmem:[%s812 + $0x28] sm:$0xff] %v3915
        %4199 = vst [vmem:[%s812 + $0x30] sm:$0xff] %v3918
        %4200 = vst [vmem:[%s812 + $0x38] sm:$0xff] %v3921
        %4201 = vst [vmem:[%s812 + $0x40] sm:$0xff] %v3924
        %4202 = vst [vmem:[%s812 + $0x48] sm:$0xff] %v3927
        %4203 = vst [vmem:[%s812 + $0x50] sm:$0xff] %v3930
        %4204 = vst [vmem:[%s812 + $0x58] sm:$0xff] %v3933
        %4205 = vst [vmem:[%s812 + $0x60] sm:$0xff] %v3936
        %4206 = vst [vmem:[%s812 + $0x68] sm:$0xff] %v3939
        %4207 = vst [vmem:[%s812 + $0x70] sm:$0xff] %v3942
        %4208 = vst [vmem:[%s812 + $0x78] sm:$0xff] %v3945
        %4209 = vst [vmem:[%s812 + $0x80] sm:$0xff] %v3948
        %4210 = vst [vmem:[%s812 + $0x88] sm:$0xff] %v3951
        %4211 = vst [vmem:[%s812 + $0x90] sm:$0xff] %v3954
        %4212 = vst [vmem:[%s812 + $0x98] sm:$0xff] %v3957
        %4213 = vst [vmem:[%s812 + $0xa0] sm:$0xff] %v3960
        %4214 = vst [vmem:[%s812 + $0xa8] sm:$0xff] %v3963
        %4215 = vst [vmem:[%s812 + $0xb0] sm:$0xff] %v3966
        %4216 = vst [vmem:[%s812 + $0xb8] sm:$0xff] %v3969
        %4217 = vst [vmem:[%s812 + $0xc0] sm:$0xff] %v3972
        %4218 = vst [vmem:[%s812 + $0xc8] sm:$0xff] %v3975
        %4219 = vst [vmem:[%s812 + $0xd0] sm:$0xff] %v3978
        %4220 = vst [vmem:[%s812 + $0xd8] sm:$0xff] %v3981
        %4221 = vst [vmem:[%s812 + $0xe0] sm:$0xff] %v3984
        %4222 = vst [vmem:[%s812 + $0xe8] sm:$0xff] %v3987
        %4223 = vst [vmem:[%s812 + $0xf0] sm:$0xff] %v3990
        %4224 = vst [vmem:[%s812 + $0xf8] sm:$0xff] %v3993
        %4225 = vst [vmem:[%s812 + $0x100] sm:$0xff] %v3996
        %4226 = vst [vmem:[%s812 + $0x108] sm:$0xff] %v3999
        %4227 = vst [vmem:[%s812 + $0x110] sm:$0xff] %v4002
        %4228 = vst [vmem:[%s812 + $0x118] sm:$0xff] %v4005
        %4229 = vst [vmem:[%s812 + $0x120] sm:$0xff] %v4008
        %4230 = vst [vmem:[%s812 + $0x128] sm:$0xff] %v4011
        %4231 = vst [vmem:[%s812 + $0x130] sm:$0xff] %v4014
        %4232 = vst [vmem:[%s812 + $0x138] sm:$0xff] %v4017
        %4233 = vst [vmem:[%s812 + $0x140] sm:$0xff] %v4020
        %4234 = vst [vmem:[%s812 + $0x148] sm:$0xff] %v4023
        %4235 = vst [vmem:[%s812 + $0x150] sm:$0xff] %v4026
        %4236 = vst [vmem:[%s812 + $0x158] sm:$0xff] %v4029
        %4237 = vst [vmem:[%s812 + $0x160] sm:$0xff] %v4032
        %4238 = vst [vmem:[%s812 + $0x168] sm:$0xff] %v4035
        %4239 = vst [vmem:[%s812 + $0x170] sm:$0xff] %v4038
        %4240 = vst [vmem:[%s812 + $0x178] sm:$0xff] %v4041
        %4241 = vst [vmem:[%s812 + $0x180] sm:$0xff] %v4044
        %4242 = vst [vmem:[%s812 + $0x188] sm:$0xff] %v4047
        %4243 = vst [vmem:[%s812 + $0x190] sm:$0xff] %v4050
        %4244 = vst [vmem:[%s812 + $0x198] sm:$0xff] %v4053
        %4245 = vst [vmem:[%s812 + $0x1a0] sm:$0xff] %v4056
        %4246 = vst [vmem:[%s812 + $0x1a8] sm:$0xff] %v4059
        %4247 = vst [vmem:[%s812 + $0x1b0] sm:$0xff] %v4062
        %4248 = vst [vmem:[%s812 + $0x1b8] sm:$0xff] %v4065
        %4249 = vst [vmem:[%s812 + $0x1c0] sm:$0xff] %v4068
        %4250 = vst [vmem:[%s812 + $0x1c8] sm:$0xff] %v4071
        %4251 = vst [vmem:[%s812 + $0x1d0] sm:$0xff] %v4074
        %4252 = vst [vmem:[%s812 + $0x1d8] sm:$0xff] %v4077
        %4253 = vst [vmem:[%s812 + $0x1e0] sm:$0xff] %v4080
        %4254 = vst [vmem:[%s812 + $0x1e8] sm:$0xff] %v4083
        %4255 = vst [vmem:[%s812 + $0x1f0] sm:$0xff] %v4086
        %4256 = vst [vmem:[%s812 + $0x1f8] sm:$0xff] %v4089
        %4257 = vst [vmem:[%s812 + $0x200] sm:$0xff] %v4092
        %4258 = vst [vmem:[%s812 + $0x208] sm:$0xff] %v4095
        %4259 = vst [vmem:[%s812 + $0x210] sm:$0xff] %v4098
        %4260 = vst [vmem:[%s812 + $0x218] sm:$0xff] %v4101
        %4261 = vst [vmem:[%s812 + $0x220] sm:$0xff] %v4104
        %4262 = vst [vmem:[%s812 + $0x228] sm:$0xff] %v4107
        %4263 = vst [vmem:[%s812 + $0x230] sm:$0xff] %v4110
        %4264 = vst [vmem:[%s812 + $0x238] sm:$0xff] %v4113
        %4265 = vst [vmem:[%s812 + $0x240] sm:$0xff] %v4116
        %4266 = vst [vmem:[%s812 + $0x248] sm:$0xff] %v4119
        %4267 = vst [vmem:[%s812 + $0x250] sm:$0xff] %v4122
        %4268 = vst [vmem:[%s812 + $0x258] sm:$0xff] %v4125
        %4269 = vst [vmem:[%s812 + $0x260] sm:$0xff] %v4128
        %4270 = vst [vmem:[%s812 + $0x268] sm:$0xff] %v4131
        %4271 = vst [vmem:[%s812 + $0x270] sm:$0xff] %v4134
        %4272 = vst [vmem:[%s812 + $0x278] sm:$0xff] %v4137
        %4273 = vst [vmem:[%s812 + $0x280] sm:$0xff] %v4140
        %4274 = vst [vmem:[%s812 + $0x288] sm:$0xff] %v4143
        %4275 = vst [vmem:[%s812 + $0x290] sm:$0xff] %v4146
        %4276 = vst [vmem:[%s812 + $0x298] sm:$0xff] %v4149
        %4277 = vst [vmem:[%s812 + $0x2a0] sm:$0xff] %v4152
        %4278 = vst [vmem:[%s812 + $0x2a8] sm:$0xff] %v4155
        %4279 = vst [vmem:[%s812 + $0x2b0] sm:$0xff] %v4158
        %4280 = vst [vmem:[%s812 + $0x2b8] sm:$0xff] %v4161
        %4281 = vst [vmem:[%s812 + $0x2c0] sm:$0xff] %v4164
        %4282 = vst [vmem:[%s812 + $0x2c8] sm:$0xff] %v4167
        %4283 = vst [vmem:[%s812 + $0x2d0] sm:$0xff] %v4170
        %4284 = vst [vmem:[%s812 + $0x2d8] sm:$0xff] %v4173
        %4285 = vst [vmem:[%s812 + $0x2e0] sm:$0xff] %v4176
        %4286 = vst [vmem:[%s812 + $0x2e8] sm:$0xff] %v4179
        %4287 = vst [vmem:[%s812 + $0x2f0] sm:$0xff] %v4182
        %4288 = vst [vmem:[%s812 + $0x2f8] sm:$0xff] %v4185
        %4289 = vst [vmem:[%s812 + $0x300] sm:$0xff] %v4188
        %4290 = vst [vmem:[%s812 + $0x308] sm:$0xff] %v4191
        %s4291 = sand.u32 %s561, 1
        %s4292 = scalar_lea.sflag [#allocation3], %s4291
        %s4293 = sand.u32 %s561, 1
        %s4294 = smul.addr %s4293, 16
        %s4295 = scalar_lea.vmem [#allocation2], %s4294
        %s4296 = sand.u32 %s587, 1
        %s4297 = scalar_lea.sflag [#allocation5], %s4296
        %s4298 = sand.u32 %s587, 1
        %s4299 = smul.addr %s4298, 16
        %s4300 = scalar_lea.vmem [#allocation4], %s4299
        %p4301 = scmp.lt.s32.totalorder %s44, 1
        %s4302 = scalar_select %p4301, %s44, 1
        %s4303 = smul.addr %s4302, 98
        %s4304 = smul.addr %s4303, 8
        %s4305 = scalar_lea.vmem %s26, %s4304
        // Predicated region
        $region117: #{forward.1} parent=115 // pred_check
          %p4306 = pneg %p571
        $region118: #{forward.1} parent=115 // pred_check_branch
          %4308 = sbr.rel (%p4306) target = $region120
        $region119: #{forward.1} parent=115 // pred_region
          %4310 = vsyncadd %s4292, 0
          %s4311 = smul.addr %s44, 2
          %s4312 = smul.addr %s4311, 8
          %s4313 = scalar_lea.hbm %s24, %s4312
          %s4314 = sshll.u32 %s4295, 4
          %s4315 = int_to_ptr.vmem [resolvable:$true] %s4314
          %s4316 = sshll.u32 %s4313, 4
          %s4317 = int_to_ptr.hbm [resolvable:$true] %s4316
          %4322 = dma.vmem_to_hbm [thread:$0]  %s4315, 256, %s4317, %s4292, 128, 128, 8
        $region120: #{forward.1} parent=115 // pred_fallthru
          _
        // Predicated region
        $region121: #{forward.1} parent=115 // pred_check
          %p4323 = pneg %p597
        $region122: #{forward.1} parent=115 // pred_check_branch
          %4325 = sbr.rel (%p4323) target = $region124
        $region123: #{forward.1} parent=115 // pred_region
          %4327 = vsyncadd %s4297, 0
          %s4328 = smul.addr %s44, 2
          %s4329 = smul.addr %s4328, 8
          %s4330 = scalar_lea.hbm %s25, %s4329
          %s4331 = sshll.u32 %s4300, 4
          %s4332 = int_to_ptr.vmem [resolvable:$true] %s4331
          %s4333 = sshll.u32 %s4330, 4
          %s4334 = int_to_ptr.hbm [resolvable:$true] %s4333
          %4339 = dma.vmem_to_hbm [thread:$0]  %s4332, 256, %s4334, %s4297, 128, 128, 8
        $region124: #{forward.1} parent=115 // pred_fallthru
          _
        // Predicated region
        $region125: #{forward.1} parent=115 // pred_check
          %p4340 = pneg %p623
        $region126: #{forward.1} parent=115 // pred_check_branch
          %4342 = sbr.rel (%p4340) target = $region128
        $region127: #{forward.1} parent=115 // pred_region
          _
        $region128: #{forward.1} parent=115 // pred_fallthru
          _
      $region116: #{forward.1} parent=5 // pred_fallthru
        _
      %p4343 = scmp.le.s32.totalorder 2, %s39
      // Predicated region
      $region129: #{forward.1} parent=5 // pred_check
        %p4344 = pneg %p4343
      $region130: #{forward.1} parent=5 // pred_check_branch
        %4346 = sbr.rel (%p4344) target = $region132
      $region131: #{forward.1} parent=5 // pred_region
        %s4347 = ssub.s32 %s39, 2
        // Predicated region
        $region133: #{forward.1} parent=131 // pred_check
          %p4348 = pneg %p577
        $region134: #{forward.1} parent=131 // pred_check_branch
          %4350 = sbr.rel (%p4348) target = $region136
        $region135: #{forward.1} parent=131 // pred_region
          %s4351 = sand.u32 %s562, 1
          %s4352 = scalar_lea.sflag [#allocation3], %s4351
          %s4353 = sand.u32 %s562, 1
          %s4354 = smul.addr %s4353, 16
          %s4355 = scalar_lea.vmem [#allocation2], %s4354
          %4357 = dma.done %s4352, 256
        $region136: #{forward.1} parent=131 // pred_fallthru
          _
        // Predicated region
        $region137: #{forward.1} parent=131 // pred_check
          %p4358 = pneg %p603
        $region138: #{forward.1} parent=131 // pred_check_branch
          %4360 = sbr.rel (%p4358) target = $region140
        $region139: #{forward.1} parent=131 // pred_region
          %s4361 = sand.u32 %s588, 1
          %s4362 = scalar_lea.sflag [#allocation5], %s4361
          %s4363 = sand.u32 %s588, 1
          %s4364 = smul.addr %s4363, 16
          %s4365 = scalar_lea.vmem [#allocation4], %s4364
          %4367 = dma.done %s4362, 256
        $region140: #{forward.1} parent=131 // pred_fallthru
          _
        // Predicated region
        $region141: #{forward.1} parent=131 // pred_check
          %p4368 = pneg %p629
        $region142: #{forward.1} parent=131 // pred_check_branch
          %4370 = sbr.rel (%p4368) target = $region144
        $region143: #{forward.1} parent=131 // pred_region
          %p4371 = scmp.lt.s32.totalorder %s45, 1
          %s4372 = scalar_select %p4371, %s45, 1
          %s4373 = smul.addr %s4372, 98
          %s4374 = smul.addr %s4373, 8
          %s4375 = scalar_lea.vmem %s26, %s4374
        $region144: #{forward.1} parent=131 // pred_fallthru
          _
      $region132: #{forward.1} parent=5 // pred_fallthru
        _
    $region6: #{forward.1} parent=1 // loop_footer
      %s43 = sadd.s32 1, %s39
    $region7: #{forward.1} parent=1 // loop_footer_branch
      %38 = sbr.rel target = $region3
    $region8: #{forward.1} parent=1 // loop_exit
      _
    %4376 = vsyncpa [#allocation3], 1
    %s4377 = scalar_lea.sflag [#allocation3], 1
    %4378 = vsyncpa %s4377, 1
    %4379 = vsyncpa [#allocation5], 1
    %s4380 = scalar_lea.sflag [#allocation5], 1
    %4381 = vsyncpa %s4380, 1

</llo_original>
